<compile_context>
chip_gen: v7x
topology: tpu7x:2x2x1
jax: 0.10.0
libtpu: 0.0.40
codegen_flags: <defaults>
</compile_context>

<pallas_src>
import functools

import jax
import jax.numpy as jnp
from jax import lax
from jax.experimental import pallas as pl
from jax.experimental.pallas import tpu as pltpu


def lstm_mil_kernel(bags_ref,      # [N*Bp, D]  f32, time-major, batch padded to 8
                    w_ih_ref,      # [2, D, 8H]   fused (both-direction) input weights
                    w_hh_ref,      # [2, 2H, 8H]  block-diagonal fused recurrent weights
                    b_ref,         # [2, 1, 8H]   fused biases (b_ih + b_hh, both dirs)
                    bwd_col_ref,   # [1, 8H] f32  1.0 on backward-direction gate columns
                    tanh_col_ref,  # [1, 8H] f32  1.0 on the cell ("g") gate columns
                    bwd_half_ref,  # [1, D]  f32  1.0 on backward half of hidden state
                    w_att_ref,     # [1, D]
                    b_att_ref,     # [1, 1]
                    out_ref,       # [Bp, D]
                    gates_scr,     # [N*Bp, 8H] f32 scratch (lane-dense, 128 wide)
                    seq_scr,       # [N*Bp, D]  f32 scratch (layer i/o, reused for l1)
                    *, n_inst, batch):
    N, B = n_inst, batch
    _, D = bags_ref.shape
    H = D // 2          # per-direction hidden size
    H2 = 2 * H          # bidirectional hidden size (== D)

    # Masks broadcast to full size ONCE (hoisted out of all unrolled loops;
    # JAX does not CSE broadcast_in_dim).
    bwd_col = jnp.broadcast_to(bwd_col_ref[...] != 0.0, (B, 8 * H))    # [Bp, 8H]
    tanh_col = jnp.broadcast_to(tanh_col_ref[...] != 0.0, (B, 8 * H))  # [Bp, 8H]
    bwd_half = jnp.broadcast_to(bwd_half_ref[...] != 0.0, (B, D))      # [Bp, D]

    def run_layer(x2d, layer):
        # Hoisted, direction-fused input projection (off the serial chain):
        # one lane-dense [N*Bp, D] @ [D, 8H] matmul, bias folded, unmasked store.
        gates_scr[...] = (jnp.dot(x2d, w_ih_ref[layer],
                                  preferred_element_type=jnp.float32)
                          + b_ref[layer])
        w_hh = w_hh_ref[layer]               # [2H, 8H] block-diag (fwd rows | bwd rows)

        h = jnp.zeros((B, H2), jnp.float32)  # [h_fwd | h_bwd]
        c = jnp.zeros((B, H2), jnp.float32)
        hs = []
        # Fully-unrolled recurrence (N static & small): only h @ W_hh stays on the
        # serial critical path; every per-step slab is 8-sublane aligned & full.
        for i in range(N):
            g_fwd = gates_scr[pl.ds(i * B, B), :]            # gates @ t = i
            g_bwd = gates_scr[pl.ds((N - 1 - i) * B, B), :]  # gates @ t = N-1-i
            g = (jnp.dot(h, w_hh, preferred_element_type=jnp.float32)
                 + jnp.where(bwd_col, g_bwd, g_fwd))         # [Bp, 8H]
            # One masked activation over the full 128-lane gate vreg:
            # 2 full-vreg transcendentals per step instead of 4.
            act = jnp.where(tanh_col, jnp.tanh(g), jax.nn.sigmoid(g))
            ig = act[:, 0:H2]
            fg = act[:, H2:2 * H2]
            gg = act[:, 2 * H2:3 * H2]
            og = act[:, 3 * H2:4 * H2]
            c = fg * c + ig * gg
            h = og * jnp.tanh(c)
            hs.append(h)                     # h = [h_fwd(t=i) | h_bwd(t=N-1-i)]
        # Time-align the backward half: out[t] = [h_fwd(t) | h_bwd(t)].
        return [jnp.where(bwd_half, hs[N - 1 - t], hs[t]) for t in range(N)]

    # ---- layer 0 (input = raw bag features) ----
    l0 = run_layer(bags_ref[...], 0)
    for t in range(N):
        seq_scr[pl.ds(t * B, B), :] = l0[t]

    # dropout(p=0.1) between LSTM layers is identity in eval mode.
    # TODO(synk): training-mode inter-layer dropout is not implemented.

    # ---- layer 1 (input = layer-0 bidirectional output; 2H == D) ----
    l1 = run_layer(seq_scr[...], 1)
    # Reuse seq_scr (dead after the layer-1 input projection) to hold l1, so the
    # N step outputs do not all stay live through softmax / pooling.
    for t in range(N):
        seq_scr[pl.ds(t * B, B), :] = l1[t]

    # ---- attention scores (one fused op over the whole [N*Bp, D] slab),
    #      softmax over instances, weighted bag pooling ----
    # TODO(synk): at large D compute the scores as one [N*Bp, D] @ [D, 1] MXU matmul.
    scores = (jnp.sum(jnp.tanh(seq_scr[...]) * w_att_ref[...],
                      axis=-1, keepdims=True)
              + b_att_ref[...])                              # [N*Bp, 1]
    s = [scores[t * B:(t + 1) * B, :] for t in range(N)]     # N x [Bp, 1]
    m = s[0]
    for t in range(1, N):
        m = jnp.maximum(m, s[t])
    es = [jnp.exp(s[t] - m) for t in range(N)]
    denom = es[0]
    for t in range(1, N):
        denom = denom + es[t]
    # EUP reciprocal + one Newton refinement (keeps f32-level accuracy, ~free).
    inv = pl.reciprocal(denom, approx=True)
    inv = inv * (2.0 - denom * inv)
    acc = (es[0] * inv) * seq_scr[pl.ds(0, B), :]
    for t in range(1, N):
        acc = acc + (es[t] * inv) * seq_scr[pl.ds(t * B, B), :]
    out_ref[...] = acc.astype(out_ref.dtype)


def _fuse_lstm_params(params):
    """Interleave fwd/bwd weights per gate so the fused gate vector is
    [i_f,i_b,f_f,f_b,g_f,g_b,o_f,o_b] (8H lanes), and build block-diagonal W_hh."""
    w_ih, w_hh = params["w_ih"], params["w_hh"]      # [2,2,4H,D], [2,2,4H,H]
    b = params["b_ih"] + params["b_hh"]              # [2,2,4H]
    n_layers = w_ih.shape[0]
    H = w_hh.shape[-1]
    D = w_ih.shape[-1]

    wi_l, wh_l, b_l = [], [], []
    for l in range(n_layers):
        wif = jnp.transpose(w_ih[l, 0]).reshape(D, 4, H)
        wib = jnp.transpose(w_ih[l, 1]).reshape(D, 4, H)
        wi_l.append(jnp.stack([wif, wib], axis=2).reshape(D, 8 * H))

        whf = jnp.transpose(w_hh[l, 0]).reshape(H, 4, H)
        whb = jnp.transpose(w_hh[l, 1]).reshape(H, 4, H)
        blk = jnp.zeros((2 * H, 4, 2, H), jnp.float32)
        blk = blk.at[:H, :, 0, :].set(whf).at[H:, :, 1, :].set(whb)
        wh_l.append(blk.reshape(2 * H, 8 * H))

        bl = jnp.stack([b[l, 0].reshape(4, H), b[l, 1].reshape(4, H)], axis=1)
        b_l.append(bl.reshape(8 * H))

    w_ih_fused = jnp.stack(wi_l, axis=0)             # [2, D, 8H]
    w_hh_fused = jnp.stack(wh_l, axis=0)             # [2, 2H, 8H]
    b_fused = jnp.stack(b_l, axis=0)[:, None, :]     # [2, 1, 8H]
    return w_ih_fused, w_hh_fused, b_fused


def lstm_mil_forward(bags, params):
    """bags: [B, N, D] (batch_first, like the PyTorch module). Returns [B, D]."""
    B, N, D = bags.shape
    H = D // 2
    assert D % 2 == 0
    Bp = ((B + 7) // 8) * 8   # pad batch to the f32 sublane count (8)

    w_ih_f, w_hh_f, b_f = _fuse_lstm_params(params)

    # Time-major, batch zero-padded to Bp, flattened to (t, b) rows: row t*Bp + b
    # holds instance t of bag b.  Every per-timestep slab is 8-sublane aligned.
    x = jnp.transpose(bags, (1, 0, 2)).astype(jnp.float32)           # [N, B, D]
    x = jnp.pad(x, ((0, 0), (0, Bp - B), (0, 0)))                    # [N, Bp, D]
    bags2d = x.reshape(N * Bp, D)

    # Column/half masks (generic in H; built host-side so no in-kernel int div).
    col = jnp.arange(8 * H)
    bwd_col = (((col // H) % 2) == 1).astype(jnp.float32)[None, :]   # backward dirs
    tanh_col = ((col // (2 * H)) == 2).astype(jnp.float32)[None, :]  # cell ("g") gate
    bwd_half = (jnp.arange(D) >= H).astype(jnp.float32)[None, :]     # [1, D]

    kernel = functools.partial(lstm_mil_kernel, n_inst=N, batch=Bp)
    out = pl.pallas_call(
        kernel,
        out_shape=jax.ShapeDtypeStruct((Bp, D), jnp.float32),
        in_specs=[pl.BlockSpec(memory_space=pltpu.MemorySpace.VMEM)] * 9,
        out_specs=pl.BlockSpec(memory_space=pltpu.MemorySpace.VMEM),
        scratch_shapes=[
            pltpu.VMEM((N * Bp, 8 * H), jnp.float32),  # fused gates (lane-dense, 128)
            pltpu.VMEM((N * Bp, D), jnp.float32),      # layer i/o (reused for l1)
        ],
        # TODO(synk): at production shapes add a "parallel" batch-tile grid axis
        #             (essential for v7x's 2 TensorCores) and set vmem_limit_bytes.
    )(bags2d, w_ih_f, w_hh_f, b_f, bwd_col, tanh_col, bwd_half,
      params["w_att"].astype(jnp.float32), params["b_att"].astype(jnp.float32))
    return out[:B]


def lstm_mil_reference(bags, params):
    """Pure-JAX reference with identical semantics (eval-mode PyTorch LSTMMIL)."""
    B, N, D = bags.shape
    H = D // 2
    w_ih, w_hh = params["w_ih"], params["w_hh"]
    b = params["b_ih"] + params["b_hh"]

    def run_dir(x_seq, layer, direction):
        wi = w_ih[layer, direction]
        wh = w_hh[layer, direction]
        bb = b[layer, direction]

        def step(carry, x_t):
            h, c = carry
            gates = x_t @ wi.T + h @ wh.T + bb
            ig = jax.nn.sigmoid(gates[:, :H])
            fg = jax.nn.sigmoid(gates[:, H:2 * H])
            gg = jnp.tanh(gates[:, 2 * H:3 * H])
            og = jax.nn.sigmoid(gates[:, 3 * H:])
            c = fg * c + ig * gg
            h = og * jnp.tanh(c)
            return (h, c), h

        xs = x_seq if direction == 0 else x_seq[::-1]
        _, hs = lax.scan(step, (jnp.zeros((B, H)), jnp.zeros((B, H))), xs)
        return hs if direction == 0 else hs[::-1]

    x = jnp.transpose(bags, (1, 0, 2)).astype(jnp.float32)           # [N, B, D]
    for layer in range(2):
        x = jnp.concatenate([run_dir(x, layer, 0), run_dir(x, layer, 1)], axis=-1)
    scores = jnp.sum(jnp.tanh(x) * params["w_att"][0], axis=-1) + params["b_att"][0, 0]
    attn = jax.nn.softmax(scores, axis=0)                            # [N, B]
    return jnp.sum(attn[:, :, None] * x, axis=0)                     # [B, D]


def init_params(key, D):
    H = D // 2
    ks = jax.random.split(key, 6)
    k_lstm = 1.0 / jnp.sqrt(H)
    k_att = 1.0 / jnp.sqrt(D)
    # layer-1 input size is 2H == D, so both layers' W_ih share the [4H, D] shape.
    return {
        "w_ih": jax.random.uniform(ks[0], (2, 2, 4 * H, D), jnp.float32, -k_lstm, k_lstm),
        "w_hh": jax.random.uniform(ks[1], (2, 2, 4 * H, H), jnp.float32, -k_lstm, k_lstm),
        "b_ih": jax.random.uniform(ks[2], (2, 2, 4 * H), jnp.float32, -k_lstm, k_lstm),
        "b_hh": jax.random.uniform(ks[3], (2, 2, 4 * H), jnp.float32, -k_lstm, k_lstm),
        "w_att": jax.random.uniform(ks[4], (1, D), jnp.float32, -k_att, k_att),
        "b_att": jax.random.uniform(ks[5], (1, 1), jnp.float32, -k_att, k_att),
    }


if __name__ == "__main__":
    B, N, D = 2, 8, 32   # batch, num_instances (bag size), input_dim
    key = jax.random.PRNGKey(0)
    k_bags, k_params = jax.random.split(key)
    bags = jax.random.normal(k_bags, (B, N, D), jnp.float32)
    params = init_params(k_params, D)

    out = jax.block_until_ready(lstm_mil_forward(bags, params))
    ref = jax.block_until_ready(lstm_mil_reference(bags, params))

    assert out.shape == (B, D)
    # 1e-4 tolerance: approx EUP reciprocal (+ one Newton step) in the softmax.
    assert jnp.allclose(out, ref, rtol=1e-4, atol=1e-4), (out, ref)
    print("KERNEL_OK")
</pallas_src>

<mosaic_0001>
module attributes {stable_mosaic.version = 11 : i64} {
  func.func @lstm_mil_kernel(%arg0: memref<64x32xf32, #tpu.memory_space<vmem>>, %arg1: memref<2x32x128xf32, #tpu.memory_space<vmem>>, %arg2: memref<2x32x128xf32, #tpu.memory_space<vmem>>, %arg3: memref<2x1x128xf32, #tpu.memory_space<vmem>>, %arg4: memref<1x128xf32, #tpu.memory_space<vmem>>, %arg5: memref<1x128xf32, #tpu.memory_space<vmem>>, %arg6: memref<1x32xf32, #tpu.memory_space<vmem>>, %arg7: memref<1x32xf32, #tpu.memory_space<vmem>>, %arg8: memref<1x1xf32, #tpu.memory_space<vmem>>, %arg9: memref<8x32xf32, #tpu.memory_space<vmem>>, %arg10: memref<64x128xf32, #tpu.memory_space<vmem>>, %arg11: memref<64x32xf32, #tpu.memory_space<vmem>>) attributes {dimension_semantics = [], scalar_prefetch = 0 : i64, scratch_operands = 2 : i64, tpu.core_type = #tpu.core_type<tc>} {
    %c0 = arith.constant 0 : index
    %c0_0 = arith.constant 0 : index
    %0 = vector.load %arg4[%c0, %c0_0] : memref<1x128xf32, #tpu.memory_space<vmem>>, vector<1x128xf32>
    %cst = arith.constant 0.000000e+00 : f32
    %1 = vector.broadcast %cst : f32 to vector<1x128xf32>
    %2 = arith.cmpf one, %0, %1 : vector<1x128xf32>
    %3 = vector.shape_cast %2 : vector<1x128xi1> to vector<1x128xi1>
    %4 = vector.broadcast %3 : vector<1x128xi1> to vector<8x128xi1>
    %c0_1 = arith.constant 0 : index
    %c0_2 = arith.constant 0 : index
    %5 = vector.load %arg5[%c0_1, %c0_2] : memref<1x128xf32, #tpu.memory_space<vmem>>, vector<1x128xf32>
    %cst_3 = arith.constant 0.000000e+00 : f32
    %6 = vector.broadcast %cst_3 : f32 to vector<1x128xf32>
    %7 = arith.cmpf one, %5, %6 : vector<1x128xf32>
    %8 = vector.shape_cast %7 : vector<1x128xi1> to vector<1x128xi1>
    %9 = vector.broadcast %8 : vector<1x128xi1> to vector<8x128xi1>
    %c0_4 = arith.constant 0 : index
    %c0_5 = arith.constant 0 : index
    %10 = vector.load %arg6[%c0_4, %c0_5] : memref<1x32xf32, #tpu.memory_space<vmem>>, vector<1x32xf32>
    %cst_6 = arith.constant 0.000000e+00 : f32
    %11 = vector.broadcast %cst_6 : f32 to vector<1x32xf32>
    %12 = arith.cmpf one, %10, %11 : vector<1x32xf32>
    %13 = vector.shape_cast %12 : vector<1x32xi1> to vector<1x32xi1>
    %14 = vector.broadcast %13 : vector<1x32xi1> to vector<8x32xi1>
    %c0_7 = arith.constant 0 : index
    %c0_8 = arith.constant 0 : index
    %15 = vector.load %arg0[%c0_7, %c0_8] : memref<64x32xf32, #tpu.memory_space<vmem>>, vector<64x32xf32>
    %c0_9 = arith.constant 0 : index
    %c0_10 = arith.constant 0 : index
    %c0_11 = arith.constant 0 : index
    %16 = vector.load %arg1[%c0_9, %c0_10, %c0_11] : memref<2x32x128xf32, #tpu.memory_space<vmem>>, vector<1x32x128xf32>
    %17 = vector.shape_cast %16 : vector<1x32x128xf32> to vector<32x128xf32>
    %cst_12 = arith.constant dense<0.000000e+00> : vector<64x128xf32>
    %18 = tpu.matmul %15, %17, %cst_12 {dimension_numbers = #tpu.dot_dimension_numbers<[1], [0], [0], [1], [0, 0, 1, 1], [], []>} : vector<64x32xf32>, vector<32x128xf32>, vector<64x128xf32> -> vector<64x128xf32>
    %c0_13 = arith.constant 0 : index
    %c0_14 = arith.constant 0 : index
    %c0_15 = arith.constant 0 : index
    %19 = vector.load %arg3[%c0_13, %c0_14, %c0_15] : memref<2x1x128xf32, #tpu.memory_space<vmem>>, vector<1x1x128xf32>
    %20 = vector.shape_cast %19 : vector<1x1x128xf32> to vector<1x128xf32>
    %21 = vector.broadcast %20 : vector<1x128xf32> to vector<64x128xf32>
    %22 = arith.addf %18, %21 : vector<64x128xf32>
    %c0_16 = arith.constant 0 : index
    %c0_17 = arith.constant 0 : index
    %23 = vector.load %arg10[%c0_16, %c0_17] : memref<64x128xf32, #tpu.memory_space<vmem>>, vector<64x128xf32>
    tpu.vector_store %arg10[%c0_16, %c0_17], %22 {strides = array<i32>} : memref<64x128xf32, #tpu.memory_space<vmem>>, vector<64x128xf32>,
    %c0_18 = arith.constant 0 : index
    %c0_19 = arith.constant 0 : index
    %c0_20 = arith.constant 0 : index
    %24 = vector.load %arg2[%c0_18, %c0_19, %c0_20] : memref<2x32x128xf32, #tpu.memory_space<vmem>>, vector<1x32x128xf32>
    %25 = vector.shape_cast %24 : vector<1x32x128xf32> to vector<32x128xf32>
    %cst_21 = arith.constant 0.000000e+00 : f32
    %26 = vector.broadcast %cst_21 : f32 to vector<8x32xf32>
    %cst_22 = arith.constant 0.000000e+00 : f32
    %27 = vector.broadcast %cst_22 : f32 to vector<8x32xf32>
    %c0_23 = arith.constant 0 : index
    %c0_24 = arith.constant 0 : index
    %28 = vector.load %arg10[%c0_23, %c0_24] : memref<64x128xf32, #tpu.memory_space<vmem>>, vector<8x128xf32>
    %c56 = arith.constant 56 : index
    %c0_25 = arith.constant 0 : index
    %29 = vector.load %arg10[%c56, %c0_25] : memref<64x128xf32, #tpu.memory_space<vmem>>, vector<8x128xf32>
    %cst_26 = arith.constant dense<0.000000e+00> : vector<8x128xf32>
    %30 = tpu.matmul %26, %25, %cst_26 {dimension_numbers = #tpu.dot_dimension_numbers<[1], [0], [0], [1], [0, 0, 1, 1], [], []>} : vector<8x32xf32>, vector<32x128xf32>, vector<8x128xf32> -> vector<8x128xf32>
    %31 = arith.select %4, %29, %28 : vector<8x128xi1>, vector<8x128xf32>
    %32 = arith.addf %30, %31 : vector<8x128xf32>
    %33 = math.tanh %32 : vector<8x128xf32>
    %34 = arith.negf %32 : vector<8x128xf32>
    %35 = math.exp %34 : vector<8x128xf32>
    %cst_27 = arith.constant 1.000000e+00 : f32
    %36 = vector.broadcast %cst_27 : f32 to vector<8x128xf32>
    %37 = arith.addf %36, %35 : vector<8x128xf32>
    %38 = arith.divf %36, %37 : vector<8x128xf32>
    %39 = arith.select %9, %33, %38 : vector<8x128xi1>, vector<8x128xf32>
    %40 = vector.extract_strided_slice %39 {offsets = [0, 0], sizes = [8, 32], strides = [1, 1]} : vector<8x128xf32> to vector<8x32xf32>
    %41 = vector.extract_strided_slice %39 {offsets = [0, 32], sizes = [8, 32], strides = [1, 1]} : vector<8x128xf32> to vector<8x32xf32>
    %42 = vector.extract_strided_slice %39 {offsets = [0, 64], sizes = [8, 32], strides = [1, 1]} : vector<8x128xf32> to vector<8x32xf32>
    %43 = vector.extract_strided_slice %39 {offsets = [0, 96], sizes = [8, 32], strides = [1, 1]} : vector<8x128xf32> to vector<8x32xf32>
    %44 = arith.mulf %41, %27 : vector<8x32xf32>
    %45 = arith.mulf %40, %42 : vector<8x32xf32>
    %46 = arith.addf %44, %45 : vector<8x32xf32>
    %47 = math.tanh %46 : vector<8x32xf32>
    %48 = arith.mulf %43, %47 : vector<8x32xf32>
    %c8 = arith.constant 8 : index
    %c0_28 = arith.constant 0 : index
    %49 = vector.load %arg10[%c8, %c0_28] : memref<64x128xf32, #tpu.memory_space<vmem>>, vector<8x128xf32>
    %c48 = arith.constant 48 : index
    %c0_29 = arith.constant 0 : index
    %50 = vector.load %arg10[%c48, %c0_29] : memref<64x128xf32, #tpu.memory_space<vmem>>, vector<8x128xf32>
    %cst_30 = arith.constant dense<0.000000e+00> : vector<8x128xf32>
    %51 = tpu.matmul %48, %25, %cst_30 {dimension_numbers = #tpu.dot_dimension_numbers<[1], [0], [0], [1], [0, 0, 1, 1], [], []>} : vector<8x32xf32>, vector<32x128xf32>, vector<8x128xf32> -> vector<8x128xf32>
    %52 = arith.select %4, %50, %49 : vector<8x128xi1>, vector<8x128xf32>
    %53 = arith.addf %51, %52 : vector<8x128xf32>
    %54 = math.tanh %53 : vector<8x128xf32>
    %55 = arith.negf %53 : vector<8x128xf32>
    %56 = math.exp %55 : vector<8x128xf32>
    %cst_31 = arith.constant 1.000000e+00 : f32
    %57 = vector.broadcast %cst_31 : f32 to vector<8x128xf32>
    %58 = arith.addf %57, %56 : vector<8x128xf32>
    %59 = arith.divf %57, %58 : vector<8x128xf32>
    %60 = arith.select %9, %54, %59 : vector<8x128xi1>, vector<8x128xf32>
    %61 = vector.extract_strided_slice %60 {offsets = [0, 0], sizes = [8, 32], strides = [1, 1]} : vector<8x128xf32> to vector<8x32xf32>
    %62 = vector.extract_strided_slice %60 {offsets = [0, 32], sizes = [8, 32], strides = [1, 1]} : vector<8x128xf32> to vector<8x32xf32>
    %63 = vector.extract_strided_slice %60 {offsets = [0, 64], sizes = [8, 32], strides = [1, 1]} : vector<8x128xf32> to vector<8x32xf32>
    %64 = vector.extract_strided_slice %60 {offsets = [0, 96], sizes = [8, 32], strides = [1, 1]} : vector<8x128xf32> to vector<8x32xf32>
    %65 = arith.mulf %62, %46 : vector<8x32xf32>
    %66 = arith.mulf %61, %63 : vector<8x32xf32>
    %67 = arith.addf %65, %66 : vector<8x32xf32>
    %68 = math.tanh %67 : vector<8x32xf32>
    %69 = arith.mulf %64, %68 : vector<8x32xf32>
    %c16 = arith.constant 16 : index
    %c0_32 = arith.constant 0 : index
    %70 = vector.load %arg10[%c16, %c0_32] : memref<64x128xf32, #tpu.memory_space<vmem>>, vector<8x128xf32>
    %c40 = arith.constant 40 : index
    %c0_33 = arith.constant 0 : index
    %71 = vector.load %arg10[%c40, %c0_33] : memref<64x128xf32, #tpu.memory_space<vmem>>, vector<8x128xf32>
    %cst_34 = arith.constant dense<0.000000e+00> : vector<8x128xf32>
    %72 = tpu.matmul %69, %25, %cst_34 {dimension_numbers = #tpu.dot_dimension_numbers<[1], [0], [0], [1], [0, 0, 1, 1], [], []>} : vector<8x32xf32>, vector<32x128xf32>, vector<8x128xf32> -> vector<8x128xf32>
    %73 = arith.select %4, %71, %70 : vector<8x128xi1>, vector<8x128xf32>
    %74 = arith.addf %72, %73 : vector<8x128xf32>
    %75 = math.tanh %74 : vector<8x128xf32>
    %76 = arith.negf %74 : vector<8x128xf32>
    %77 = math.exp %76 : vector<8x128xf32>
    %cst_35 = arith.constant 1.000000e+00 : f32
    %78 = vector.broadcast %cst_35 : f32 to vector<8x128xf32>
    %79 = arith.addf %78, %77 : vector<8x128xf32>
    %80 = arith.divf %78, %79 : vector<8x128xf32>
    %81 = arith.select %9, %75, %80 : vector<8x128xi1>, vector<8x128xf32>
    %82 = vector.extract_strided_slice %81 {offsets = [0, 0], sizes = [8, 32], strides = [1, 1]} : vector<8x128xf32> to vector<8x32xf32>
    %83 = vector.extract_strided_slice %81 {offsets = [0, 32], sizes = [8, 32], strides = [1, 1]} : vector<8x128xf32> to vector<8x32xf32>
    %84 = vector.extract_strided_slice %81 {offsets = [0, 64], sizes = [8, 32], strides = [1, 1]} : vector<8x128xf32> to vector<8x32xf32>
    %85 = vector.extract_strided_slice %81 {offsets = [0, 96], sizes = [8, 32], strides = [1, 1]} : vector<8x128xf32> to vector<8x32xf32>
    %86 = arith.mulf %83, %67 : vector<8x32xf32>
    %87 = arith.mulf %82, %84 : vector<8x32xf32>
    %88 = arith.addf %86, %87 : vector<8x32xf32>
    %89 = math.tanh %88 : vector<8x32xf32>
    %90 = arith.mulf %85, %89 : vector<8x32xf32>
    %c24 = arith.constant 24 : index
    %c0_36 = arith.constant 0 : index
    %91 = vector.load %arg10[%c24, %c0_36] : memref<64x128xf32, #tpu.memory_space<vmem>>, vector<8x128xf32>
    %c32 = arith.constant 32 : index
    %c0_37 = arith.constant 0 : index
    %92 = vector.load %arg10[%c32, %c0_37] : memref<64x128xf32, #tpu.memory_space<vmem>>, vector<8x128xf32>
    %cst_38 = arith.constant dense<0.000000e+00> : vector<8x128xf32>
    %93 = tpu.matmul %90, %25, %cst_38 {dimension_numbers = #tpu.dot_dimension_numbers<[1], [0], [0], [1], [0, 0, 1, 1], [], []>} : vector<8x32xf32>, vector<32x128xf32>, vector<8x128xf32> -> vector<8x128xf32>
    %94 = arith.select %4, %92, %91 : vector<8x128xi1>, vector<8x128xf32>
    %95 = arith.addf %93, %94 : vector<8x128xf32>
    %96 = math.tanh %95 : vector<8x128xf32>
    %97 = arith.negf %95 : vector<8x128xf32>
    %98 = math.exp %97 : vector<8x128xf32>
    %cst_39 = arith.constant 1.000000e+00 : f32
    %99 = vector.broadcast %cst_39 : f32 to vector<8x128xf32>
    %100 = arith.addf %99, %98 : vector<8x128xf32>
    %101 = arith.divf %99, %100 : vector<8x128xf32>
    %102 = arith.select %9, %96, %101 : vector<8x128xi1>, vector<8x128xf32>
    %103 = vector.extract_strided_slice %102 {offsets = [0, 0], sizes = [8, 32], strides = [1, 1]} : vector<8x128xf32> to vector<8x32xf32>
    %104 = vector.extract_strided_slice %102 {offsets = [0, 32], sizes = [8, 32], strides = [1, 1]} : vector<8x128xf32> to vector<8x32xf32>
    %105 = vector.extract_strided_slice %102 {offsets = [0, 64], sizes = [8, 32], strides = [1, 1]} : vector<8x128xf32> to vector<8x32xf32>
    %106 = vector.extract_strided_slice %102 {offsets = [0, 96], sizes = [8, 32], strides = [1, 1]} : vector<8x128xf32> to vector<8x32xf32>
    %107 = arith.mulf %104, %88 : vector<8x32xf32>
    %108 = arith.mulf %103, %105 : vector<8x32xf32>
    %109 = arith.addf %107, %108 : vector<8x32xf32>
    %110 = math.tanh %109 : vector<8x32xf32>
    %111 = arith.mulf %106, %110 : vector<8x32xf32>
    %c32_40 = arith.constant 32 : index
    %c0_41 = arith.constant 0 : index
    %112 = vector.load %arg10[%c32_40, %c0_41] : memref<64x128xf32, #tpu.memory_space<vmem>>, vector<8x128xf32>
    %c24_42 = arith.constant 24 : index
    %c0_43 = arith.constant 0 : index
    %113 = vector.load %arg10[%c24_42, %c0_43] : memref<64x128xf32, #tpu.memory_space<vmem>>, vector<8x128xf32>
    %cst_44 = arith.constant dense<0.000000e+00> : vector<8x128xf32>
    %114 = tpu.matmul %111, %25, %cst_44 {dimension_numbers = #tpu.dot_dimension_numbers<[1], [0], [0], [1], [0, 0, 1, 1], [], []>} : vector<8x32xf32>, vector<32x128xf32>, vector<8x128xf32> -> vector<8x128xf32>
    %115 = arith.select %4, %113, %112 : vector<8x128xi1>, vector<8x128xf32>
    %116 = arith.addf %114, %115 : vector<8x128xf32>
    %117 = math.tanh %116 : vector<8x128xf32>
    %118 = arith.negf %116 : vector<8x128xf32>
    %119 = math.exp %118 : vector<8x128xf32>
    %cst_45 = arith.constant 1.000000e+00 : f32
    %120 = vector.broadcast %cst_45 : f32 to vector<8x128xf32>
    %121 = arith.addf %120, %119 : vector<8x128xf32>
    %122 = arith.divf %120, %121 : vector<8x128xf32>
    %123 = arith.select %9, %117, %122 : vector<8x128xi1>, vector<8x128xf32>
    %124 = vector.extract_strided_slice %123 {offsets = [0, 0], sizes = [8, 32], strides = [1, 1]} : vector<8x128xf32> to vector<8x32xf32>
    %125 = vector.extract_strided_slice %123 {offsets = [0, 32], sizes = [8, 32], strides = [1, 1]} : vector<8x128xf32> to vector<8x32xf32>
    %126 = vector.extract_strided_slice %123 {offsets = [0, 64], sizes = [8, 32], strides = [1, 1]} : vector<8x128xf32> to vector<8x32xf32>
    %127 = vector.extract_strided_slice %123 {offsets = [0, 96], sizes = [8, 32], strides = [1, 1]} : vector<8x128xf32> to vector<8x32xf32>
    %128 = arith.mulf %125, %109 : vector<8x32xf32>
    %129 = arith.mulf %124, %126 : vector<8x32xf32>
    %130 = arith.addf %128, %129 : vector<8x32xf32>
    %131 = math.tanh %130 : vector<8x32xf32>
    %132 = arith.mulf %127, %131 : vector<8x32xf32>
    %c40_46 = arith.constant 40 : index
    %c0_47 = arith.constant 0 : index
    %133 = vector.load %arg10[%c40_46, %c0_47] : memref<64x128xf32, #tpu.memory_space<vmem>>, vector<8x128xf32>
    %c16_48 = arith.constant 16 : index
    %c0_49 = arith.constant 0 : index
    %134 = vector.load %arg10[%c16_48, %c0_49] : memref<64x128xf32, #tpu.memory_space<vmem>>, vector<8x128xf32>
    %cst_50 = arith.constant dense<0.000000e+00> : vector<8x128xf32>
    %135 = tpu.matmul %132, %25, %cst_50 {dimension_numbers = #tpu.dot_dimension_numbers<[1], [0], [0], [1], [0, 0, 1, 1], [], []>} : vector<8x32xf32>, vector<32x128xf32>, vector<8x128xf32> -> vector<8x128xf32>
    %136 = arith.select %4, %134, %133 : vector<8x128xi1>, vector<8x128xf32>
    %137 = arith.addf %135, %136 : vector<8x128xf32>
    %138 = math.tanh %137 : vector<8x128xf32>
    %139 = arith.negf %137 : vector<8x128xf32>
    %140 = math.exp %139 : vector<8x128xf32>
    %cst_51 = arith.constant 1.000000e+00 : f32
    %141 = vector.broadcast %cst_51 : f32 to vector<8x128xf32>
    %142 = arith.addf %141, %140 : vector<8x128xf32>
    %143 = arith.divf %141, %142 : vector<8x128xf32>
    %144 = arith.select %9, %138, %143 : vector<8x128xi1>, vector<8x128xf32>
    %145 = vector.extract_strided_slice %144 {offsets = [0, 0], sizes = [8, 32], strides = [1, 1]} : vector<8x128xf32> to vector<8x32xf32>
    %146 = vector.extract_strided_slice %144 {offsets = [0, 32], sizes = [8, 32], strides = [1, 1]} : vector<8x128xf32> to vector<8x32xf32>
    %147 = vector.extract_strided_slice %144 {offsets = [0, 64], sizes = [8, 32], strides = [1, 1]} : vector<8x128xf32> to vector<8x32xf32>
    %148 = vector.extract_strided_slice %144 {offsets = [0, 96], sizes = [8, 32], strides = [1, 1]} : vector<8x128xf32> to vector<8x32xf32>
    %149 = arith.mulf %146, %130 : vector<8x32xf32>
    %150 = arith.mulf %145, %147 : vector<8x32xf32>
    %151 = arith.addf %149, %150 : vector<8x32xf32>
    %152 = math.tanh %151 : vector<8x32xf32>
    %153 = arith.mulf %148, %152 : vector<8x32xf32>
    %c48_52 = arith.constant 48 : index
    %c0_53 = arith.constant 0 : index
    %154 = vector.load %arg10[%c48_52, %c0_53] : memref<64x128xf32, #tpu.memory_space<vmem>>, vector<8x128xf32>
    %c8_54 = arith.constant 8 : index
    %c0_55 = arith.constant 0 : index
    %155 = vector.load %arg10[%c8_54, %c0_55] : memref<64x128xf32, #tpu.memory_space<vmem>>, vector<8x128xf32>
    %cst_56 = arith.constant dense<0.000000e+00> : vector<8x128xf32>
    %156 = tpu.matmul %153, %25, %cst_56 {dimension_numbers = #tpu.dot_dimension_numbers<[1], [0], [0], [1], [0, 0, 1, 1], [], []>} : vector<8x32xf32>, vector<32x128xf32>, vector<8x128xf32> -> vector<8x128xf32>
    %157 = arith.select %4, %155, %154 : vector<8x128xi1>, vector<8x128xf32>
    %158 = arith.addf %156, %157 : vector<8x128xf32>
    %159 = math.tanh %158 : vector<8x128xf32>
    %160 = arith.negf %158 : vector<8x128xf32>
    %161 = math.exp %160 : vector<8x128xf32>
    %cst_57 = arith.constant 1.000000e+00 : f32
    %162 = vector.broadcast %cst_57 : f32 to vector<8x128xf32>
    %163 = arith.addf %162, %161 : vector<8x128xf32>
    %164 = arith.divf %162, %163 : vector<8x128xf32>
    %165 = arith.select %9, %159, %164 : vector<8x128xi1>, vector<8x128xf32>
    %166 = vector.extract_strided_slice %165 {offsets = [0, 0], sizes = [8, 32], strides = [1, 1]} : vector<8x128xf32> to vector<8x32xf32>
    %167 = vector.extract_strided_slice %165 {offsets = [0, 32], sizes = [8, 32], strides = [1, 1]} : vector<8x128xf32> to vector<8x32xf32>
    %168 = vector.extract_strided_slice %165 {offsets = [0, 64], sizes = [8, 32], strides = [1, 1]} : vector<8x128xf32> to vector<8x32xf32>
    %169 = vector.extract_strided_slice %165 {offsets = [0, 96], sizes = [8, 32], strides = [1, 1]} : vector<8x128xf32> to vector<8x32xf32>
    %170 = arith.mulf %167, %151 : vector<8x32xf32>
    %171 = arith.mulf %166, %168 : vector<8x32xf32>
    %172 = arith.addf %170, %171 : vector<8x32xf32>
    %173 = math.tanh %172 : vector<8x32xf32>
    %174 = arith.mulf %169, %173 : vector<8x32xf32>
    %c56_58 = arith.constant 56 : index
    %c0_59 = arith.constant 0 : index
    %175 = vector.load %arg10[%c56_58, %c0_59] : memref<64x128xf32, #tpu.memory_space<vmem>>, vector<8x128xf32>
    %c0_60 = arith.constant 0 : index
    %c0_61 = arith.constant 0 : index
    %176 = vector.load %arg10[%c0_60, %c0_61] : memref<64x128xf32, #tpu.memory_space<vmem>>, vector<8x128xf32>
    %cst_62 = arith.constant dense<0.000000e+00> : vector<8x128xf32>
    %177 = tpu.matmul %174, %25, %cst_62 {dimension_numbers = #tpu.dot_dimension_numbers<[1], [0], [0], [1], [0, 0, 1, 1], [], []>} : vector<8x32xf32>, vector<32x128xf32>, vector<8x128xf32> -> vector<8x128xf32>
    %178 = arith.select %4, %176, %175 : vector<8x128xi1>, vector<8x128xf32>
    %179 = arith.addf %177, %178 : vector<8x128xf32>
    %180 = math.tanh %179 : vector<8x128xf32>
    %181 = arith.negf %179 : vector<8x128xf32>
    %182 = math.exp %181 : vector<8x128xf32>
    %cst_63 = arith.constant 1.000000e+00 : f32
    %183 = vector.broadcast %cst_63 : f32 to vector<8x128xf32>
    %184 = arith.addf %183, %182 : vector<8x128xf32>
    %185 = arith.divf %183, %184 : vector<8x128xf32>
    %186 = arith.select %9, %180, %185 : vector<8x128xi1>, vector<8x128xf32>
    %187 = vector.extract_strided_slice %186 {offsets = [0, 0], sizes = [8, 32], strides = [1, 1]} : vector<8x128xf32> to vector<8x32xf32>
    %188 = vector.extract_strided_slice %186 {offsets = [0, 32], sizes = [8, 32], strides = [1, 1]} : vector<8x128xf32> to vector<8x32xf32>
    %189 = vector.extract_strided_slice %186 {offsets = [0, 64], sizes = [8, 32], strides = [1, 1]} : vector<8x128xf32> to vector<8x32xf32>
    %190 = vector.extract_strided_slice %186 {offsets = [0, 96], sizes = [8, 32], strides = [1, 1]} : vector<8x128xf32> to vector<8x32xf32>
    %191 = arith.mulf %188, %172 : vector<8x32xf32>
    %192 = arith.mulf %187, %189 : vector<8x32xf32>
    %193 = arith.addf %191, %192 : vector<8x32xf32>
    %194 = math.tanh %193 : vector<8x32xf32>
    %195 = arith.mulf %190, %194 : vector<8x32xf32>
    %196 = arith.select %14, %195, %48 : vector<8x32xi1>, vector<8x32xf32>
    %197 = arith.select %14, %174, %69 : vector<8x32xi1>, vector<8x32xf32>
    %198 = arith.select %14, %153, %90 : vector<8x32xi1>, vector<8x32xf32>
    %199 = arith.select %14, %132, %111 : vector<8x32xi1>, vector<8x32xf32>
    %200 = arith.select %14, %111, %132 : vector<8x32xi1>, vector<8x32xf32>
    %201 = arith.select %14, %90, %153 : vector<8x32xi1>, vector<8x32xf32>
    %202 = arith.select %14, %69, %174 : vector<8x32xi1>, vector<8x32xf32>
    %203 = arith.select %14, %48, %195 : vector<8x32xi1>, vector<8x32xf32>
    %c0_64 = arith.constant 0 : index
    %c0_65 = arith.constant 0 : index
    %204 = vector.load %arg11[%c0_64, %c0_65] : memref<64x32xf32, #tpu.memory_space<vmem>>, vector<8x32xf32>
    tpu.vector_store %arg11[%c0_64, %c0_65], %196 {strides = array<i32>} : memref<64x32xf32, #tpu.memory_space<vmem>>, vector<8x32xf32>,
    %c8_66 = arith.constant 8 : index
    %c0_67 = arith.constant 0 : index
    %205 = vector.load %arg11[%c8_66, %c0_67] : memref<64x32xf32, #tpu.memory_space<vmem>>, vector<8x32xf32>
    tpu.vector_store %arg11[%c8_66, %c0_67], %197 {strides = array<i32>} : memref<64x32xf32, #tpu.memory_space<vmem>>, vector<8x32xf32>,
    %c16_68 = arith.constant 16 : index
    %c0_69 = arith.constant 0 : index
    %206 = vector.load %arg11[%c16_68, %c0_69] : memref<64x32xf32, #tpu.memory_space<vmem>>, vector<8x32xf32>
    tpu.vector_store %arg11[%c16_68, %c0_69], %198 {strides = array<i32>} : memref<64x32xf32, #tpu.memory_space<vmem>>, vector<8x32xf32>,
    %c24_70 = arith.constant 24 : index
    %c0_71 = arith.constant 0 : index
    %207 = vector.load %arg11[%c24_70, %c0_71] : memref<64x32xf32, #tpu.memory_space<vmem>>, vector<8x32xf32>
    tpu.vector_store %arg11[%c24_70, %c0_71], %199 {strides = array<i32>} : memref<64x32xf32, #tpu.memory_space<vmem>>, vector<8x32xf32>,
    %c32_72 = arith.constant 32 : index
    %c0_73 = arith.constant 0 : index
    %208 = vector.load %arg11[%c32_72, %c0_73] : memref<64x32xf32, #tpu.memory_space<vmem>>, vector<8x32xf32>
    tpu.vector_store %arg11[%c32_72, %c0_73], %200 {strides = array<i32>} : memref<64x32xf32, #tpu.memory_space<vmem>>, vector<8x32xf32>,
    %c40_74 = arith.constant 40 : index
    %c0_75 = arith.constant 0 : index
    %209 = vector.load %arg11[%c40_74, %c0_75] : memref<64x32xf32, #tpu.memory_space<vmem>>, vector<8x32xf32>
    tpu.vector_store %arg11[%c40_74, %c0_75], %201 {strides = array<i32>} : memref<64x32xf32, #tpu.memory_space<vmem>>, vector<8x32xf32>,
    %c48_76 = arith.constant 48 : index
    %c0_77 = arith.constant 0 : index
    %210 = vector.load %arg11[%c48_76, %c0_77] : memref<64x32xf32, #tpu.memory_space<vmem>>, vector<8x32xf32>
    tpu.vector_store %arg11[%c48_76, %c0_77], %202 {strides = array<i32>} : memref<64x32xf32, #tpu.memory_space<vmem>>, vector<8x32xf32>,
    %c56_78 = arith.constant 56 : index
    %c0_79 = arith.constant 0 : index
    %211 = vector.load %arg11[%c56_78, %c0_79] : memref<64x32xf32, #tpu.memory_space<vmem>>, vector<8x32xf32>
    tpu.vector_store %arg11[%c56_78, %c0_79], %203 {strides = array<i32>} : memref<64x32xf32, #tpu.memory_space<vmem>>, vector<8x32xf32>,
    %c0_80 = arith.constant 0 : index
    %c0_81 = arith.constant 0 : index
    %212 = vector.load %arg11[%c0_80, %c0_81] : memref<64x32xf32, #tpu.memory_space<vmem>>, vector<64x32xf32>
    %c1 = arith.constant 1 : index
    %c0_82 = arith.constant 0 : index
    %c0_83 = arith.constant 0 : index
    %213 = vector.load %arg1[%c1, %c0_82, %c0_83] : memref<2x32x128xf32, #tpu.memory_space<vmem>>, vector<1x32x128xf32>
    %214 = vector.shape_cast %213 : vector<1x32x128xf32> to vector<32x128xf32>
    %cst_84 = arith.constant dense<0.000000e+00> : vector<64x128xf32>
    %215 = tpu.matmul %212, %214, %cst_84 {dimension_numbers = #tpu.dot_dimension_numbers<[1], [0], [0], [1], [0, 0, 1, 1], [], []>} : vector<64x32xf32>, vector<32x128xf32>, vector<64x128xf32> -> vector<64x128xf32>
    %c1_85 = arith.constant 1 : index
    %c0_86 = arith.constant 0 : index
    %c0_87 = arith.constant 0 : index
    %216 = vector.load %arg3[%c1_85, %c0_86, %c0_87] : memref<2x1x128xf32, #tpu.memory_space<vmem>>, vector<1x1x128xf32>
    %217 = vector.shape_cast %216 : vector<1x1x128xf32> to vector<1x128xf32>
    %218 = vector.broadcast %217 : vector<1x128xf32> to vector<64x128xf32>
    %219 = arith.addf %215, %218 : vector<64x128xf32>
    %c0_88 = arith.constant 0 : index
    %c0_89 = arith.constant 0 : index
    %220 = vector.load %arg10[%c0_88, %c0_89] : memref<64x128xf32, #tpu.memory_space<vmem>>, vector<64x128xf32>
    tpu.vector_store %arg10[%c0_88, %c0_89], %219 {strides = array<i32>} : memref<64x128xf32, #tpu.memory_space<vmem>>, vector<64x128xf32>,
    %c1_90 = arith.constant 1 : index
    %c0_91 = arith.constant 0 : index
    %c0_92 = arith.constant 0 : index
    %221 = vector.load %arg2[%c1_90, %c0_91, %c0_92] : memref<2x32x128xf32, #tpu.memory_space<vmem>>, vector<1x32x128xf32>
    %222 = vector.shape_cast %221 : vector<1x32x128xf32> to vector<32x128xf32>
    %cst_93 = arith.constant 0.000000e+00 : f32
    %223 = vector.broadcast %cst_93 : f32 to vector<8x32xf32>
    %cst_94 = arith.constant 0.000000e+00 : f32
    %224 = vector.broadcast %cst_94 : f32 to vector<8x32xf32>
    %c0_95 = arith.constant 0 : index
    %c0_96 = arith.constant 0 : index
    %225 = vector.load %arg10[%c0_95, %c0_96] : memref<64x128xf32, #tpu.memory_space<vmem>>, vector<8x128xf32>
    %c56_97 = arith.constant 56 : index
    %c0_98 = arith.constant 0 : index
    %226 = vector.load %arg10[%c56_97, %c0_98] : memref<64x128xf32, #tpu.memory_space<vmem>>, vector<8x128xf32>
    %cst_99 = arith.constant dense<0.000000e+00> : vector<8x128xf32>
    %227 = tpu.matmul %223, %222, %cst_99 {dimension_numbers = #tpu.dot_dimension_numbers<[1], [0], [0], [1], [0, 0, 1, 1], [], []>} : vector<8x32xf32>, vector<32x128xf32>, vector<8x128xf32> -> vector<8x128xf32>
    %228 = arith.select %4, %226, %225 : vector<8x128xi1>, vector<8x128xf32>
    %229 = arith.addf %227, %228 : vector<8x128xf32>
    %230 = math.tanh %229 : vector<8x128xf32>
    %231 = arith.negf %229 : vector<8x128xf32>
    %232 = math.exp %231 : vector<8x128xf32>
    %cst_100 = arith.constant 1.000000e+00 : f32
    %233 = vector.broadcast %cst_100 : f32 to vector<8x128xf32>
    %234 = arith.addf %233, %232 : vector<8x128xf32>
    %235 = arith.divf %233, %234 : vector<8x128xf32>
    %236 = arith.select %9, %230, %235 : vector<8x128xi1>, vector<8x128xf32>
    %237 = vector.extract_strided_slice %236 {offsets = [0, 0], sizes = [8, 32], strides = [1, 1]} : vector<8x128xf32> to vector<8x32xf32>
    %238 = vector.extract_strided_slice %236 {offsets = [0, 32], sizes = [8, 32], strides = [1, 1]} : vector<8x128xf32> to vector<8x32xf32>
    %239 = vector.extract_strided_slice %236 {offsets = [0, 64], sizes = [8, 32], strides = [1, 1]} : vector<8x128xf32> to vector<8x32xf32>
    %240 = vector.extract_strided_slice %236 {offsets = [0, 96], sizes = [8, 32], strides = [1, 1]} : vector<8x128xf32> to vector<8x32xf32>
    %241 = arith.mulf %238, %224 : vector<8x32xf32>
    %242 = arith.mulf %237, %239 : vector<8x32xf32>
    %243 = arith.addf %241, %242 : vector<8x32xf32>
    %244 = math.tanh %243 : vector<8x32xf32>
    %245 = arith.mulf %240, %244 : vector<8x32xf32>
    %c8_101 = arith.constant 8 : index
    %c0_102 = arith.constant 0 : index
    %246 = vector.load %arg10[%c8_101, %c0_102] : memref<64x128xf32, #tpu.memory_space<vmem>>, vector<8x128xf32>
    %c48_103 = arith.constant 48 : index
    %c0_104 = arith.constant 0 : index
    %247 = vector.load %arg10[%c48_103, %c0_104] : memref<64x128xf32, #tpu.memory_space<vmem>>, vector<8x128xf32>
    %cst_105 = arith.constant dense<0.000000e+00> : vector<8x128xf32>
    %248 = tpu.matmul %245, %222, %cst_105 {dimension_numbers = #tpu.dot_dimension_numbers<[1], [0], [0], [1], [0, 0, 1, 1], [], []>} : vector<8x32xf32>, vector<32x128xf32>, vector<8x128xf32> -> vector<8x128xf32>
    %249 = arith.select %4, %247, %246 : vector<8x128xi1>, vector<8x128xf32>
    %250 = arith.addf %248, %249 : vector<8x128xf32>
    %251 = math.tanh %250 : vector<8x128xf32>
    %252 = arith.negf %250 : vector<8x128xf32>
    %253 = math.exp %252 : vector<8x128xf32>
    %cst_106 = arith.constant 1.000000e+00 : f32
    %254 = vector.broadcast %cst_106 : f32 to vector<8x128xf32>
    %255 = arith.addf %254, %253 : vector<8x128xf32>
    %256 = arith.divf %254, %255 : vector<8x128xf32>
    %257 = arith.select %9, %251, %256 : vector<8x128xi1>, vector<8x128xf32>
    %258 = vector.extract_strided_slice %257 {offsets = [0, 0], sizes = [8, 32], strides = [1, 1]} : vector<8x128xf32> to vector<8x32xf32>
    %259 = vector.extract_strided_slice %257 {offsets = [0, 32], sizes = [8, 32], strides = [1, 1]} : vector<8x128xf32> to vector<8x32xf32>
    %260 = vector.extract_strided_slice %257 {offsets = [0, 64], sizes = [8, 32], strides = [1, 1]} : vector<8x128xf32> to vector<8x32xf32>
    %261 = vector.extract_strided_slice %257 {offsets = [0, 96], sizes = [8, 32], strides = [1, 1]} : vector<8x128xf32> to vector<8x32xf32>
    %262 = arith.mulf %259, %243 : vector<8x32xf32>
    %263 = arith.mulf %258, %260 : vector<8x32xf32>
    %264 = arith.addf %262, %263 : vector<8x32xf32>
    %265 = math.tanh %264 : vector<8x32xf32>
    %266 = arith.mulf %261, %265 : vector<8x32xf32>
    %c16_107 = arith.constant 16 : index
    %c0_108 = arith.constant 0 : index
    %267 = vector.load %arg10[%c16_107, %c0_108] : memref<64x128xf32, #tpu.memory_space<vmem>>, vector<8x128xf32>
    %c40_109 = arith.constant 40 : index
    %c0_110 = arith.constant 0 : index
    %268 = vector.load %arg10[%c40_109, %c0_110] : memref<64x128xf32, #tpu.memory_space<vmem>>, vector<8x128xf32>
    %cst_111 = arith.constant dense<0.000000e+00> : vector<8x128xf32>
    %269 = tpu.matmul %266, %222, %cst_111 {dimension_numbers = #tpu.dot_dimension_numbers<[1], [0], [0], [1], [0, 0, 1, 1], [], []>} : vector<8x32xf32>, vector<32x128xf32>, vector<8x128xf32> -> vector<8x128xf32>
    %270 = arith.select %4, %268, %267 : vector<8x128xi1>, vector<8x128xf32>
    %271 = arith.addf %269, %270 : vector<8x128xf32>
    %272 = math.tanh %271 : vector<8x128xf32>
    %273 = arith.negf %271 : vector<8x128xf32>
    %274 = math.exp %273 : vector<8x128xf32>
    %cst_112 = arith.constant 1.000000e+00 : f32
    %275 = vector.broadcast %cst_112 : f32 to vector<8x128xf32>
    %276 = arith.addf %275, %274 : vector<8x128xf32>
    %277 = arith.divf %275, %276 : vector<8x128xf32>
    %278 = arith.select %9, %272, %277 : vector<8x128xi1>, vector<8x128xf32>
    %279 = vector.extract_strided_slice %278 {offsets = [0, 0], sizes = [8, 32], strides = [1, 1]} : vector<8x128xf32> to vector<8x32xf32>
    %280 = vector.extract_strided_slice %278 {offsets = [0, 32], sizes = [8, 32], strides = [1, 1]} : vector<8x128xf32> to vector<8x32xf32>
    %281 = vector.extract_strided_slice %278 {offsets = [0, 64], sizes = [8, 32], strides = [1, 1]} : vector<8x128xf32> to vector<8x32xf32>
    %282 = vector.extract_strided_slice %278 {offsets = [0, 96], sizes = [8, 32], strides = [1, 1]} : vector<8x128xf32> to vector<8x32xf32>
    %283 = arith.mulf %280, %264 : vector<8x32xf32>
    %284 = arith.mulf %279, %281 : vector<8x32xf32>
    %285 = arith.addf %283, %284 : vector<8x32xf32>
    %286 = math.tanh %285 : vector<8x32xf32>
    %287 = arith.mulf %282, %286 : vector<8x32xf32>
    %c24_113 = arith.constant 24 : index
    %c0_114 = arith.constant 0 : index
    %288 = vector.load %arg10[%c24_113, %c0_114] : memref<64x128xf32, #tpu.memory_space<vmem>>, vector<8x128xf32>
    %c32_115 = arith.constant 32 : index
    %c0_116 = arith.constant 0 : index
    %289 = vector.load %arg10[%c32_115, %c0_116] : memref<64x128xf32, #tpu.memory_space<vmem>>, vector<8x128xf32>
    %cst_117 = arith.constant dense<0.000000e+00> : vector<8x128xf32>
    %290 = tpu.matmul %287, %222, %cst_117 {dimension_numbers = #tpu.dot_dimension_numbers<[1], [0], [0], [1], [0, 0, 1, 1], [], []>} : vector<8x32xf32>, vector<32x128xf32>, vector<8x128xf32> -> vector<8x128xf32>
    %291 = arith.select %4, %289, %288 : vector<8x128xi1>, vector<8x128xf32>
    %292 = arith.addf %290, %291 : vector<8x128xf32>
    %293 = math.tanh %292 : vector<8x128xf32>
    %294 = arith.negf %292 : vector<8x128xf32>
    %295 = math.exp %294 : vector<8x128xf32>
    %cst_118 = arith.constant 1.000000e+00 : f32
    %296 = vector.broadcast %cst_118 : f32 to vector<8x128xf32>
    %297 = arith.addf %296, %295 : vector<8x128xf32>
    %298 = arith.divf %296, %297 : vector<8x128xf32>
    %299 = arith.select %9, %293, %298 : vector<8x128xi1>, vector<8x128xf32>
    %300 = vector.extract_strided_slice %299 {offsets = [0, 0], sizes = [8, 32], strides = [1, 1]} : vector<8x128xf32> to vector<8x32xf32>
    %301 = vector.extract_strided_slice %299 {offsets = [0, 32], sizes = [8, 32], strides = [1, 1]} : vector<8x128xf32> to vector<8x32xf32>
    %302 = vector.extract_strided_slice %299 {offsets = [0, 64], sizes = [8, 32], strides = [1, 1]} : vector<8x128xf32> to vector<8x32xf32>
    %303 = vector.extract_strided_slice %299 {offsets = [0, 96], sizes = [8, 32], strides = [1, 1]} : vector<8x128xf32> to vector<8x32xf32>
    %304 = arith.mulf %301, %285 : vector<8x32xf32>
    %305 = arith.mulf %300, %302 : vector<8x32xf32>
    %306 = arith.addf %304, %305 : vector<8x32xf32>
    %307 = math.tanh %306 : vector<8x32xf32>
    %308 = arith.mulf %303, %307 : vector<8x32xf32>
    %c32_119 = arith.constant 32 : index
    %c0_120 = arith.constant 0 : index
    %309 = vector.load %arg10[%c32_119, %c0_120] : memref<64x128xf32, #tpu.memory_space<vmem>>, vector<8x128xf32>
    %c24_121 = arith.constant 24 : index
    %c0_122 = arith.constant 0 : index
    %310 = vector.load %arg10[%c24_121, %c0_122] : memref<64x128xf32, #tpu.memory_space<vmem>>, vector<8x128xf32>
    %cst_123 = arith.constant dense<0.000000e+00> : vector<8x128xf32>
    %311 = tpu.matmul %308, %222, %cst_123 {dimension_numbers = #tpu.dot_dimension_numbers<[1], [0], [0], [1], [0, 0, 1, 1], [], []>} : vector<8x32xf32>, vector<32x128xf32>, vector<8x128xf32> -> vector<8x128xf32>
    %312 = arith.select %4, %310, %309 : vector<8x128xi1>, vector<8x128xf32>
    %313 = arith.addf %311, %312 : vector<8x128xf32>
    %314 = math.tanh %313 : vector<8x128xf32>
    %315 = arith.negf %313 : vector<8x128xf32>
    %316 = math.exp %315 : vector<8x128xf32>
    %cst_124 = arith.constant 1.000000e+00 : f32
    %317 = vector.broadcast %cst_124 : f32 to vector<8x128xf32>
    %318 = arith.addf %317, %316 : vector<8x128xf32>
    %319 = arith.divf %317, %318 : vector<8x128xf32>
    %320 = arith.select %9, %314, %319 : vector<8x128xi1>, vector<8x128xf32>
    %321 = vector.extract_strided_slice %320 {offsets = [0, 0], sizes = [8, 32], strides = [1, 1]} : vector<8x128xf32> to vector<8x32xf32>
    %322 = vector.extract_strided_slice %320 {offsets = [0, 32], sizes = [8, 32], strides = [1, 1]} : vector<8x128xf32> to vector<8x32xf32>
    %323 = vector.extract_strided_slice %320 {offsets = [0, 64], sizes = [8, 32], strides = [1, 1]} : vector<8x128xf32> to vector<8x32xf32>
    %324 = vector.extract_strided_slice %320 {offsets = [0, 96], sizes = [8, 32], strides = [1, 1]} : vector<8x128xf32> to vector<8x32xf32>
    %325 = arith.mulf %322, %306 : vector<8x32xf32>
    %326 = arith.mulf %321, %323 : vector<8x32xf32>
    %327 = arith.addf %325, %326 : vector<8x32xf32>
    %328 = math.tanh %327 : vector<8x32xf32>
    %329 = arith.mulf %324, %328 : vector<8x32xf32>
    %c40_125 = arith.constant 40 : index
    %c0_126 = arith.constant 0 : index
    %330 = vector.load %arg10[%c40_125, %c0_126] : memref<64x128xf32, #tpu.memory_space<vmem>>, vector<8x128xf32>
    %c16_127 = arith.constant 16 : index
    %c0_128 = arith.constant 0 : index
    %331 = vector.load %arg10[%c16_127, %c0_128] : memref<64x128xf32, #tpu.memory_space<vmem>>, vector<8x128xf32>
    %cst_129 = arith.constant dense<0.000000e+00> : vector<8x128xf32>
    %332 = tpu.matmul %329, %222, %cst_129 {dimension_numbers = #tpu.dot_dimension_numbers<[1], [0], [0], [1], [0, 0, 1, 1], [], []>} : vector<8x32xf32>, vector<32x128xf32>, vector<8x128xf32> -> vector<8x128xf32>
    %333 = arith.select %4, %331, %330 : vector<8x128xi1>, vector<8x128xf32>
    %334 = arith.addf %332, %333 : vector<8x128xf32>
    %335 = math.tanh %334 : vector<8x128xf32>
    %336 = arith.negf %334 : vector<8x128xf32>
    %337 = math.exp %336 : vector<8x128xf32>
    %cst_130 = arith.constant 1.000000e+00 : f32
    %338 = vector.broadcast %cst_130 : f32 to vector<8x128xf32>
    %339 = arith.addf %338, %337 : vector<8x128xf32>
    %340 = arith.divf %338, %339 : vector<8x128xf32>
    %341 = arith.select %9, %335, %340 : vector<8x128xi1>, vector<8x128xf32>
    %342 = vector.extract_strided_slice %341 {offsets = [0, 0], sizes = [8, 32], strides = [1, 1]} : vector<8x128xf32> to vector<8x32xf32>
    %343 = vector.extract_strided_slice %341 {offsets = [0, 32], sizes = [8, 32], strides = [1, 1]} : vector<8x128xf32> to vector<8x32xf32>
    %344 = vector.extract_strided_slice %341 {offsets = [0, 64], sizes = [8, 32], strides = [1, 1]} : vector<8x128xf32> to vector<8x32xf32>
    %345 = vector.extract_strided_slice %341 {offsets = [0, 96], sizes = [8, 32], strides = [1, 1]} : vector<8x128xf32> to vector<8x32xf32>
    %346 = arith.mulf %343, %327 : vector<8x32xf32>
    %347 = arith.mulf %342, %344 : vector<8x32xf32>
    %348 = arith.addf %346, %347 : vector<8x32xf32>
    %349 = math.tanh %348 : vector<8x32xf32>
    %350 = arith.mulf %345, %349 : vector<8x32xf32>
    %c48_131 = arith.constant 48 : index
    %c0_132 = arith.constant 0 : index
    %351 = vector.load %arg10[%c48_131, %c0_132] : memref<64x128xf32, #tpu.memory_space<vmem>>, vector<8x128xf32>
    %c8_133 = arith.constant 8 : index
    %c0_134 = arith.constant 0 : index
    %352 = vector.load %arg10[%c8_133, %c0_134] : memref<64x128xf32, #tpu.memory_space<vmem>>, vector<8x128xf32>
    %cst_135 = arith.constant dense<0.000000e+00> : vector<8x128xf32>
    %353 = tpu.matmul %350, %222, %cst_135 {dimension_numbers = #tpu.dot_dimension_numbers<[1], [0], [0], [1], [0, 0, 1, 1], [], []>} : vector<8x32xf32>, vector<32x128xf32>, vector<8x128xf32> -> vector<8x128xf32>
    %354 = arith.select %4, %352, %351 : vector<8x128xi1>, vector<8x128xf32>
    %355 = arith.addf %353, %354 : vector<8x128xf32>
    %356 = math.tanh %355 : vector<8x128xf32>
    %357 = arith.negf %355 : vector<8x128xf32>
    %358 = math.exp %357 : vector<8x128xf32>
    %cst_136 = arith.constant 1.000000e+00 : f32
    %359 = vector.broadcast %cst_136 : f32 to vector<8x128xf32>
    %360 = arith.addf %359, %358 : vector<8x128xf32>
    %361 = arith.divf %359, %360 : vector<8x128xf32>
    %362 = arith.select %9, %356, %361 : vector<8x128xi1>, vector<8x128xf32>
    %363 = vector.extract_strided_slice %362 {offsets = [0, 0], sizes = [8, 32], strides = [1, 1]} : vector<8x128xf32> to vector<8x32xf32>
    %364 = vector.extract_strided_slice %362 {offsets = [0, 32], sizes = [8, 32], strides = [1, 1]} : vector<8x128xf32> to vector<8x32xf32>
    %365 = vector.extract_strided_slice %362 {offsets = [0, 64], sizes = [8, 32], strides = [1, 1]} : vector<8x128xf32> to vector<8x32xf32>
    %366 = vector.extract_strided_slice %362 {offsets = [0, 96], sizes = [8, 32], strides = [1, 1]} : vector<8x128xf32> to vector<8x32xf32>
    %367 = arith.mulf %364, %348 : vector<8x32xf32>
    %368 = arith.mulf %363, %365 : vector<8x32xf32>
    %369 = arith.addf %367, %368 : vector<8x32xf32>
    %370 = math.tanh %369 : vector<8x32xf32>
    %371 = arith.mulf %366, %370 : vector<8x32xf32>
    %c56_137 = arith.constant 56 : index
    %c0_138 = arith.constant 0 : index
    %372 = vector.load %arg10[%c56_137, %c0_138] : memref<64x128xf32, #tpu.memory_space<vmem>>, vector<8x128xf32>
    %c0_139 = arith.constant 0 : index
    %c0_140 = arith.constant 0 : index
    %373 = vector.load %arg10[%c0_139, %c0_140] : memref<64x128xf32, #tpu.memory_space<vmem>>, vector<8x128xf32>
    %cst_141 = arith.constant dense<0.000000e+00> : vector<8x128xf32>
    %374 = tpu.matmul %371, %222, %cst_141 {dimension_numbers = #tpu.dot_dimension_numbers<[1], [0], [0], [1], [0, 0, 1, 1], [], []>} : vector<8x32xf32>, vector<32x128xf32>, vector<8x128xf32> -> vector<8x128xf32>
    %375 = arith.select %4, %373, %372 : vector<8x128xi1>, vector<8x128xf32>
    %376 = arith.addf %374, %375 : vector<8x128xf32>
    %377 = math.tanh %376 : vector<8x128xf32>
    %378 = arith.negf %376 : vector<8x128xf32>
    %379 = math.exp %378 : vector<8x128xf32>
    %cst_142 = arith.constant 1.000000e+00 : f32
    %380 = vector.broadcast %cst_142 : f32 to vector<8x128xf32>
    %381 = arith.addf %380, %379 : vector<8x128xf32>
    %382 = arith.divf %380, %381 : vector<8x128xf32>
    %383 = arith.select %9, %377, %382 : vector<8x128xi1>, vector<8x128xf32>
    %384 = vector.extract_strided_slice %383 {offsets = [0, 0], sizes = [8, 32], strides = [1, 1]} : vector<8x128xf32> to vector<8x32xf32>
    %385 = vector.extract_strided_slice %383 {offsets = [0, 32], sizes = [8, 32], strides = [1, 1]} : vector<8x128xf32> to vector<8x32xf32>
    %386 = vector.extract_strided_slice %383 {offsets = [0, 64], sizes = [8, 32], strides = [1, 1]} : vector<8x128xf32> to vector<8x32xf32>
    %387 = vector.extract_strided_slice %383 {offsets = [0, 96], sizes = [8, 32], strides = [1, 1]} : vector<8x128xf32> to vector<8x32xf32>
    %388 = arith.mulf %385, %369 : vector<8x32xf32>
    %389 = arith.mulf %384, %386 : vector<8x32xf32>
    %390 = arith.addf %388, %389 : vector<8x32xf32>
    %391 = math.tanh %390 : vector<8x32xf32>
    %392 = arith.mulf %387, %391 : vector<8x32xf32>
    %393 = arith.select %14, %392, %245 : vector<8x32xi1>, vector<8x32xf32>
    %394 = arith.select %14, %371, %266 : vector<8x32xi1>, vector<8x32xf32>
    %395 = arith.select %14, %350, %287 : vector<8x32xi1>, vector<8x32xf32>
    %396 = arith.select %14, %329, %308 : vector<8x32xi1>, vector<8x32xf32>
    %397 = arith.select %14, %308, %329 : vector<8x32xi1>, vector<8x32xf32>
    %398 = arith.select %14, %287, %350 : vector<8x32xi1>, vector<8x32xf32>
    %399 = arith.select %14, %266, %371 : vector<8x32xi1>, vector<8x32xf32>
    %400 = arith.select %14, %245, %392 : vector<8x32xi1>, vector<8x32xf32>
    %c0_143 = arith.constant 0 : index
    %c0_144 = arith.constant 0 : index
    %401 = vector.load %arg11[%c0_143, %c0_144] : memref<64x32xf32, #tpu.memory_space<vmem>>, vector<8x32xf32>
    tpu.vector_store %arg11[%c0_143, %c0_144], %393 {strides = array<i32>} : memref<64x32xf32, #tpu.memory_space<vmem>>, vector<8x32xf32>,
    %c8_145 = arith.constant 8 : index
    %c0_146 = arith.constant 0 : index
    %402 = vector.load %arg11[%c8_145, %c0_146] : memref<64x32xf32, #tpu.memory_space<vmem>>, vector<8x32xf32>
    tpu.vector_store %arg11[%c8_145, %c0_146], %394 {strides = array<i32>} : memref<64x32xf32, #tpu.memory_space<vmem>>, vector<8x32xf32>,
    %c16_147 = arith.constant 16 : index
    %c0_148 = arith.constant 0 : index
    %403 = vector.load %arg11[%c16_147, %c0_148] : memref<64x32xf32, #tpu.memory_space<vmem>>, vector<8x32xf32>
    tpu.vector_store %arg11[%c16_147, %c0_148], %395 {strides = array<i32>} : memref<64x32xf32, #tpu.memory_space<vmem>>, vector<8x32xf32>,
    %c24_149 = arith.constant 24 : index
    %c0_150 = arith.constant 0 : index
    %404 = vector.load %arg11[%c24_149, %c0_150] : memref<64x32xf32, #tpu.memory_space<vmem>>, vector<8x32xf32>
    tpu.vector_store %arg11[%c24_149, %c0_150], %396 {strides = array<i32>} : memref<64x32xf32, #tpu.memory_space<vmem>>, vector<8x32xf32>,
    %c32_151 = arith.constant 32 : index
    %c0_152 = arith.constant 0 : index
    %405 = vector.load %arg11[%c32_151, %c0_152] : memref<64x32xf32, #tpu.memory_space<vmem>>, vector<8x32xf32>
    tpu.vector_store %arg11[%c32_151, %c0_152], %397 {strides = array<i32>} : memref<64x32xf32, #tpu.memory_space<vmem>>, vector<8x32xf32>,
    %c40_153 = arith.constant 40 : index
    %c0_154 = arith.constant 0 : index
    %406 = vector.load %arg11[%c40_153, %c0_154] : memref<64x32xf32, #tpu.memory_space<vmem>>, vector<8x32xf32>
    tpu.vector_store %arg11[%c40_153, %c0_154], %398 {strides = array<i32>} : memref<64x32xf32, #tpu.memory_space<vmem>>, vector<8x32xf32>,
    %c48_155 = arith.constant 48 : index
    %c0_156 = arith.constant 0 : index
    %407 = vector.load %arg11[%c48_155, %c0_156] : memref<64x32xf32, #tpu.memory_space<vmem>>, vector<8x32xf32>
    tpu.vector_store %arg11[%c48_155, %c0_156], %399 {strides = array<i32>} : memref<64x32xf32, #tpu.memory_space<vmem>>, vector<8x32xf32>,
    %c56_157 = arith.constant 56 : index
    %c0_158 = arith.constant 0 : index
    %408 = vector.load %arg11[%c56_157, %c0_158] : memref<64x32xf32, #tpu.memory_space<vmem>>, vector<8x32xf32>
    tpu.vector_store %arg11[%c56_157, %c0_158], %400 {strides = array<i32>} : memref<64x32xf32, #tpu.memory_space<vmem>>, vector<8x32xf32>,
    %c0_159 = arith.constant 0 : index
    %c0_160 = arith.constant 0 : index
    %409 = vector.load %arg11[%c0_159, %c0_160] : memref<64x32xf32, #tpu.memory_space<vmem>>, vector<64x32xf32>
    %410 = math.tanh %409 : vector<64x32xf32>
    %c0_161 = arith.constant 0 : index
    %c0_162 = arith.constant 0 : index
    %411 = vector.load %arg7[%c0_161, %c0_162] : memref<1x32xf32, #tpu.memory_space<vmem>>, vector<1x32xf32>
    %412 = vector.broadcast %411 : vector<1x32xf32> to vector<64x32xf32>
    %413 = arith.mulf %410, %412 : vector<64x32xf32>
    %cst_163 = arith.constant dense<0.000000e+00> : vector<64xf32>
    %414 = vector.multi_reduction <add>, %413, %cst_163 [1] : vector<64x32xf32> to vector<64xf32>
    %415 = vector.shape_cast %414 : vector<64xf32> to vector<64x1xf32>
    %c0_164 = arith.constant 0 : index
    %c0_165 = arith.constant 0 : index
    %416 = vector.load %arg8[%c0_164, %c0_165] : memref<1x1xf32, #tpu.memory_space<vmem>>, vector<1x1xf32>
    %417 = vector.broadcast %416 : vector<1x1xf32> to vector<64x1xf32>
    %418 = arith.addf %415, %417 : vector<64x1xf32>
    %419 = vector.extract_strided_slice %418 {offsets = [0, 0], sizes = [8, 1], strides = [1, 1]} : vector<64x1xf32> to vector<8x1xf32>
    %420 = vector.extract_strided_slice %418 {offsets = [8, 0], sizes = [8, 1], strides = [1, 1]} : vector<64x1xf32> to vector<8x1xf32>
    %421 = vector.extract_strided_slice %418 {offsets = [16, 0], sizes = [8, 1], strides = [1, 1]} : vector<64x1xf32> to vector<8x1xf32>
    %422 = vector.extract_strided_slice %418 {offsets = [24, 0], sizes = [8, 1], strides = [1, 1]} : vector<64x1xf32> to vector<8x1xf32>
    %423 = vector.extract_strided_slice %418 {offsets = [32, 0], sizes = [8, 1], strides = [1, 1]} : vector<64x1xf32> to vector<8x1xf32>
    %424 = vector.extract_strided_slice %418 {offsets = [40, 0], sizes = [8, 1], strides = [1, 1]} : vector<64x1xf32> to vector<8x1xf32>
    %425 = vector.extract_strided_slice %418 {offsets = [48, 0], sizes = [8, 1], strides = [1, 1]} : vector<64x1xf32> to vector<8x1xf32>
    %426 = vector.extract_strided_slice %418 {offsets = [56, 0], sizes = [8, 1], strides = [1, 1]} : vector<64x1xf32> to vector<8x1xf32>
    %427 = arith.maximumf %419, %420 : vector<8x1xf32>
    %428 = arith.maximumf %427, %421 : vector<8x1xf32>
    %429 = arith.maximumf %428, %422 : vector<8x1xf32>
    %430 = arith.maximumf %429, %423 : vector<8x1xf32>
    %431 = arith.maximumf %430, %424 : vector<8x1xf32>
    %432 = arith.maximumf %431, %425 : vector<8x1xf32>
    %433 = arith.maximumf %432, %426 : vector<8x1xf32>
    %434 = arith.subf %419, %433 : vector<8x1xf32>
    %435 = math.exp %434 : vector<8x1xf32>
    %436 = arith.subf %420, %433 : vector<8x1xf32>
    %437 = math.exp %436 : vector<8x1xf32>
    %438 = arith.subf %421, %433 : vector<8x1xf32>
    %439 = math.exp %438 : vector<8x1xf32>
    %440 = arith.subf %422, %433 : vector<8x1xf32>
    %441 = math.exp %440 : vector<8x1xf32>
    %442 = arith.subf %423, %433 : vector<8x1xf32>
    %443 = math.exp %442 : vector<8x1xf32>
    %444 = arith.subf %424, %433 : vector<8x1xf32>
    %445 = math.exp %444 : vector<8x1xf32>
    %446 = arith.subf %425, %433 : vector<8x1xf32>
    %447 = math.exp %446 : vector<8x1xf32>
    %448 = arith.subf %426, %433 : vector<8x1xf32>
    %449 = math.exp %448 : vector<8x1xf32>
    %450 = arith.addf %435, %437 : vector<8x1xf32>
    %451 = arith.addf %450, %439 : vector<8x1xf32>
    %452 = arith.addf %451, %441 : vector<8x1xf32>
    %453 = arith.addf %452, %443 : vector<8x1xf32>
    %454 = arith.addf %453, %445 : vector<8x1xf32>
    %455 = arith.addf %454, %447 : vector<8x1xf32>
    %456 = arith.addf %455, %449 : vector<8x1xf32>
    %457 = tpu.reciprocal %456 {approx = true} : vector<8x1xf32> -> vector<8x1xf32>
    %458 = arith.mulf %456, %457 : vector<8x1xf32>
    %cst_166 = arith.constant 2.000000e+00 : f32
    %459 = vector.broadcast %cst_166 : f32 to vector<8x1xf32>
    %460 = arith.subf %459, %458 : vector<8x1xf32>
    %461 = arith.mulf %457, %460 : vector<8x1xf32>
    %462 = arith.mulf %435, %461 : vector<8x1xf32>
    %c0_167 = arith.constant 0 : index
    %c0_168 = arith.constant 0 : index
    %463 = vector.load %arg11[%c0_167, %c0_168] : memref<64x32xf32, #tpu.memory_space<vmem>>, vector<8x32xf32>
    %464 = vector.broadcast %462 : vector<8x1xf32> to vector<8x32xf32>
    %465 = arith.mulf %464, %463 : vector<8x32xf32>
    %466 = arith.mulf %437, %461 : vector<8x1xf32>
    %c8_169 = arith.constant 8 : index
    %c0_170 = arith.constant 0 : index
    %467 = vector.load %arg11[%c8_169, %c0_170] : memref<64x32xf32, #tpu.memory_space<vmem>>, vector<8x32xf32>
    %468 = vector.broadcast %466 : vector<8x1xf32> to vector<8x32xf32>
    %469 = arith.mulf %468, %467 : vector<8x32xf32>
    %470 = arith.addf %465, %469 : vector<8x32xf32>
    %471 = arith.mulf %439, %461 : vector<8x1xf32>
    %c16_171 = arith.constant 16 : index
    %c0_172 = arith.constant 0 : index
    %472 = vector.load %arg11[%c16_171, %c0_172] : memref<64x32xf32, #tpu.memory_space<vmem>>, vector<8x32xf32>
    %473 = vector.broadcast %471 : vector<8x1xf32> to vector<8x32xf32>
    %474 = arith.mulf %473, %472 : vector<8x32xf32>
    %475 = arith.addf %470, %474 : vector<8x32xf32>
    %476 = arith.mulf %441, %461 : vector<8x1xf32>
    %c24_173 = arith.constant 24 : index
    %c0_174 = arith.constant 0 : index
    %477 = vector.load %arg11[%c24_173, %c0_174] : memref<64x32xf32, #tpu.memory_space<vmem>>, vector<8x32xf32>
    %478 = vector.broadcast %476 : vector<8x1xf32> to vector<8x32xf32>
    %479 = arith.mulf %478, %477 : vector<8x32xf32>
    %480 = arith.addf %475, %479 : vector<8x32xf32>
    %481 = arith.mulf %443, %461 : vector<8x1xf32>
    %c32_175 = arith.constant 32 : index
    %c0_176 = arith.constant 0 : index
    %482 = vector.load %arg11[%c32_175, %c0_176] : memref<64x32xf32, #tpu.memory_space<vmem>>, vector<8x32xf32>
    %483 = vector.broadcast %481 : vector<8x1xf32> to vector<8x32xf32>
    %484 = arith.mulf %483, %482 : vector<8x32xf32>
    %485 = arith.addf %480, %484 : vector<8x32xf32>
    %486 = arith.mulf %445, %461 : vector<8x1xf32>
    %c40_177 = arith.constant 40 : index
    %c0_178 = arith.constant 0 : index
    %487 = vector.load %arg11[%c40_177, %c0_178] : memref<64x32xf32, #tpu.memory_space<vmem>>, vector<8x32xf32>
    %488 = vector.broadcast %486 : vector<8x1xf32> to vector<8x32xf32>
    %489 = arith.mulf %488, %487 : vector<8x32xf32>
    %490 = arith.addf %485, %489 : vector<8x32xf32>
    %491 = arith.mulf %447, %461 : vector<8x1xf32>
    %c48_179 = arith.constant 48 : index
    %c0_180 = arith.constant 0 : index
    %492 = vector.load %arg11[%c48_179, %c0_180] : memref<64x32xf32, #tpu.memory_space<vmem>>, vector<8x32xf32>
    %493 = vector.broadcast %491 : vector<8x1xf32> to vector<8x32xf32>
    %494 = arith.mulf %493, %492 : vector<8x32xf32>
    %495 = arith.addf %490, %494 : vector<8x32xf32>
    %496 = arith.mulf %449, %461 : vector<8x1xf32>
    %c56_181 = arith.constant 56 : index
    %c0_182 = arith.constant 0 : index
    %497 = vector.load %arg11[%c56_181, %c0_182] : memref<64x32xf32, #tpu.memory_space<vmem>>, vector<8x32xf32>
    %498 = vector.broadcast %496 : vector<8x1xf32> to vector<8x32xf32>
    %499 = arith.mulf %498, %497 : vector<8x32xf32>
    %500 = arith.addf %495, %499 : vector<8x32xf32>
    %c0_183 = arith.constant 0 : index
    %c0_184 = arith.constant 0 : index
    %501 = vector.load %arg9[%c0_183, %c0_184] : memref<8x32xf32, #tpu.memory_space<vmem>>, vector<8x32xf32>
    tpu.vector_store %arg9[%c0_183, %c0_184], %500 {strides = array<i32>} : memref<8x32xf32, #tpu.memory_space<vmem>>, vector<8x32xf32>,
    return
  }
}

</mosaic_0001>

<llo_original>
// kernel: tpu_custom_call.1
$region0: #{tpu_custom_call.1}
  #allocation0 [shape = 'u32[]', space=smem, size = 0x4, offset = 0x4, fixed_abs, tag = 'smem constant byte address 0x4 - core index']
  #allocation1 [shape = 'u32[144,128]{1,0:T(1,128)}', space=vmem, size = 0x12000, scoped, tag = 'internal scratch']
  #allocation2 [shape = 'f32[64,128]{1,0:T(8,128)}', space=vmem, size = 0x8000, scoped, tag = 'scratch operand']
  #allocation3 [shape = 'f32[64,32]{1,0:T(8,128)}', space=vmem, size = 0x8000, scoped, tag = 'scratch operand']
  #allocation4 [shape = 'f32[1,1]{1,0:T(1,128)S(1)}', space=vmem, size = 0x200, scoped, tag = 'scoped memory for tpu_custom_call.1']
  %s0 = inlined_call_operand.vmem [shape: f32[64,32], index: 0, kind: input, shape index: {}]
  %s1 = inlined_call_operand.vmem [shape: f32[2,32,128], index: 1, kind: input, shape index: {}]
  %s2 = inlined_call_operand.hbm [shape: f32[2,32,128], index: 2, kind: input, shape index: {}]
  %s3 = inlined_call_operand.vmem [shape: f32[2,1,128], index: 3, kind: input, shape index: {}]
  %s4 = inlined_call_operand.vmem [shape: f32[1,128], index: 4, kind: input, shape index: {}]
  %s5 = inlined_call_operand.vmem [shape: f32[1,128], index: 5, kind: input, shape index: {}]
  %s6 = inlined_call_operand.vmem [shape: f32[1,32], index: 6, kind: input, shape index: {}]
  %s7 = inlined_call_operand.vmem [shape: f32[1,32], index: 7, kind: input, shape index: {}]
  %s8 = inlined_call_operand.<no memory space> [shape: f32[1,1], index: 8, kind: input, shape index: {}]
  %s9 = inlined_call_operand.hbm [shape: f32[8,32], index: 9, kind: output, shape index: {}]
  %s10 = sld [smem:[#allocation0]]
  $region50: #{tpu_custom_call.1} parent=0
    _
  %s12 = ssub.s32 1, %s10
  %s13 = scalar_select 0, %s12, %s10
  %v14 = vstv %s8
  %15 = vst [vmem:[#allocation4] sm:$0x1] %v14
  $region1: #{tpu_custom_call.1} parent=0
    #allocation5 [shape = 'u8[32768]{0}', space=vmem, size = 0x8000, scoped, tag = 'input window, operand 2, single buffered']
    #allocation6 [shape = 's32[1]{0}', space=sflag, size = 0x4, scoped, tag = 'scoped memory for tpu_custom_call.1']
    #allocation7 [shape = 's32[1]{0}', space=sflag, size = 0x4, scoped, tag = 'scoped memory for tpu_custom_call.1']
    #allocation8 [shape = 'u8[4096]{0}', space=vmem, size = 0x1000, scoped, tag = 'output window, operand 0, single buffered']
    %16 = vsyncpa [#allocation6], 0
    %17 = vsyncpa [#allocation7], 0
    // Predicated region
    $region2: #{tpu_custom_call.1} parent=1 // pred_check
      _
    $region3: #{tpu_custom_call.1} parent=1 // pred_check_branch
      %19 = sbr.rel (0) target = $region5
    $region4: #{tpu_custom_call.1} parent=1 // pred_region
      _
    $region5: #{tpu_custom_call.1} parent=1 // pred_fallthru
      _
    // Predicated region
    $region6: #{tpu_custom_call.1} parent=1 // pred_check
      _
    $region7: #{tpu_custom_call.1} parent=1 // pred_check_branch
      %21 = sbr.rel (0) target = $region9
    $region8: #{tpu_custom_call.1} parent=1 // pred_region
      _
    $region9: #{tpu_custom_call.1} parent=1 // pred_fallthru
      _
    // Predicated region
    $region10: #{tpu_custom_call.1} parent=1 // pred_check
      _
    $region11: #{tpu_custom_call.1} parent=1 // pred_check_branch
      %23 = sbr.rel (0) target = $region13
    $region12: #{tpu_custom_call.1} parent=1 // pred_region
      %s25 = ssub.s32 1024, 1024
      %26 = vsyncadd [#allocation6], %s25
      %s27 = sshll.u32 [#allocation5], 4
      %s28 = int_to_ptr.vmem [resolvable:$true] %s27
      %33 = dma.hbm_to_vmem [thread:$0]  %s2, 1024, %s28, [#allocation6], 128, 128, 8
    $region13: #{tpu_custom_call.1} parent=1 // pred_fallthru
      _
    // Predicated region
    $region14: #{tpu_custom_call.1} parent=1 // pred_check
      _
    $region15: #{tpu_custom_call.1} parent=1 // pred_check_branch
      %35 = sbr.rel (0) target = $region17
    $region16: #{tpu_custom_call.1} parent=1 // pred_region
      _
    $region17: #{tpu_custom_call.1} parent=1 // pred_fallthru
      _
    // Predicated region
    $region18: #{tpu_custom_call.1} parent=1 // pred_check
      _
    $region19: #{tpu_custom_call.1} parent=1 // pred_check_branch
      %37 = sbr.rel (0) target = $region21
    $region20: #{tpu_custom_call.1} parent=1 // pred_region
      _
    $region21: #{tpu_custom_call.1} parent=1 // pred_fallthru
      _
    // Predicated region
    $region22: #{tpu_custom_call.1} parent=1 // pred_check
      _
    $region23: #{tpu_custom_call.1} parent=1 // pred_check_branch
      %39 = sbr.rel (0) target = $region25
    $region24: #{tpu_custom_call.1} parent=1 // pred_region
      _
    $region25: #{tpu_custom_call.1} parent=1 // pred_fallthru
      _
    // Predicated region
    $region26: #{tpu_custom_call.1} parent=1 // pred_check
      _
    $region27: #{tpu_custom_call.1} parent=1 // pred_check_branch
      %41 = sbr.rel (0) target = $region29
    $region28: #{tpu_custom_call.1} parent=1 // pred_region
      _
    $region29: #{tpu_custom_call.1} parent=1 // pred_fallthru
      _
    // Predicated region
    $region30: #{tpu_custom_call.1} parent=1 // pred_check
      _
    $region31: #{tpu_custom_call.1} parent=1 // pred_check_branch
      %43 = sbr.rel (0) target = $region33
    $region32: #{tpu_custom_call.1} parent=1 // pred_region
      _
    $region33: #{tpu_custom_call.1} parent=1 // pred_fallthru
      _
    // Predicated region
    $region34: #{tpu_custom_call.1} parent=1 // pred_check
      _
    $region35: #{tpu_custom_call.1} parent=1 // pred_check_branch
      %45 = sbr.rel (0) target = $region37
    $region36: #{tpu_custom_call.1} parent=1 // pred_region
      _
    $region37: #{tpu_custom_call.1} parent=1 // pred_fallthru
      _
    // Predicated region
    $region38: #{tpu_custom_call.1} parent=1 // pred_check
      _
    $region39: #{tpu_custom_call.1} parent=1 // pred_check_branch
      %47 = sbr.rel (0) target = $region41
    $region40: #{tpu_custom_call.1} parent=1 // pred_region
      %48 = dma.done [#allocation6], 1024
    $region41: #{tpu_custom_call.1} parent=1 // pred_fallthru
      _
    %v49 = vld [vmem:[%s4] sm:$0x1]
    %vm50 = vcmp.ne.f32.partialorder %v49, 0.0
    %v51 = vsel %vm50, 1, 0
    %v52 = vlaneseq
    %v53 = vshrl.u32 %v52, 7
    %v54 = vsub.s32 0, %v53
    %v55 = vrot.slane %v51, %v54
    %vm56 = vcmp.eq.s32.totalorder %v55, 1
    %v57 = vld [vmem:[%s5] sm:$0x1]
    %vm58 = vcmp.ne.f32.partialorder %v57, 0.0
    %v59 = vsel %vm58, 1, 0
    %v60 = vlaneseq
    %v61 = vshrl.u32 %v60, 7
    %v62 = vsub.s32 0, %v61
    %v63 = vrot.slane %v59, %v62
    %vm64 = vcmp.eq.s32.totalorder %v63, 1
    %v65 = vld [vmem:[%s6] sm:$0x1]
    %vm66 = vcmp.ne.f32.partialorder %v65, 0.0
    %v67 = vsel %vm66, 1, 0
    %v68 = vlaneseq
    %v69 = vshrl.u32 %v68, 7
    %v70 = vsub.s32 0, %v69
    %v71 = vrot.slane %v67, %v70
    %vm72 = vcmp.eq.s32.totalorder %v71, 1
    %v73 = vld [vmem:[%s0] sm:$0xff]
    %v74 = vld [vmem:[%s0 + $0x8] sm:$0xff]
    %v75 = vld [vmem:[%s0 + $0x10] sm:$0xff]
    %v76 = vld [vmem:[%s0 + $0x18] sm:$0xff]
    %v77 = vld [vmem:[%s0 + $0x20] sm:$0xff]
    %v78 = vld [vmem:[%s0 + $0x28] sm:$0xff]
    %v79 = vld [vmem:[%s0 + $0x30] sm:$0xff]
    %v80 = vld [vmem:[%s0 + $0x38] sm:$0xff]
    %v81 = vld [vmem:[%s1] sm:$0xff]
    %v82 = vld [vmem:[%s1 + $0x8] sm:$0xff]
    %v83 = vld [vmem:[%s1 + $0x10] sm:$0xff]
    %v84 = vld [vmem:[%s1 + $0x18] sm:$0xff]
    %v85 = vld [vmem:[%s3] sm:$0x1]
    %v87 = vlaneseq
    %v88 = vshrl.u32 %v87, 7
    %v89 = vsub.s32 0, %v88
    %v90 = vrot.slane %v85, %v89
    %vm92 = vcmask 261120
    %v94 = vsel %vm92, %v73, 0
    %v97 = vsel %vm92, %v74, 0
    %v100 = vsel %vm92, %v75, 0
    %v103 = vsel %vm92, %v76, 0
    %v106 = vsel %vm92, %v77, 0
    %v109 = vsel %vm92, %v78, 0
    %v112 = vsel %vm92, %v79, 0
    %v115 = vsel %vm92, %v80, 0
    %117 = vmatprep.subr.mxu0 0.0
    %118 = vmatpush1.msra.mxu0 %v81
    %119 = vmatprep.subr.mxu0 0.0
    %120 = vmatpush1.msra.mxu0 %v82
    %121 = vmatprep.subr.mxu0 0.0
    %122 = vmatpush1.msra.mxu0 %v83
    %123 = vmatprep.subr.mxu0 0.0
    %124 = vmatpush1.msra.mxu0 %v84
    %125 = vmatprep.subr.mxu0 0.0
    %126 = vmatpush1.msra.mxu0 0.0
    %127 = vmatprep.subr.mxu0 0.0
    %128 = vmatpush1.msra.mxu0 0.0
    %129 = vmatprep.subr.mxu0 0.0
    %130 = vmatpush1.msra.mxu0 0.0
    %131 = vmatprep.subr.mxu0 0.0
    %132 = vmatpush1.msra.mxu0 0.0
    %133 = vmatprep.subr.mxu0 0.0
    %134 = vmatpush1.msra.mxu0 0.0
    %135 = vmatprep.subr.mxu0 0.0
    %136 = vmatpush1.msra.mxu0 0.0
    %137 = vmatprep.subr.mxu0 0.0
    %138 = vmatpush1.msra.mxu0 0.0
    %139 = vmatprep.subr.mxu0 0.0
    %140 = vmatpush1.msra.mxu0 0.0
    %141 = vmatprep.subr.mxu0 0.0
    %142 = vmatpush1.msra.mxu0 0.0
    %143 = vmatprep.subr.mxu0 0.0
    %144 = vmatpush1.msra.mxu0 0.0
    %145 = vmatprep.subr.mxu0 0.0
    %146 = vmatpush1.msra.mxu0 0.0
    %147 = vmatprep.subr.mxu0 0.0
    %148 = vmatpush1.msra.mxu0 0.0
    %149 = vmatprep.subr.mxu0 0.0
    %150 = vmatpush1.msra.mxu0 0.0
    %151 = vmatprep.subr.mxu0 0.0
    %152 = vmatpush1.msra.mxu0 0.0
    %153 = vmatprep.subr.mxu0 0.0
    %154 = vmatpush1.msra.mxu0 0.0
    %155 = vmatprep.subr.mxu0 0.0
    %156 = vmatpush1.msra.mxu0 0.0
    %157 = vmatprep.subr.mxu0 0.0
    %158 = vmatpush1.msra.mxu0 0.0
    %159 = vmatprep.subr.mxu0 0.0
    %160 = vmatpush1.msra.mxu0 0.0
    %161 = vmatprep.subr.mxu0 0.0
    %162 = vmatpush1.msra.mxu0 0.0
    %163 = vmatprep.subr.mxu0 0.0
    %164 = vmatpush1.msra.mxu0 0.0
    %165 = vmatprep.subr.mxu0 0.0
    %166 = vmatpush1.msra.mxu0 0.0
    %167 = vmatprep.subr.mxu0 0.0
    %168 = vmatpush1.msra.mxu0 0.0
    %169 = vmatprep.subr.mxu0 0.0
    %170 = vmatpush1.msra.mxu0 0.0
    %171 = vmatprep.subr.mxu0 0.0
    %172 = vmatpush1.msra.mxu0 0.0
    %173 = vmatprep.subr.mxu0 0.0
    %174 = vmatpush1.msra.mxu0 0.0
    %175 = vmatprep.subr.mxu0 0.0
    %176 = vmatpush1.msra.mxu0 0.0
    %177 = vmatprep.subr.mxu0 0.0
    %178 = vmatpush1.msra.mxu0 0.0
    %179 = vmatprep.subr.mxu0 0.0
    %180 = vmatpush1.msra.mxu0 0.0
    %181 = vmatprep.mubr.f32.mxu0 0.0
    %182 = vmatmul.mubr.f32.gmra.mrb[0].mxu0 %v94
    %v183 = vpop.f32.mrb[0].mxu0
    %v184 = vadd.f32 %v90, %v183
    %v185 = vpop.f32.mrb[0].mxu0
    %186 = vmatprep.mubr.f32.mxu0 0.0
    %187 = vmatmul.mubr.f32.gmra.mrb[0].mxu0 %v97
    %v188 = vpop.f32.mrb[0].mxu0
    %v189 = vadd.f32 %v90, %v188
    %v190 = vpop.f32.mrb[0].mxu0
    %191 = vmatprep.mubr.f32.mxu0 0.0
    %192 = vmatmul.mubr.f32.gmra.mrb[0].mxu0 %v100
    %v193 = vpop.f32.mrb[0].mxu0
    %v194 = vadd.f32 %v90, %v193
    %v195 = vpop.f32.mrb[0].mxu0
    %196 = vmatprep.mubr.f32.mxu0 0.0
    %197 = vmatmul.mubr.f32.gmra.mrb[0].mxu0 %v103
    %v198 = vpop.f32.mrb[0].mxu0
    %v199 = vadd.f32 %v90, %v198
    %v200 = vpop.f32.mrb[0].mxu0
    %201 = vmatprep.mubr.f32.mxu0 0.0
    %202 = vmatmul.mubr.f32.gmra.mrb[0].mxu0 %v106
    %v203 = vpop.f32.mrb[0].mxu0
    %v204 = vadd.f32 %v90, %v203
    %v205 = vpop.f32.mrb[0].mxu0
    %206 = vmatprep.mubr.f32.mxu0 0.0
    %207 = vmatmul.mubr.f32.gmra.mrb[0].mxu0 %v109
    %v208 = vpop.f32.mrb[0].mxu0
    %v209 = vadd.f32 %v90, %v208
    %v210 = vpop.f32.mrb[0].mxu0
    %211 = vmatprep.mubr.f32.mxu0 0.0
    %212 = vmatmul.mubr.f32.gmra.mrb[0].mxu0 %v112
    %v213 = vpop.f32.mrb[0].mxu0
    %v214 = vadd.f32 %v90, %v213
    %v215 = vpop.f32.mrb[0].mxu0
    %216 = vmatprep.mubr.f32.mxu0 0.0
    %217 = vmatmul.mubr.f32.gmra.mrb[0].mxu0 %v115
    %v218 = vpop.f32.mrb[0].mxu0
    %v219 = vadd.f32 %v90, %v218
    %v220 = vpop.f32.mrb[0].mxu0
    %221 = vdwg.mxu0
    %222 = vst [vmem:[#allocation2] sm:$0xff] %v184
    %223 = vst [vmem:[#allocation2 + $0x8] sm:$0xff] %v189
    %224 = vst [vmem:[#allocation2 + $0x10] sm:$0xff] %v194
    %225 = vst [vmem:[#allocation2 + $0x18] sm:$0xff] %v199
    %226 = vst [vmem:[#allocation2 + $0x20] sm:$0xff] %v204
    %227 = vst [vmem:[#allocation2 + $0x28] sm:$0xff] %v209
    %228 = vst [vmem:[#allocation2 + $0x30] sm:$0xff] %v214
    %229 = vst [vmem:[#allocation2 + $0x38] sm:$0xff] %v219
    %v230 = vld [vmem:[#allocation5] sm:$0xff]
    %v231 = vld [vmem:[#allocation5 + $0x8] sm:$0xff]
    %v232 = vld [vmem:[#allocation5 + $0x10] sm:$0xff]
    %v233 = vld [vmem:[#allocation5 + $0x18] sm:$0xff]
    %v234 = vld [vmem:[#allocation2] sm:$0xff]
    %v235 = vld [vmem:[#allocation2 + $0x38] sm:$0xff]
    %v236 = vsel %vm56, %v235, %v234
    %v238 = vsel %vm92, 0.0, 0
    %240 = vmatprep.subr.mxu0 0.0
    %241 = vmatpush1.msra.mxu0 %v230
    %242 = vmatprep.subr.mxu0 0.0
    %243 = vmatpush1.msra.mxu0 %v231
    %244 = vmatprep.subr.mxu0 0.0
    %245 = vmatpush1.msra.mxu0 %v232
    %246 = vmatprep.subr.mxu0 0.0
    %247 = vmatpush1.msra.mxu0 %v233
    %248 = vmatprep.subr.mxu0 0.0
    %249 = vmatpush1.msra.mxu0 0.0
    %250 = vmatprep.subr.mxu0 0.0
    %251 = vmatpush1.msra.mxu0 0.0
    %252 = vmatprep.subr.mxu0 0.0
    %253 = vmatpush1.msra.mxu0 0.0
    %254 = vmatprep.subr.mxu0 0.0
    %255 = vmatpush1.msra.mxu0 0.0
    %256 = vmatprep.subr.mxu0 0.0
    %257 = vmatpush1.msra.mxu0 0.0
    %258 = vmatprep.subr.mxu0 0.0
    %259 = vmatpush1.msra.mxu0 0.0
    %260 = vmatprep.subr.mxu0 0.0
    %261 = vmatpush1.msra.mxu0 0.0
    %262 = vmatprep.subr.mxu0 0.0
    %263 = vmatpush1.msra.mxu0 0.0
    %264 = vmatprep.subr.mxu0 0.0
    %265 = vmatpush1.msra.mxu0 0.0
    %266 = vmatprep.subr.mxu0 0.0
    %267 = vmatpush1.msra.mxu0 0.0
    %268 = vmatprep.subr.mxu0 0.0
    %269 = vmatpush1.msra.mxu0 0.0
    %270 = vmatprep.subr.mxu0 0.0
    %271 = vmatpush1.msra.mxu0 0.0
    %272 = vmatprep.subr.mxu0 0.0
    %273 = vmatpush1.msra.mxu0 0.0
    %274 = vmatprep.subr.mxu0 0.0
    %275 = vmatpush1.msra.mxu0 0.0
    %276 = vmatprep.subr.mxu0 0.0
    %277 = vmatpush1.msra.mxu0 0.0
    %278 = vmatprep.subr.mxu0 0.0
    %279 = vmatpush1.msra.mxu0 0.0
    %280 = vmatprep.subr.mxu0 0.0
    %281 = vmatpush1.msra.mxu0 0.0
    %282 = vmatprep.subr.mxu0 0.0
    %283 = vmatpush1.msra.mxu0 0.0
    %284 = vmatprep.subr.mxu0 0.0
    %285 = vmatpush1.msra.mxu0 0.0
    %286 = vmatprep.subr.mxu0 0.0
    %287 = vmatpush1.msra.mxu0 0.0
    %288 = vmatprep.subr.mxu0 0.0
    %289 = vmatpush1.msra.mxu0 0.0
    %290 = vmatprep.subr.mxu0 0.0
    %291 = vmatpush1.msra.mxu0 0.0
    %292 = vmatprep.subr.mxu0 0.0
    %293 = vmatpush1.msra.mxu0 0.0
    %294 = vmatprep.subr.mxu0 0.0
    %295 = vmatpush1.msra.mxu0 0.0
    %296 = vmatprep.subr.mxu0 0.0
    %297 = vmatpush1.msra.mxu0 0.0
    %298 = vmatprep.subr.mxu0 0.0
    %299 = vmatpush1.msra.mxu0 0.0
    %300 = vmatprep.subr.mxu0 0.0
    %301 = vmatpush1.msra.mxu0 0.0
    %302 = vmatprep.subr.mxu0 0.0
    %303 = vmatpush1.msra.mxu0 0.0
    %304 = vmatprep.mubr.f32.mxu0 0.0
    %305 = vmatmul.mubr.f32.gmra.mrb[0].mxu0 %v238
    %v306 = vpop.f32.mrb[0].mxu0
    %v307 = vadd.f32 %v236, %v306
    %v308 = vpop.f32.mrb[0].mxu0
    %309 = vdwg.mxu0
    %v310 = vtanh.pop %v307
    %v311 = vxor.u32 %v307, 2147483648
    %v312 = vmul.f32 %v311, 1.442695
    %v313 = vpow.pop %v312
    %v314 = vadd.f32 %v313, 1.0
    %v315 = vrcp.pop %v314
    %v316 = vmul.f32 1.0, %v315
    %v317 = vsel %vm64, %v310, %v316
    %v318 = vmul.f32 %v317, 0.0
    %320 = vrot.lane.b32.xlu0 %v317, 64
    %v321 = vpop.permute.xlu0 %320
    %v323 = vmul.f32 %v317, %v321
    %325 = vrot.lane.b32.xlu0 %v323, 32
    %v326 = vpop.permute.xlu0 %325
    %v328 = vadd.f32 %v318, %v326
    %v329 = vtanh.pop %v328
    %331 = vrot.lane.b32.xlu0 %v329, 64
    %v332 = vpop.permute.xlu0 %331
    %v334 = vmul.f32 %v317, %v332
    %v335 = vld [vmem:[#allocation2 + $0x8] sm:$0xff]
    %v336 = vld [vmem:[#allocation2 + $0x30] sm:$0xff]
    %v337 = vsel %vm56, %v336, %v335
    %339 = vrot.lane.b32.xlu0 %v334, 32
    %v340 = vpop.permute.xlu0 %339
    %v341 = vsel %vm92, %v340, 0
    %343 = vmatprep.subr.mxu0 0.0
    %344 = vmatpush1.msra.mxu0 %v230
    %345 = vmatprep.subr.mxu0 0.0
    %346 = vmatpush1.msra.mxu0 %v231
    %347 = vmatprep.subr.mxu0 0.0
    %348 = vmatpush1.msra.mxu0 %v232
    %349 = vmatprep.subr.mxu0 0.0
    %350 = vmatpush1.msra.mxu0 %v233
    %351 = vmatprep.subr.mxu0 0.0
    %352 = vmatpush1.msra.mxu0 0.0
    %353 = vmatprep.subr.mxu0 0.0
    %354 = vmatpush1.msra.mxu0 0.0
    %355 = vmatprep.subr.mxu0 0.0
    %356 = vmatpush1.msra.mxu0 0.0
    %357 = vmatprep.subr.mxu0 0.0
    %358 = vmatpush1.msra.mxu0 0.0
    %359 = vmatprep.subr.mxu0 0.0
    %360 = vmatpush1.msra.mxu0 0.0
    %361 = vmatprep.subr.mxu0 0.0
    %362 = vmatpush1.msra.mxu0 0.0
    %363 = vmatprep.subr.mxu0 0.0
    %364 = vmatpush1.msra.mxu0 0.0
    %365 = vmatprep.subr.mxu0 0.0
    %366 = vmatpush1.msra.mxu0 0.0
    %367 = vmatprep.subr.mxu0 0.0
    %368 = vmatpush1.msra.mxu0 0.0
    %369 = vmatprep.subr.mxu0 0.0
    %370 = vmatpush1.msra.mxu0 0.0
    %371 = vmatprep.subr.mxu0 0.0
    %372 = vmatpush1.msra.mxu0 0.0
    %373 = vmatprep.subr.mxu0 0.0
    %374 = vmatpush1.msra.mxu0 0.0
    %375 = vmatprep.subr.mxu0 0.0
    %376 = vmatpush1.msra.mxu0 0.0
    %377 = vmatprep.subr.mxu0 0.0
    %378 = vmatpush1.msra.mxu0 0.0
    %379 = vmatprep.subr.mxu0 0.0
    %380 = vmatpush1.msra.mxu0 0.0
    %381 = vmatprep.subr.mxu0 0.0
    %382 = vmatpush1.msra.mxu0 0.0
    %383 = vmatprep.subr.mxu0 0.0
    %384 = vmatpush1.msra.mxu0 0.0
    %385 = vmatprep.subr.mxu0 0.0
    %386 = vmatpush1.msra.mxu0 0.0
    %387 = vmatprep.subr.mxu0 0.0
    %388 = vmatpush1.msra.mxu0 0.0
    %389 = vmatprep.subr.mxu0 0.0
    %390 = vmatpush1.msra.mxu0 0.0
    %391 = vmatprep.subr.mxu0 0.0
    %392 = vmatpush1.msra.mxu0 0.0
    %393 = vmatprep.subr.mxu0 0.0
    %394 = vmatpush1.msra.mxu0 0.0
    %395 = vmatprep.subr.mxu0 0.0
    %396 = vmatpush1.msra.mxu0 0.0
    %397 = vmatprep.subr.mxu0 0.0
    %398 = vmatpush1.msra.mxu0 0.0
    %399 = vmatprep.subr.mxu0 0.0
    %400 = vmatpush1.msra.mxu0 0.0
    %401 = vmatprep.subr.mxu0 0.0
    %402 = vmatpush1.msra.mxu0 0.0
    %403 = vmatprep.subr.mxu0 0.0
    %404 = vmatpush1.msra.mxu0 0.0
    %405 = vmatprep.subr.mxu0 0.0
    %406 = vmatpush1.msra.mxu0 0.0
    %407 = vmatprep.mubr.f32.mxu0 0.0
    %408 = vmatmul.mubr.f32.gmra.mrb[0].mxu0 %v341
    %v409 = vpop.f32.mrb[0].mxu0
    %v410 = vadd.f32 %v337, %v409
    %v411 = vpop.f32.mrb[0].mxu0
    %412 = vdwg.mxu0
    %v413 = vtanh.pop %v410
    %v414 = vxor.u32 %v410, 2147483648
    %v415 = vmul.f32 %v414, 1.442695
    %v416 = vpow.pop %v415
    %v417 = vadd.f32 %v416, 1.0
    %v418 = vrcp.pop %v417
    %v419 = vmul.f32 1.0, %v418
    %v420 = vsel %vm64, %v413, %v419
    %v421 = vmul.f32 %v420, %v328
    %423 = vrot.lane.b32.xlu0 %v420, 64
    %v424 = vpop.permute.xlu0 %423
    %v426 = vmul.f32 %v420, %v424
    %428 = vrot.lane.b32.xlu0 %v426, 32
    %v429 = vpop.permute.xlu0 %428
    %v431 = vadd.f32 %v421, %v429
    %v432 = vtanh.pop %v431
    %434 = vrot.lane.b32.xlu0 %v432, 64
    %v435 = vpop.permute.xlu0 %434
    %v437 = vmul.f32 %v420, %v435
    %v438 = vld [vmem:[#allocation2 + $0x10] sm:$0xff]
    %v439 = vld [vmem:[#allocation2 + $0x28] sm:$0xff]
    %v440 = vsel %vm56, %v439, %v438
    %442 = vrot.lane.b32.xlu0 %v437, 32
    %v443 = vpop.permute.xlu0 %442
    %v444 = vsel %vm92, %v443, 0
    %446 = vmatprep.subr.mxu0 0.0
    %447 = vmatpush1.msra.mxu0 %v230
    %448 = vmatprep.subr.mxu0 0.0
    %449 = vmatpush1.msra.mxu0 %v231
    %450 = vmatprep.subr.mxu0 0.0
    %451 = vmatpush1.msra.mxu0 %v232
    %452 = vmatprep.subr.mxu0 0.0
    %453 = vmatpush1.msra.mxu0 %v233
    %454 = vmatprep.subr.mxu0 0.0
    %455 = vmatpush1.msra.mxu0 0.0
    %456 = vmatprep.subr.mxu0 0.0
    %457 = vmatpush1.msra.mxu0 0.0
    %458 = vmatprep.subr.mxu0 0.0
    %459 = vmatpush1.msra.mxu0 0.0
    %460 = vmatprep.subr.mxu0 0.0
    %461 = vmatpush1.msra.mxu0 0.0
    %462 = vmatprep.subr.mxu0 0.0
    %463 = vmatpush1.msra.mxu0 0.0
    %464 = vmatprep.subr.mxu0 0.0
    %465 = vmatpush1.msra.mxu0 0.0
    %466 = vmatprep.subr.mxu0 0.0
    %467 = vmatpush1.msra.mxu0 0.0
    %468 = vmatprep.subr.mxu0 0.0
    %469 = vmatpush1.msra.mxu0 0.0
    %470 = vmatprep.subr.mxu0 0.0
    %471 = vmatpush1.msra.mxu0 0.0
    %472 = vmatprep.subr.mxu0 0.0
    %473 = vmatpush1.msra.mxu0 0.0
    %474 = vmatprep.subr.mxu0 0.0
    %475 = vmatpush1.msra.mxu0 0.0
    %476 = vmatprep.subr.mxu0 0.0
    %477 = vmatpush1.msra.mxu0 0.0
    %478 = vmatprep.subr.mxu0 0.0
    %479 = vmatpush1.msra.mxu0 0.0
    %480 = vmatprep.subr.mxu0 0.0
    %481 = vmatpush1.msra.mxu0 0.0
    %482 = vmatprep.subr.mxu0 0.0
    %483 = vmatpush1.msra.mxu0 0.0
    %484 = vmatprep.subr.mxu0 0.0
    %485 = vmatpush1.msra.mxu0 0.0
    %486 = vmatprep.subr.mxu0 0.0
    %487 = vmatpush1.msra.mxu0 0.0
    %488 = vmatprep.subr.mxu0 0.0
    %489 = vmatpush1.msra.mxu0 0.0
    %490 = vmatprep.subr.mxu0 0.0
    %491 = vmatpush1.msra.mxu0 0.0
    %492 = vmatprep.subr.mxu0 0.0
    %493 = vmatpush1.msra.mxu0 0.0
    %494 = vmatprep.subr.mxu0 0.0
    %495 = vmatpush1.msra.mxu0 0.0
    %496 = vmatprep.subr.mxu0 0.0
    %497 = vmatpush1.msra.mxu0 0.0
    %498 = vmatprep.subr.mxu0 0.0
    %499 = vmatpush1.msra.mxu0 0.0
    %500 = vmatprep.subr.mxu0 0.0
    %501 = vmatpush1.msra.mxu0 0.0
    %502 = vmatprep.subr.mxu0 0.0
    %503 = vmatpush1.msra.mxu0 0.0
    %504 = vmatprep.subr.mxu0 0.0
    %505 = vmatpush1.msra.mxu0 0.0
    %506 = vmatprep.subr.mxu0 0.0
    %507 = vmatpush1.msra.mxu0 0.0
    %508 = vmatprep.subr.mxu0 0.0
    %509 = vmatpush1.msra.mxu0 0.0
    %510 = vmatprep.mubr.f32.mxu0 0.0
    %511 = vmatmul.mubr.f32.gmra.mrb[0].mxu0 %v444
    %v512 = vpop.f32.mrb[0].mxu0
    %v513 = vadd.f32 %v440, %v512
    %v514 = vpop.f32.mrb[0].mxu0
    %515 = vdwg.mxu0
    %v516 = vtanh.pop %v513
    %v517 = vxor.u32 %v513, 2147483648
    %v518 = vmul.f32 %v517, 1.442695
    %v519 = vpow.pop %v518
    %v520 = vadd.f32 %v519, 1.0
    %v521 = vrcp.pop %v520
    %v522 = vmul.f32 1.0, %v521
    %v523 = vsel %vm64, %v516, %v522
    %v524 = vmul.f32 %v523, %v431
    %526 = vrot.lane.b32.xlu0 %v523, 64
    %v527 = vpop.permute.xlu0 %526
    %v529 = vmul.f32 %v523, %v527
    %531 = vrot.lane.b32.xlu0 %v529, 32
    %v532 = vpop.permute.xlu0 %531
    %v534 = vadd.f32 %v524, %v532
    %v535 = vtanh.pop %v534
    %537 = vrot.lane.b32.xlu0 %v535, 64
    %v538 = vpop.permute.xlu0 %537
    %v540 = vmul.f32 %v523, %v538
    %v541 = vld [vmem:[#allocation2 + $0x18] sm:$0xff]
    %v542 = vld [vmem:[#allocation2 + $0x20] sm:$0xff]
    %v543 = vsel %vm56, %v542, %v541
    %545 = vrot.lane.b32.xlu0 %v540, 32
    %v546 = vpop.permute.xlu0 %545
    %v547 = vsel %vm92, %v546, 0
    %549 = vmatprep.subr.mxu0 0.0
    %550 = vmatpush1.msra.mxu0 %v230
    %551 = vmatprep.subr.mxu0 0.0
    %552 = vmatpush1.msra.mxu0 %v231
    %553 = vmatprep.subr.mxu0 0.0
    %554 = vmatpush1.msra.mxu0 %v232
    %555 = vmatprep.subr.mxu0 0.0
    %556 = vmatpush1.msra.mxu0 %v233
    %557 = vmatprep.subr.mxu0 0.0
    %558 = vmatpush1.msra.mxu0 0.0
    %559 = vmatprep.subr.mxu0 0.0
    %560 = vmatpush1.msra.mxu0 0.0
    %561 = vmatprep.subr.mxu0 0.0
    %562 = vmatpush1.msra.mxu0 0.0
    %563 = vmatprep.subr.mxu0 0.0
    %564 = vmatpush1.msra.mxu0 0.0
    %565 = vmatprep.subr.mxu0 0.0
    %566 = vmatpush1.msra.mxu0 0.0
    %567 = vmatprep.subr.mxu0 0.0
    %568 = vmatpush1.msra.mxu0 0.0
    %569 = vmatprep.subr.mxu0 0.0
    %570 = vmatpush1.msra.mxu0 0.0
    %571 = vmatprep.subr.mxu0 0.0
    %572 = vmatpush1.msra.mxu0 0.0
    %573 = vmatprep.subr.mxu0 0.0
    %574 = vmatpush1.msra.mxu0 0.0
    %575 = vmatprep.subr.mxu0 0.0
    %576 = vmatpush1.msra.mxu0 0.0
    %577 = vmatprep.subr.mxu0 0.0
    %578 = vmatpush1.msra.mxu0 0.0
    %579 = vmatprep.subr.mxu0 0.0
    %580 = vmatpush1.msra.mxu0 0.0
    %581 = vmatprep.subr.mxu0 0.0
    %582 = vmatpush1.msra.mxu0 0.0
    %583 = vmatprep.subr.mxu0 0.0
    %584 = vmatpush1.msra.mxu0 0.0
    %585 = vmatprep.subr.mxu0 0.0
    %586 = vmatpush1.msra.mxu0 0.0
    %587 = vmatprep.subr.mxu0 0.0
    %588 = vmatpush1.msra.mxu0 0.0
    %589 = vmatprep.subr.mxu0 0.0
    %590 = vmatpush1.msra.mxu0 0.0
    %591 = vmatprep.subr.mxu0 0.0
    %592 = vmatpush1.msra.mxu0 0.0
    %593 = vmatprep.subr.mxu0 0.0
    %594 = vmatpush1.msra.mxu0 0.0
    %595 = vmatprep.subr.mxu0 0.0
    %596 = vmatpush1.msra.mxu0 0.0
    %597 = vmatprep.subr.mxu0 0.0
    %598 = vmatpush1.msra.mxu0 0.0
    %599 = vmatprep.subr.mxu0 0.0
    %600 = vmatpush1.msra.mxu0 0.0
    %601 = vmatprep.subr.mxu0 0.0
    %602 = vmatpush1.msra.mxu0 0.0
    %603 = vmatprep.subr.mxu0 0.0
    %604 = vmatpush1.msra.mxu0 0.0
    %605 = vmatprep.subr.mxu0 0.0
    %606 = vmatpush1.msra.mxu0 0.0
    %607 = vmatprep.subr.mxu0 0.0
    %608 = vmatpush1.msra.mxu0 0.0
    %609 = vmatprep.subr.mxu0 0.0
    %610 = vmatpush1.msra.mxu0 0.0
    %611 = vmatprep.subr.mxu0 0.0
    %612 = vmatpush1.msra.mxu0 0.0
    %613 = vmatprep.mubr.f32.mxu0 0.0
    %614 = vmatmul.mubr.f32.gmra.mrb[0].mxu0 %v547
    %v615 = vpop.f32.mrb[0].mxu0
    %v616 = vadd.f32 %v543, %v615
    %v617 = vpop.f32.mrb[0].mxu0
    %618 = vdwg.mxu0
    %v619 = vtanh.pop %v616
    %v620 = vxor.u32 %v616, 2147483648
    %v621 = vmul.f32 %v620, 1.442695
    %v622 = vpow.pop %v621
    %v623 = vadd.f32 %v622, 1.0
    %v624 = vrcp.pop %v623
    %v625 = vmul.f32 1.0, %v624
    %v626 = vsel %vm64, %v619, %v625
    %v627 = vmul.f32 %v626, %v534
    %629 = vrot.lane.b32.xlu0 %v626, 64
    %v630 = vpop.permute.xlu0 %629
    %v632 = vmul.f32 %v626, %v630
    %634 = vrot.lane.b32.xlu0 %v632, 32
    %v635 = vpop.permute.xlu0 %634
    %v637 = vadd.f32 %v627, %v635
    %v638 = vtanh.pop %v637
    %640 = vrot.lane.b32.xlu0 %v638, 64
    %v641 = vpop.permute.xlu0 %640
    %v643 = vmul.f32 %v626, %v641
    %v644 = vsel %vm56, %v541, %v542
    %646 = vrot.lane.b32.xlu0 %v643, 32
    %v647 = vpop.permute.xlu0 %646
    %v648 = vsel %vm92, %v647, 0
    %650 = vmatprep.subr.mxu0 0.0
    %651 = vmatpush1.msra.mxu0 %v230
    %652 = vmatprep.subr.mxu0 0.0
    %653 = vmatpush1.msra.mxu0 %v231
    %654 = vmatprep.subr.mxu0 0.0
    %655 = vmatpush1.msra.mxu0 %v232
    %656 = vmatprep.subr.mxu0 0.0
    %657 = vmatpush1.msra.mxu0 %v233
    %658 = vmatprep.subr.mxu0 0.0
    %659 = vmatpush1.msra.mxu0 0.0
    %660 = vmatprep.subr.mxu0 0.0
    %661 = vmatpush1.msra.mxu0 0.0
    %662 = vmatprep.subr.mxu0 0.0
    %663 = vmatpush1.msra.mxu0 0.0
    %664 = vmatprep.subr.mxu0 0.0
    %665 = vmatpush1.msra.mxu0 0.0
    %666 = vmatprep.subr.mxu0 0.0
    %667 = vmatpush1.msra.mxu0 0.0
    %668 = vmatprep.subr.mxu0 0.0
    %669 = vmatpush1.msra.mxu0 0.0
    %670 = vmatprep.subr.mxu0 0.0
    %671 = vmatpush1.msra.mxu0 0.0
    %672 = vmatprep.subr.mxu0 0.0
    %673 = vmatpush1.msra.mxu0 0.0
    %674 = vmatprep.subr.mxu0 0.0
    %675 = vmatpush1.msra.mxu0 0.0
    %676 = vmatprep.subr.mxu0 0.0
    %677 = vmatpush1.msra.mxu0 0.0
    %678 = vmatprep.subr.mxu0 0.0
    %679 = vmatpush1.msra.mxu0 0.0
    %680 = vmatprep.subr.mxu0 0.0
    %681 = vmatpush1.msra.mxu0 0.0
    %682 = vmatprep.subr.mxu0 0.0
    %683 = vmatpush1.msra.mxu0 0.0
    %684 = vmatprep.subr.mxu0 0.0
    %685 = vmatpush1.msra.mxu0 0.0
    %686 = vmatprep.subr.mxu0 0.0
    %687 = vmatpush1.msra.mxu0 0.0
    %688 = vmatprep.subr.mxu0 0.0
    %689 = vmatpush1.msra.mxu0 0.0
    %690 = vmatprep.subr.mxu0 0.0
    %691 = vmatpush1.msra.mxu0 0.0
    %692 = vmatprep.subr.mxu0 0.0
    %693 = vmatpush1.msra.mxu0 0.0
    %694 = vmatprep.subr.mxu0 0.0
    %695 = vmatpush1.msra.mxu0 0.0
    %696 = vmatprep.subr.mxu0 0.0
    %697 = vmatpush1.msra.mxu0 0.0
    %698 = vmatprep.subr.mxu0 0.0
    %699 = vmatpush1.msra.mxu0 0.0
    %700 = vmatprep.subr.mxu0 0.0
    %701 = vmatpush1.msra.mxu0 0.0
    %702 = vmatprep.subr.mxu0 0.0
    %703 = vmatpush1.msra.mxu0 0.0
    %704 = vmatprep.subr.mxu0 0.0
    %705 = vmatpush1.msra.mxu0 0.0
    %706 = vmatprep.subr.mxu0 0.0
    %707 = vmatpush1.msra.mxu0 0.0
    %708 = vmatprep.subr.mxu0 0.0
    %709 = vmatpush1.msra.mxu0 0.0
    %710 = vmatprep.subr.mxu0 0.0
    %711 = vmatpush1.msra.mxu0 0.0
    %712 = vmatprep.subr.mxu0 0.0
    %713 = vmatpush1.msra.mxu0 0.0
    %714 = vmatprep.mubr.f32.mxu0 0.0
    %715 = vmatmul.mubr.f32.gmra.mrb[0].mxu0 %v648
    %v716 = vpop.f32.mrb[0].mxu0
    %v717 = vadd.f32 %v644, %v716
    %v718 = vpop.f32.mrb[0].mxu0
    %719 = vdwg.mxu0
    %v720 = vtanh.pop %v717
    %v721 = vxor.u32 %v717, 2147483648
    %v722 = vmul.f32 %v721, 1.442695
    %v723 = vpow.pop %v722
    %v724 = vadd.f32 %v723, 1.0
    %v725 = vrcp.pop %v724
    %v726 = vmul.f32 1.0, %v725
    %v727 = vsel %vm64, %v720, %v726
    %v728 = vmul.f32 %v727, %v637
    %730 = vrot.lane.b32.xlu0 %v727, 64
    %v731 = vpop.permute.xlu0 %730
    %v733 = vmul.f32 %v727, %v731
    %735 = vrot.lane.b32.xlu0 %v733, 32
    %v736 = vpop.permute.xlu0 %735
    %v738 = vadd.f32 %v728, %v736
    %v739 = vtanh.pop %v738
    %741 = vrot.lane.b32.xlu0 %v739, 64
    %v742 = vpop.permute.xlu0 %741
    %v744 = vmul.f32 %v727, %v742
    %v745 = vsel %vm56, %v438, %v439
    %747 = vrot.lane.b32.xlu0 %v744, 32
    %v748 = vpop.permute.xlu0 %747
    %v749 = vsel %vm92, %v748, 0
    %751 = vmatprep.subr.mxu0 0.0
    %752 = vmatpush1.msra.mxu0 %v230
    %753 = vmatprep.subr.mxu0 0.0
    %754 = vmatpush1.msra.mxu0 %v231
    %755 = vmatprep.subr.mxu0 0.0
    %756 = vmatpush1.msra.mxu0 %v232
    %757 = vmatprep.subr.mxu0 0.0
    %758 = vmatpush1.msra.mxu0 %v233
    %759 = vmatprep.subr.mxu0 0.0
    %760 = vmatpush1.msra.mxu0 0.0
    %761 = vmatprep.subr.mxu0 0.0
    %762 = vmatpush1.msra.mxu0 0.0
    %763 = vmatprep.subr.mxu0 0.0
    %764 = vmatpush1.msra.mxu0 0.0
    %765 = vmatprep.subr.mxu0 0.0
    %766 = vmatpush1.msra.mxu0 0.0
    %767 = vmatprep.subr.mxu0 0.0
    %768 = vmatpush1.msra.mxu0 0.0
    %769 = vmatprep.subr.mxu0 0.0
    %770 = vmatpush1.msra.mxu0 0.0
    %771 = vmatprep.subr.mxu0 0.0
    %772 = vmatpush1.msra.mxu0 0.0
    %773 = vmatprep.subr.mxu0 0.0
    %774 = vmatpush1.msra.mxu0 0.0
    %775 = vmatprep.subr.mxu0 0.0
    %776 = vmatpush1.msra.mxu0 0.0
    %777 = vmatprep.subr.mxu0 0.0
    %778 = vmatpush1.msra.mxu0 0.0
    %779 = vmatprep.subr.mxu0 0.0
    %780 = vmatpush1.msra.mxu0 0.0
    %781 = vmatprep.subr.mxu0 0.0
    %782 = vmatpush1.msra.mxu0 0.0
    %783 = vmatprep.subr.mxu0 0.0
    %784 = vmatpush1.msra.mxu0 0.0
    %785 = vmatprep.subr.mxu0 0.0
    %786 = vmatpush1.msra.mxu0 0.0
    %787 = vmatprep.subr.mxu0 0.0
    %788 = vmatpush1.msra.mxu0 0.0
    %789 = vmatprep.subr.mxu0 0.0
    %790 = vmatpush1.msra.mxu0 0.0
    %791 = vmatprep.subr.mxu0 0.0
    %792 = vmatpush1.msra.mxu0 0.0
    %793 = vmatprep.subr.mxu0 0.0
    %794 = vmatpush1.msra.mxu0 0.0
    %795 = vmatprep.subr.mxu0 0.0
    %796 = vmatpush1.msra.mxu0 0.0
    %797 = vmatprep.subr.mxu0 0.0
    %798 = vmatpush1.msra.mxu0 0.0
    %799 = vmatprep.subr.mxu0 0.0
    %800 = vmatpush1.msra.mxu0 0.0
    %801 = vmatprep.subr.mxu0 0.0
    %802 = vmatpush1.msra.mxu0 0.0
    %803 = vmatprep.subr.mxu0 0.0
    %804 = vmatpush1.msra.mxu0 0.0
    %805 = vmatprep.subr.mxu0 0.0
    %806 = vmatpush1.msra.mxu0 0.0
    %807 = vmatprep.subr.mxu0 0.0
    %808 = vmatpush1.msra.mxu0 0.0
    %809 = vmatprep.subr.mxu0 0.0
    %810 = vmatpush1.msra.mxu0 0.0
    %811 = vmatprep.subr.mxu0 0.0
    %812 = vmatpush1.msra.mxu0 0.0
    %813 = vmatprep.subr.mxu0 0.0
    %814 = vmatpush1.msra.mxu0 0.0
    %815 = vmatprep.mubr.f32.mxu0 0.0
    %816 = vmatmul.mubr.f32.gmra.mrb[0].mxu0 %v749
    %v817 = vpop.f32.mrb[0].mxu0
    %v818 = vadd.f32 %v745, %v817
    %v819 = vpop.f32.mrb[0].mxu0
    %820 = vdwg.mxu0
    %v821 = vtanh.pop %v818
    %v822 = vxor.u32 %v818, 2147483648
    %v823 = vmul.f32 %v822, 1.442695
    %v824 = vpow.pop %v823
    %v825 = vadd.f32 %v824, 1.0
    %v826 = vrcp.pop %v825
    %v827 = vmul.f32 1.0, %v826
    %v828 = vsel %vm64, %v821, %v827
    %v829 = vmul.f32 %v828, %v738
    %831 = vrot.lane.b32.xlu0 %v828, 64
    %v832 = vpop.permute.xlu0 %831
    %v834 = vmul.f32 %v828, %v832
    %836 = vrot.lane.b32.xlu0 %v834, 32
    %v837 = vpop.permute.xlu0 %836
    %v839 = vadd.f32 %v829, %v837
    %v840 = vtanh.pop %v839
    %842 = vrot.lane.b32.xlu0 %v840, 64
    %v843 = vpop.permute.xlu0 %842
    %v845 = vmul.f32 %v828, %v843
    %v846 = vsel %vm56, %v335, %v336
    %848 = vrot.lane.b32.xlu0 %v845, 32
    %v849 = vpop.permute.xlu0 %848
    %v850 = vsel %vm92, %v849, 0
    %852 = vmatprep.subr.mxu0 0.0
    %853 = vmatpush1.msra.mxu0 %v230
    %854 = vmatprep.subr.mxu0 0.0
    %855 = vmatpush1.msra.mxu0 %v231
    %856 = vmatprep.subr.mxu0 0.0
    %857 = vmatpush1.msra.mxu0 %v232
    %858 = vmatprep.subr.mxu0 0.0
    %859 = vmatpush1.msra.mxu0 %v233
    %860 = vmatprep.subr.mxu0 0.0
    %861 = vmatpush1.msra.mxu0 0.0
    %862 = vmatprep.subr.mxu0 0.0
    %863 = vmatpush1.msra.mxu0 0.0
    %864 = vmatprep.subr.mxu0 0.0
    %865 = vmatpush1.msra.mxu0 0.0
    %866 = vmatprep.subr.mxu0 0.0
    %867 = vmatpush1.msra.mxu0 0.0
    %868 = vmatprep.subr.mxu0 0.0
    %869 = vmatpush1.msra.mxu0 0.0
    %870 = vmatprep.subr.mxu0 0.0
    %871 = vmatpush1.msra.mxu0 0.0
    %872 = vmatprep.subr.mxu0 0.0
    %873 = vmatpush1.msra.mxu0 0.0
    %874 = vmatprep.subr.mxu0 0.0
    %875 = vmatpush1.msra.mxu0 0.0
    %876 = vmatprep.subr.mxu0 0.0
    %877 = vmatpush1.msra.mxu0 0.0
    %878 = vmatprep.subr.mxu0 0.0
    %879 = vmatpush1.msra.mxu0 0.0
    %880 = vmatprep.subr.mxu0 0.0
    %881 = vmatpush1.msra.mxu0 0.0
    %882 = vmatprep.subr.mxu0 0.0
    %883 = vmatpush1.msra.mxu0 0.0
    %884 = vmatprep.subr.mxu0 0.0
    %885 = vmatpush1.msra.mxu0 0.0
    %886 = vmatprep.subr.mxu0 0.0
    %887 = vmatpush1.msra.mxu0 0.0
    %888 = vmatprep.subr.mxu0 0.0
    %889 = vmatpush1.msra.mxu0 0.0
    %890 = vmatprep.subr.mxu0 0.0
    %891 = vmatpush1.msra.mxu0 0.0
    %892 = vmatprep.subr.mxu0 0.0
    %893 = vmatpush1.msra.mxu0 0.0
    %894 = vmatprep.subr.mxu0 0.0
    %895 = vmatpush1.msra.mxu0 0.0
    %896 = vmatprep.subr.mxu0 0.0
    %897 = vmatpush1.msra.mxu0 0.0
    %898 = vmatprep.subr.mxu0 0.0
    %899 = vmatpush1.msra.mxu0 0.0
    %900 = vmatprep.subr.mxu0 0.0
    %901 = vmatpush1.msra.mxu0 0.0
    %902 = vmatprep.subr.mxu0 0.0
    %903 = vmatpush1.msra.mxu0 0.0
    %904 = vmatprep.subr.mxu0 0.0
    %905 = vmatpush1.msra.mxu0 0.0
    %906 = vmatprep.subr.mxu0 0.0
    %907 = vmatpush1.msra.mxu0 0.0
    %908 = vmatprep.subr.mxu0 0.0
    %909 = vmatpush1.msra.mxu0 0.0
    %910 = vmatprep.subr.mxu0 0.0
    %911 = vmatpush1.msra.mxu0 0.0
    %912 = vmatprep.subr.mxu0 0.0
    %913 = vmatpush1.msra.mxu0 0.0
    %914 = vmatprep.subr.mxu0 0.0
    %915 = vmatpush1.msra.mxu0 0.0
    %916 = vmatprep.mubr.f32.mxu0 0.0
    %917 = vmatmul.mubr.f32.gmra.mrb[0].mxu0 %v850
    %v918 = vpop.f32.mrb[0].mxu0
    %v919 = vadd.f32 %v846, %v918
    %v920 = vpop.f32.mrb[0].mxu0
    %921 = vdwg.mxu0
    %v922 = vtanh.pop %v919
    %v923 = vxor.u32 %v919, 2147483648
    %v924 = vmul.f32 %v923, 1.442695
    %v925 = vpow.pop %v924
    %v926 = vadd.f32 %v925, 1.0
    %v927 = vrcp.pop %v926
    %v928 = vmul.f32 1.0, %v927
    %v929 = vsel %vm64, %v922, %v928
    %v930 = vmul.f32 %v929, %v839
    %932 = vrot.lane.b32.xlu0 %v929, 64
    %v933 = vpop.permute.xlu0 %932
    %v935 = vmul.f32 %v929, %v933
    %937 = vrot.lane.b32.xlu0 %v935, 32
    %v938 = vpop.permute.xlu0 %937
    %v940 = vadd.f32 %v930, %v938
    %v941 = vtanh.pop %v940
    %943 = vrot.lane.b32.xlu0 %v941, 64
    %v944 = vpop.permute.xlu0 %943
    %v946 = vmul.f32 %v929, %v944
    %v947 = vsel %vm56, %v234, %v235
    %949 = vrot.lane.b32.xlu0 %v946, 32
    %v950 = vpop.permute.xlu0 %949
    %v951 = vsel %vm92, %v950, 0
    %953 = vmatprep.subr.mxu0 0.0
    %954 = vmatpush1.msra.mxu0 %v230
    %955 = vmatprep.subr.mxu0 0.0
    %956 = vmatpush1.msra.mxu0 %v231
    %957 = vmatprep.subr.mxu0 0.0
    %958 = vmatpush1.msra.mxu0 %v232
    %959 = vmatprep.subr.mxu0 0.0
    %960 = vmatpush1.msra.mxu0 %v233
    %961 = vmatprep.subr.mxu0 0.0
    %962 = vmatpush1.msra.mxu0 0.0
    %963 = vmatprep.subr.mxu0 0.0
    %964 = vmatpush1.msra.mxu0 0.0
    %965 = vmatprep.subr.mxu0 0.0
    %966 = vmatpush1.msra.mxu0 0.0
    %967 = vmatprep.subr.mxu0 0.0
    %968 = vmatpush1.msra.mxu0 0.0
    %969 = vmatprep.subr.mxu0 0.0
    %970 = vmatpush1.msra.mxu0 0.0
    %971 = vmatprep.subr.mxu0 0.0
    %972 = vmatpush1.msra.mxu0 0.0
    %973 = vmatprep.subr.mxu0 0.0
    %974 = vmatpush1.msra.mxu0 0.0
    %975 = vmatprep.subr.mxu0 0.0
    %976 = vmatpush1.msra.mxu0 0.0
    %977 = vmatprep.subr.mxu0 0.0
    %978 = vmatpush1.msra.mxu0 0.0
    %979 = vmatprep.subr.mxu0 0.0
    %980 = vmatpush1.msra.mxu0 0.0
    %981 = vmatprep.subr.mxu0 0.0
    %982 = vmatpush1.msra.mxu0 0.0
    %983 = vmatprep.subr.mxu0 0.0
    %984 = vmatpush1.msra.mxu0 0.0
    %985 = vmatprep.subr.mxu0 0.0
    %986 = vmatpush1.msra.mxu0 0.0
    %987 = vmatprep.subr.mxu0 0.0
    %988 = vmatpush1.msra.mxu0 0.0
    %989 = vmatprep.subr.mxu0 0.0
    %990 = vmatpush1.msra.mxu0 0.0
    %991 = vmatprep.subr.mxu0 0.0
    %992 = vmatpush1.msra.mxu0 0.0
    %993 = vmatprep.subr.mxu0 0.0
    %994 = vmatpush1.msra.mxu0 0.0
    %995 = vmatprep.subr.mxu0 0.0
    %996 = vmatpush1.msra.mxu0 0.0
    %997 = vmatprep.subr.mxu0 0.0
    %998 = vmatpush1.msra.mxu0 0.0
    %999 = vmatprep.subr.mxu0 0.0
    %1000 = vmatpush1.msra.mxu0 0.0
    %1001 = vmatprep.subr.mxu0 0.0
    %1002 = vmatpush1.msra.mxu0 0.0
    %1003 = vmatprep.subr.mxu0 0.0
    %1004 = vmatpush1.msra.mxu0 0.0
    %1005 = vmatprep.subr.mxu0 0.0
    %1006 = vmatpush1.msra.mxu0 0.0
    %1007 = vmatprep.subr.mxu0 0.0
    %1008 = vmatpush1.msra.mxu0 0.0
    %1009 = vmatprep.subr.mxu0 0.0
    %1010 = vmatpush1.msra.mxu0 0.0
    %1011 = vmatprep.subr.mxu0 0.0
    %1012 = vmatpush1.msra.mxu0 0.0
    %1013 = vmatprep.subr.mxu0 0.0
    %1014 = vmatpush1.msra.mxu0 0.0
    %1015 = vmatprep.subr.mxu0 0.0
    %1016 = vmatpush1.msra.mxu0 0.0
    %1017 = vmatprep.mubr.f32.mxu0 0.0
    %1018 = vmatmul.mubr.f32.gmra.mrb[0].mxu0 %v951
    %v1019 = vpop.f32.mrb[0].mxu0
    %v1020 = vadd.f32 %v947, %v1019
    %v1021 = vpop.f32.mrb[0].mxu0
    %1022 = vdwg.mxu0
    %v1023 = vtanh.pop %v1020
    %v1024 = vxor.u32 %v1020, 2147483648
    %v1025 = vmul.f32 %v1024, 1.442695
    %v1026 = vpow.pop %v1025
    %v1027 = vadd.f32 %v1026, 1.0
    %v1028 = vrcp.pop %v1027
    %v1029 = vmul.f32 1.0, %v1028
    %v1030 = vsel %vm64, %v1023, %v1029
    %v1031 = vmul.f32 %v1030, %v940
    %1033 = vrot.lane.b32.xlu0 %v1030, 64
    %v1034 = vpop.permute.xlu0 %1033
    %v1036 = vmul.f32 %v1030, %v1034
    %1038 = vrot.lane.b32.xlu0 %v1036, 32
    %v1039 = vpop.permute.xlu0 %1038
    %v1041 = vadd.f32 %v1031, %v1039
    %v1042 = vtanh.pop %v1041
    %1044 = vrot.lane.b32.xlu0 %v1042, 64
    %v1045 = vpop.permute.xlu0 %1044
    %v1047 = vmul.f32 %v1030, %v1045
    %1049 = vrot.lane.b32.xlu0 %v1047, 32
    %v1050 = vpop.permute.xlu0 %1049
    %v1053 = vsel %vm72, %v1050, %v340
    %v1056 = vsel %vm72, %v950, %v443
    %v1059 = vsel %vm72, %v849, %v546
    %v1062 = vsel %vm72, %v748, %v647
    %v1063 = vsel %vm72, %v647, %v748
    %v1064 = vsel %vm72, %v546, %v849
    %v1065 = vsel %vm72, %v443, %v950
    %v1066 = vsel %vm72, %v340, %v1050
    %1067 = vst.msk [vmem:[#allocation3] sm:$0xff] %vm92, %v1053
    %1068 = vst.msk [vmem:[#allocation3 + $0x8] sm:$0xff] %vm92, %v1056
    %1069 = vst.msk [vmem:[#allocation3 + $0x10] sm:$0xff] %vm92, %v1059
    %1070 = vst.msk [vmem:[#allocation3 + $0x18] sm:$0xff] %vm92, %v1062
    %1071 = vst.msk [vmem:[#allocation3 + $0x20] sm:$0xff] %vm92, %v1063
    %1072 = vst.msk [vmem:[#allocation3 + $0x28] sm:$0xff] %vm92, %v1064
    %1073 = vst.msk [vmem:[#allocation3 + $0x30] sm:$0xff] %vm92, %v1065
    %1074 = vst.msk [vmem:[#allocation3 + $0x38] sm:$0xff] %vm92, %v1066
    %v1075 = vld [vmem:[#allocation3] sm:$0xff]
    %v1076 = vld [vmem:[#allocation3 + $0x8] sm:$0xff]
    %v1077 = vld [vmem:[#allocation3 + $0x10] sm:$0xff]
    %v1078 = vld [vmem:[#allocation3 + $0x18] sm:$0xff]
    %v1079 = vld [vmem:[#allocation3 + $0x20] sm:$0xff]
    %v1080 = vld [vmem:[#allocation3 + $0x28] sm:$0xff]
    %v1081 = vld [vmem:[#allocation3 + $0x30] sm:$0xff]
    %v1082 = vld [vmem:[#allocation3 + $0x38] sm:$0xff]
    %s1083 = scalar_lea.vmem %s1, 32
    %v1084 = vld [vmem:[%s1083] sm:$0xff]
    %v1085 = vld [vmem:[%s1083 + $0x8] sm:$0xff]
    %v1086 = vld [vmem:[%s1083 + $0x10] sm:$0xff]
    %v1087 = vld [vmem:[%s1083 + $0x18] sm:$0xff]
    %s1088 = scalar_lea.vmem %s3, 1
    %v1089 = vld [vmem:[%s1088] sm:$0x1]
    %v1091 = vlaneseq
    %v1092 = vshrl.u32 %v1091, 7
    %v1093 = vsub.s32 0, %v1092
    %v1094 = vrot.slane %v1089, %v1093
    %v1097 = vsel %vm92, %v1075, 0
    %v1100 = vsel %vm92, %v1076, 0
    %v1103 = vsel %vm92, %v1077, 0
    %v1106 = vsel %vm92, %v1078, 0
    %v1109 = vsel %vm92, %v1079, 0
    %v1112 = vsel %vm92, %v1080, 0
    %v1115 = vsel %vm92, %v1081, 0
    %v1118 = vsel %vm92, %v1082, 0
    %1120 = vmatprep.subr.mxu0 0.0
    %1121 = vmatpush1.msra.mxu0 %v1084
    %1122 = vmatprep.subr.mxu0 0.0
    %1123 = vmatpush1.msra.mxu0 %v1085
    %1124 = vmatprep.subr.mxu0 0.0
    %1125 = vmatpush1.msra.mxu0 %v1086
    %1126 = vmatprep.subr.mxu0 0.0
    %1127 = vmatpush1.msra.mxu0 %v1087
    %1128 = vmatprep.subr.mxu0 0.0
    %1129 = vmatpush1.msra.mxu0 0.0
    %1130 = vmatprep.subr.mxu0 0.0
    %1131 = vmatpush1.msra.mxu0 0.0
    %1132 = vmatprep.subr.mxu0 0.0
    %1133 = vmatpush1.msra.mxu0 0.0
    %1134 = vmatprep.subr.mxu0 0.0
    %1135 = vmatpush1.msra.mxu0 0.0
    %1136 = vmatprep.subr.mxu0 0.0
    %1137 = vmatpush1.msra.mxu0 0.0
    %1138 = vmatprep.subr.mxu0 0.0
    %1139 = vmatpush1.msra.mxu0 0.0
    %1140 = vmatprep.subr.mxu0 0.0
    %1141 = vmatpush1.msra.mxu0 0.0
    %1142 = vmatprep.subr.mxu0 0.0
    %1143 = vmatpush1.msra.mxu0 0.0
    %1144 = vmatprep.subr.mxu0 0.0
    %1145 = vmatpush1.msra.mxu0 0.0
    %1146 = vmatprep.subr.mxu0 0.0
    %1147 = vmatpush1.msra.mxu0 0.0
    %1148 = vmatprep.subr.mxu0 0.0
    %1149 = vmatpush1.msra.mxu0 0.0
    %1150 = vmatprep.subr.mxu0 0.0
    %1151 = vmatpush1.msra.mxu0 0.0
    %1152 = vmatprep.subr.mxu0 0.0
    %1153 = vmatpush1.msra.mxu0 0.0
    %1154 = vmatprep.subr.mxu0 0.0
    %1155 = vmatpush1.msra.mxu0 0.0
    %1156 = vmatprep.subr.mxu0 0.0
    %1157 = vmatpush1.msra.mxu0 0.0
    %1158 = vmatprep.subr.mxu0 0.0
    %1159 = vmatpush1.msra.mxu0 0.0
    %1160 = vmatprep.subr.mxu0 0.0
    %1161 = vmatpush1.msra.mxu0 0.0
    %1162 = vmatprep.subr.mxu0 0.0
    %1163 = vmatpush1.msra.mxu0 0.0
    %1164 = vmatprep.subr.mxu0 0.0
    %1165 = vmatpush1.msra.mxu0 0.0
    %1166 = vmatprep.subr.mxu0 0.0
    %1167 = vmatpush1.msra.mxu0 0.0
    %1168 = vmatprep.subr.mxu0 0.0
    %1169 = vmatpush1.msra.mxu0 0.0
    %1170 = vmatprep.subr.mxu0 0.0
    %1171 = vmatpush1.msra.mxu0 0.0
    %1172 = vmatprep.subr.mxu0 0.0
    %1173 = vmatpush1.msra.mxu0 0.0
    %1174 = vmatprep.subr.mxu0 0.0
    %1175 = vmatpush1.msra.mxu0 0.0
    %1176 = vmatprep.subr.mxu0 0.0
    %1177 = vmatpush1.msra.mxu0 0.0
    %1178 = vmatprep.subr.mxu0 0.0
    %1179 = vmatpush1.msra.mxu0 0.0
    %1180 = vmatprep.subr.mxu0 0.0
    %1181 = vmatpush1.msra.mxu0 0.0
    %1182 = vmatprep.subr.mxu0 0.0
    %1183 = vmatpush1.msra.mxu0 0.0
    %1184 = vmatprep.mubr.f32.mxu0 0.0
    %1185 = vmatmul.mubr.f32.gmra.mrb[0].mxu0 %v1097
    %v1186 = vpop.f32.mrb[0].mxu0
    %v1187 = vadd.f32 %v1094, %v1186
    %v1188 = vpop.f32.mrb[0].mxu0
    %1189 = vmatprep.mubr.f32.mxu0 0.0
    %1190 = vmatmul.mubr.f32.gmra.mrb[0].mxu0 %v1100
    %v1191 = vpop.f32.mrb[0].mxu0
    %v1192 = vadd.f32 %v1094, %v1191
    %v1193 = vpop.f32.mrb[0].mxu0
    %1194 = vmatprep.mubr.f32.mxu0 0.0
    %1195 = vmatmul.mubr.f32.gmra.mrb[0].mxu0 %v1103
    %v1196 = vpop.f32.mrb[0].mxu0
    %v1197 = vadd.f32 %v1094, %v1196
    %v1198 = vpop.f32.mrb[0].mxu0
    %1199 = vmatprep.mubr.f32.mxu0 0.0
    %1200 = vmatmul.mubr.f32.gmra.mrb[0].mxu0 %v1106
    %v1201 = vpop.f32.mrb[0].mxu0
    %v1202 = vadd.f32 %v1094, %v1201
    %v1203 = vpop.f32.mrb[0].mxu0
    %1204 = vmatprep.mubr.f32.mxu0 0.0
    %1205 = vmatmul.mubr.f32.gmra.mrb[0].mxu0 %v1109
    %v1206 = vpop.f32.mrb[0].mxu0
    %v1207 = vadd.f32 %v1094, %v1206
    %v1208 = vpop.f32.mrb[0].mxu0
    %1209 = vmatprep.mubr.f32.mxu0 0.0
    %1210 = vmatmul.mubr.f32.gmra.mrb[0].mxu0 %v1112
    %v1211 = vpop.f32.mrb[0].mxu0
    %v1212 = vadd.f32 %v1094, %v1211
    %v1213 = vpop.f32.mrb[0].mxu0
    %1214 = vmatprep.mubr.f32.mxu0 0.0
    %1215 = vmatmul.mubr.f32.gmra.mrb[0].mxu0 %v1115
    %v1216 = vpop.f32.mrb[0].mxu0
    %v1217 = vadd.f32 %v1094, %v1216
    %v1218 = vpop.f32.mrb[0].mxu0
    %1219 = vmatprep.mubr.f32.mxu0 0.0
    %1220 = vmatmul.mubr.f32.gmra.mrb[0].mxu0 %v1118
    %v1221 = vpop.f32.mrb[0].mxu0
    %v1222 = vadd.f32 %v1094, %v1221
    %v1223 = vpop.f32.mrb[0].mxu0
    %1224 = vdwg.mxu0
    %1225 = vst [vmem:[#allocation2] sm:$0xff] %v1187
    %1226 = vst [vmem:[#allocation2 + $0x8] sm:$0xff] %v1192
    %1227 = vst [vmem:[#allocation2 + $0x10] sm:$0xff] %v1197
    %1228 = vst [vmem:[#allocation2 + $0x18] sm:$0xff] %v1202
    %1229 = vst [vmem:[#allocation2 + $0x20] sm:$0xff] %v1207
    %1230 = vst [vmem:[#allocation2 + $0x28] sm:$0xff] %v1212
    %1231 = vst [vmem:[#allocation2 + $0x30] sm:$0xff] %v1217
    %1232 = vst [vmem:[#allocation2 + $0x38] sm:$0xff] %v1222
    %s1233 = scalar_lea.vmem [#allocation5], 32
    %v1234 = vld [vmem:[%s1233] sm:$0xff]
    %v1235 = vld [vmem:[%s1233 + $0x8] sm:$0xff]
    %v1236 = vld [vmem:[%s1233 + $0x10] sm:$0xff]
    %v1237 = vld [vmem:[%s1233 + $0x18] sm:$0xff]
    %v1238 = vld [vmem:[#allocation2] sm:$0xff]
    %v1239 = vld [vmem:[#allocation2 + $0x38] sm:$0xff]
    %v1240 = vsel %vm56, %v1239, %v1238
    %1241 = vmatprep.subr.mxu0 0.0
    %1242 = vmatpush1.msra.mxu0 %v1234
    %1243 = vmatprep.subr.mxu0 0.0
    %1244 = vmatpush1.msra.mxu0 %v1235
    %1245 = vmatprep.subr.mxu0 0.0
    %1246 = vmatpush1.msra.mxu0 %v1236
    %1247 = vmatprep.subr.mxu0 0.0
    %1248 = vmatpush1.msra.mxu0 %v1237
    %1249 = vmatprep.subr.mxu0 0.0
    %1250 = vmatpush1.msra.mxu0 0.0
    %1251 = vmatprep.subr.mxu0 0.0
    %1252 = vmatpush1.msra.mxu0 0.0
    %1253 = vmatprep.subr.mxu0 0.0
    %1254 = vmatpush1.msra.mxu0 0.0
    %1255 = vmatprep.subr.mxu0 0.0
    %1256 = vmatpush1.msra.mxu0 0.0
    %1257 = vmatprep.subr.mxu0 0.0
    %1258 = vmatpush1.msra.mxu0 0.0
    %1259 = vmatprep.subr.mxu0 0.0
    %1260 = vmatpush1.msra.mxu0 0.0
    %1261 = vmatprep.subr.mxu0 0.0
    %1262 = vmatpush1.msra.mxu0 0.0
    %1263 = vmatprep.subr.mxu0 0.0
    %1264 = vmatpush1.msra.mxu0 0.0
    %1265 = vmatprep.subr.mxu0 0.0
    %1266 = vmatpush1.msra.mxu0 0.0
    %1267 = vmatprep.subr.mxu0 0.0
    %1268 = vmatpush1.msra.mxu0 0.0
    %1269 = vmatprep.subr.mxu0 0.0
    %1270 = vmatpush1.msra.mxu0 0.0
    %1271 = vmatprep.subr.mxu0 0.0
    %1272 = vmatpush1.msra.mxu0 0.0
    %1273 = vmatprep.subr.mxu0 0.0
    %1274 = vmatpush1.msra.mxu0 0.0
    %1275 = vmatprep.subr.mxu0 0.0
    %1276 = vmatpush1.msra.mxu0 0.0
    %1277 = vmatprep.subr.mxu0 0.0
    %1278 = vmatpush1.msra.mxu0 0.0
    %1279 = vmatprep.subr.mxu0 0.0
    %1280 = vmatpush1.msra.mxu0 0.0
    %1281 = vmatprep.subr.mxu0 0.0
    %1282 = vmatpush1.msra.mxu0 0.0
    %1283 = vmatprep.subr.mxu0 0.0
    %1284 = vmatpush1.msra.mxu0 0.0
    %1285 = vmatprep.subr.mxu0 0.0
    %1286 = vmatpush1.msra.mxu0 0.0
    %1287 = vmatprep.subr.mxu0 0.0
    %1288 = vmatpush1.msra.mxu0 0.0
    %1289 = vmatprep.subr.mxu0 0.0
    %1290 = vmatpush1.msra.mxu0 0.0
    %1291 = vmatprep.subr.mxu0 0.0
    %1292 = vmatpush1.msra.mxu0 0.0
    %1293 = vmatprep.subr.mxu0 0.0
    %1294 = vmatpush1.msra.mxu0 0.0
    %1295 = vmatprep.subr.mxu0 0.0
    %1296 = vmatpush1.msra.mxu0 0.0
    %1297 = vmatprep.subr.mxu0 0.0
    %1298 = vmatpush1.msra.mxu0 0.0
    %1299 = vmatprep.subr.mxu0 0.0
    %1300 = vmatpush1.msra.mxu0 0.0
    %1301 = vmatprep.subr.mxu0 0.0
    %1302 = vmatpush1.msra.mxu0 0.0
    %1303 = vmatprep.subr.mxu0 0.0
    %1304 = vmatpush1.msra.mxu0 0.0
    %1305 = vmatprep.mubr.f32.mxu0 0.0
    %1306 = vmatmul.mubr.f32.gmra.mrb[0].mxu0 %v238
    %v1307 = vpop.f32.mrb[0].mxu0
    %v1308 = vadd.f32 %v1240, %v1307
    %v1309 = vpop.f32.mrb[0].mxu0
    %1310 = vdwg.mxu0
    %v1311 = vtanh.pop %v1308
    %v1312 = vxor.u32 %v1308, 2147483648
    %v1313 = vmul.f32 %v1312, 1.442695
    %v1314 = vpow.pop %v1313
    %v1315 = vadd.f32 %v1314, 1.0
    %v1316 = vrcp.pop %v1315
    %v1317 = vmul.f32 1.0, %v1316
    %v1318 = vsel %vm64, %v1311, %v1317
    %v1319 = vmul.f32 %v1318, 0.0
    %1321 = vrot.lane.b32.xlu0 %v1318, 64
    %v1322 = vpop.permute.xlu0 %1321
    %v1324 = vmul.f32 %v1318, %v1322
    %1326 = vrot.lane.b32.xlu0 %v1324, 32
    %v1327 = vpop.permute.xlu0 %1326
    %v1329 = vadd.f32 %v1319, %v1327
    %v1330 = vtanh.pop %v1329
    %1332 = vrot.lane.b32.xlu0 %v1330, 64
    %v1333 = vpop.permute.xlu0 %1332
    %v1335 = vmul.f32 %v1318, %v1333
    %v1336 = vld [vmem:[#allocation2 + $0x8] sm:$0xff]
    %v1337 = vld [vmem:[#allocation2 + $0x30] sm:$0xff]
    %v1338 = vsel %vm56, %v1337, %v1336
    %1340 = vrot.lane.b32.xlu0 %v1335, 32
    %v1341 = vpop.permute.xlu0 %1340
    %v1342 = vsel %vm92, %v1341, 0
    %1344 = vmatprep.subr.mxu0 0.0
    %1345 = vmatpush1.msra.mxu0 %v1234
    %1346 = vmatprep.subr.mxu0 0.0
    %1347 = vmatpush1.msra.mxu0 %v1235
    %1348 = vmatprep.subr.mxu0 0.0
    %1349 = vmatpush1.msra.mxu0 %v1236
    %1350 = vmatprep.subr.mxu0 0.0
    %1351 = vmatpush1.msra.mxu0 %v1237
    %1352 = vmatprep.subr.mxu0 0.0
    %1353 = vmatpush1.msra.mxu0 0.0
    %1354 = vmatprep.subr.mxu0 0.0
    %1355 = vmatpush1.msra.mxu0 0.0
    %1356 = vmatprep.subr.mxu0 0.0
    %1357 = vmatpush1.msra.mxu0 0.0
    %1358 = vmatprep.subr.mxu0 0.0
    %1359 = vmatpush1.msra.mxu0 0.0
    %1360 = vmatprep.subr.mxu0 0.0
    %1361 = vmatpush1.msra.mxu0 0.0
    %1362 = vmatprep.subr.mxu0 0.0
    %1363 = vmatpush1.msra.mxu0 0.0
    %1364 = vmatprep.subr.mxu0 0.0
    %1365 = vmatpush1.msra.mxu0 0.0
    %1366 = vmatprep.subr.mxu0 0.0
    %1367 = vmatpush1.msra.mxu0 0.0
    %1368 = vmatprep.subr.mxu0 0.0
    %1369 = vmatpush1.msra.mxu0 0.0
    %1370 = vmatprep.subr.mxu0 0.0
    %1371 = vmatpush1.msra.mxu0 0.0
    %1372 = vmatprep.subr.mxu0 0.0
    %1373 = vmatpush1.msra.mxu0 0.0
    %1374 = vmatprep.subr.mxu0 0.0
    %1375 = vmatpush1.msra.mxu0 0.0
    %1376 = vmatprep.subr.mxu0 0.0
    %1377 = vmatpush1.msra.mxu0 0.0
    %1378 = vmatprep.subr.mxu0 0.0
    %1379 = vmatpush1.msra.mxu0 0.0
    %1380 = vmatprep.subr.mxu0 0.0
    %1381 = vmatpush1.msra.mxu0 0.0
    %1382 = vmatprep.subr.mxu0 0.0
    %1383 = vmatpush1.msra.mxu0 0.0
    %1384 = vmatprep.subr.mxu0 0.0
    %1385 = vmatpush1.msra.mxu0 0.0
    %1386 = vmatprep.subr.mxu0 0.0
    %1387 = vmatpush1.msra.mxu0 0.0
    %1388 = vmatprep.subr.mxu0 0.0
    %1389 = vmatpush1.msra.mxu0 0.0
    %1390 = vmatprep.subr.mxu0 0.0
    %1391 = vmatpush1.msra.mxu0 0.0
    %1392 = vmatprep.subr.mxu0 0.0
    %1393 = vmatpush1.msra.mxu0 0.0
    %1394 = vmatprep.subr.mxu0 0.0
    %1395 = vmatpush1.msra.mxu0 0.0
    %1396 = vmatprep.subr.mxu0 0.0
    %1397 = vmatpush1.msra.mxu0 0.0
    %1398 = vmatprep.subr.mxu0 0.0
    %1399 = vmatpush1.msra.mxu0 0.0
    %1400 = vmatprep.subr.mxu0 0.0
    %1401 = vmatpush1.msra.mxu0 0.0
    %1402 = vmatprep.subr.mxu0 0.0
    %1403 = vmatpush1.msra.mxu0 0.0
    %1404 = vmatprep.subr.mxu0 0.0
    %1405 = vmatpush1.msra.mxu0 0.0
    %1406 = vmatprep.subr.mxu0 0.0
    %1407 = vmatpush1.msra.mxu0 0.0
    %1408 = vmatprep.mubr.f32.mxu0 0.0
    %1409 = vmatmul.mubr.f32.gmra.mrb[0].mxu0 %v1342
    %v1410 = vpop.f32.mrb[0].mxu0
    %v1411 = vadd.f32 %v1338, %v1410
    %v1412 = vpop.f32.mrb[0].mxu0
    %1413 = vdwg.mxu0
    %v1414 = vtanh.pop %v1411
    %v1415 = vxor.u32 %v1411, 2147483648
    %v1416 = vmul.f32 %v1415, 1.442695
    %v1417 = vpow.pop %v1416
    %v1418 = vadd.f32 %v1417, 1.0
    %v1419 = vrcp.pop %v1418
    %v1420 = vmul.f32 1.0, %v1419
    %v1421 = vsel %vm64, %v1414, %v1420
    %v1422 = vmul.f32 %v1421, %v1329
    %1424 = vrot.lane.b32.xlu0 %v1421, 64
    %v1425 = vpop.permute.xlu0 %1424
    %v1427 = vmul.f32 %v1421, %v1425
    %1429 = vrot.lane.b32.xlu0 %v1427, 32
    %v1430 = vpop.permute.xlu0 %1429
    %v1432 = vadd.f32 %v1422, %v1430
    %v1433 = vtanh.pop %v1432
    %1435 = vrot.lane.b32.xlu0 %v1433, 64
    %v1436 = vpop.permute.xlu0 %1435
    %v1438 = vmul.f32 %v1421, %v1436
    %v1439 = vld [vmem:[#allocation2 + $0x10] sm:$0xff]
    %v1440 = vld [vmem:[#allocation2 + $0x28] sm:$0xff]
    %v1441 = vsel %vm56, %v1440, %v1439
    %1443 = vrot.lane.b32.xlu0 %v1438, 32
    %v1444 = vpop.permute.xlu0 %1443
    %v1445 = vsel %vm92, %v1444, 0
    %1447 = vmatprep.subr.mxu0 0.0
    %1448 = vmatpush1.msra.mxu0 %v1234
    %1449 = vmatprep.subr.mxu0 0.0
    %1450 = vmatpush1.msra.mxu0 %v1235
    %1451 = vmatprep.subr.mxu0 0.0
    %1452 = vmatpush1.msra.mxu0 %v1236
    %1453 = vmatprep.subr.mxu0 0.0
    %1454 = vmatpush1.msra.mxu0 %v1237
    %1455 = vmatprep.subr.mxu0 0.0
    %1456 = vmatpush1.msra.mxu0 0.0
    %1457 = vmatprep.subr.mxu0 0.0
    %1458 = vmatpush1.msra.mxu0 0.0
    %1459 = vmatprep.subr.mxu0 0.0
    %1460 = vmatpush1.msra.mxu0 0.0
    %1461 = vmatprep.subr.mxu0 0.0
    %1462 = vmatpush1.msra.mxu0 0.0
    %1463 = vmatprep.subr.mxu0 0.0
    %1464 = vmatpush1.msra.mxu0 0.0
    %1465 = vmatprep.subr.mxu0 0.0
    %1466 = vmatpush1.msra.mxu0 0.0
    %1467 = vmatprep.subr.mxu0 0.0
    %1468 = vmatpush1.msra.mxu0 0.0
    %1469 = vmatprep.subr.mxu0 0.0
    %1470 = vmatpush1.msra.mxu0 0.0
    %1471 = vmatprep.subr.mxu0 0.0
    %1472 = vmatpush1.msra.mxu0 0.0
    %1473 = vmatprep.subr.mxu0 0.0
    %1474 = vmatpush1.msra.mxu0 0.0
    %1475 = vmatprep.subr.mxu0 0.0
    %1476 = vmatpush1.msra.mxu0 0.0
    %1477 = vmatprep.subr.mxu0 0.0
    %1478 = vmatpush1.msra.mxu0 0.0
    %1479 = vmatprep.subr.mxu0 0.0
    %1480 = vmatpush1.msra.mxu0 0.0
    %1481 = vmatprep.subr.mxu0 0.0
    %1482 = vmatpush1.msra.mxu0 0.0
    %1483 = vmatprep.subr.mxu0 0.0
    %1484 = vmatpush1.msra.mxu0 0.0
    %1485 = vmatprep.subr.mxu0 0.0
    %1486 = vmatpush1.msra.mxu0 0.0
    %1487 = vmatprep.subr.mxu0 0.0
    %1488 = vmatpush1.msra.mxu0 0.0
    %1489 = vmatprep.subr.mxu0 0.0
    %1490 = vmatpush1.msra.mxu0 0.0
    %1491 = vmatprep.subr.mxu0 0.0
    %1492 = vmatpush1.msra.mxu0 0.0
    %1493 = vmatprep.subr.mxu0 0.0
    %1494 = vmatpush1.msra.mxu0 0.0
    %1495 = vmatprep.subr.mxu0 0.0
    %1496 = vmatpush1.msra.mxu0 0.0
    %1497 = vmatprep.subr.mxu0 0.0
    %1498 = vmatpush1.msra.mxu0 0.0
    %1499 = vmatprep.subr.mxu0 0.0
    %1500 = vmatpush1.msra.mxu0 0.0
    %1501 = vmatprep.subr.mxu0 0.0
    %1502 = vmatpush1.msra.mxu0 0.0
    %1503 = vmatprep.subr.mxu0 0.0
    %1504 = vmatpush1.msra.mxu0 0.0
    %1505 = vmatprep.subr.mxu0 0.0
    %1506 = vmatpush1.msra.mxu0 0.0
    %1507 = vmatprep.subr.mxu0 0.0
    %1508 = vmatpush1.msra.mxu0 0.0
    %1509 = vmatprep.subr.mxu0 0.0
    %1510 = vmatpush1.msra.mxu0 0.0
    %1511 = vmatprep.mubr.f32.mxu0 0.0
    %1512 = vmatmul.mubr.f32.gmra.mrb[0].mxu0 %v1445
    %v1513 = vpop.f32.mrb[0].mxu0
    %v1514 = vadd.f32 %v1441, %v1513
    %v1515 = vpop.f32.mrb[0].mxu0
    %1516 = vdwg.mxu0
    %v1517 = vtanh.pop %v1514
    %v1518 = vxor.u32 %v1514, 2147483648
    %v1519 = vmul.f32 %v1518, 1.442695
    %v1520 = vpow.pop %v1519
    %v1521 = vadd.f32 %v1520, 1.0
    %v1522 = vrcp.pop %v1521
    %v1523 = vmul.f32 1.0, %v1522
    %v1524 = vsel %vm64, %v1517, %v1523
    %v1525 = vmul.f32 %v1524, %v1432
    %1527 = vrot.lane.b32.xlu0 %v1524, 64
    %v1528 = vpop.permute.xlu0 %1527
    %v1530 = vmul.f32 %v1524, %v1528
    %1532 = vrot.lane.b32.xlu0 %v1530, 32
    %v1533 = vpop.permute.xlu0 %1532
    %v1535 = vadd.f32 %v1525, %v1533
    %v1536 = vtanh.pop %v1535
    %1538 = vrot.lane.b32.xlu0 %v1536, 64
    %v1539 = vpop.permute.xlu0 %1538
    %v1541 = vmul.f32 %v1524, %v1539
    %v1542 = vld [vmem:[#allocation2 + $0x18] sm:$0xff]
    %v1543 = vld [vmem:[#allocation2 + $0x20] sm:$0xff]
    %v1544 = vsel %vm56, %v1543, %v1542
    %1546 = vrot.lane.b32.xlu0 %v1541, 32
    %v1547 = vpop.permute.xlu0 %1546
    %v1548 = vsel %vm92, %v1547, 0
    %1550 = vmatprep.subr.mxu0 0.0
    %1551 = vmatpush1.msra.mxu0 %v1234
    %1552 = vmatprep.subr.mxu0 0.0
    %1553 = vmatpush1.msra.mxu0 %v1235
    %1554 = vmatprep.subr.mxu0 0.0
    %1555 = vmatpush1.msra.mxu0 %v1236
    %1556 = vmatprep.subr.mxu0 0.0
    %1557 = vmatpush1.msra.mxu0 %v1237
    %1558 = vmatprep.subr.mxu0 0.0
    %1559 = vmatpush1.msra.mxu0 0.0
    %1560 = vmatprep.subr.mxu0 0.0
    %1561 = vmatpush1.msra.mxu0 0.0
    %1562 = vmatprep.subr.mxu0 0.0
    %1563 = vmatpush1.msra.mxu0 0.0
    %1564 = vmatprep.subr.mxu0 0.0
    %1565 = vmatpush1.msra.mxu0 0.0
    %1566 = vmatprep.subr.mxu0 0.0
    %1567 = vmatpush1.msra.mxu0 0.0
    %1568 = vmatprep.subr.mxu0 0.0
    %1569 = vmatpush1.msra.mxu0 0.0
    %1570 = vmatprep.subr.mxu0 0.0
    %1571 = vmatpush1.msra.mxu0 0.0
    %1572 = vmatprep.subr.mxu0 0.0
    %1573 = vmatpush1.msra.mxu0 0.0
    %1574 = vmatprep.subr.mxu0 0.0
    %1575 = vmatpush1.msra.mxu0 0.0
    %1576 = vmatprep.subr.mxu0 0.0
    %1577 = vmatpush1.msra.mxu0 0.0
    %1578 = vmatprep.subr.mxu0 0.0
    %1579 = vmatpush1.msra.mxu0 0.0
    %1580 = vmatprep.subr.mxu0 0.0
    %1581 = vmatpush1.msra.mxu0 0.0
    %1582 = vmatprep.subr.mxu0 0.0
    %1583 = vmatpush1.msra.mxu0 0.0
    %1584 = vmatprep.subr.mxu0 0.0
    %1585 = vmatpush1.msra.mxu0 0.0
    %1586 = vmatprep.subr.mxu0 0.0
    %1587 = vmatpush1.msra.mxu0 0.0
    %1588 = vmatprep.subr.mxu0 0.0
    %1589 = vmatpush1.msra.mxu0 0.0
    %1590 = vmatprep.subr.mxu0 0.0
    %1591 = vmatpush1.msra.mxu0 0.0
    %1592 = vmatprep.subr.mxu0 0.0
    %1593 = vmatpush1.msra.mxu0 0.0
    %1594 = vmatprep.subr.mxu0 0.0
    %1595 = vmatpush1.msra.mxu0 0.0
    %1596 = vmatprep.subr.mxu0 0.0
    %1597 = vmatpush1.msra.mxu0 0.0
    %1598 = vmatprep.subr.mxu0 0.0
    %1599 = vmatpush1.msra.mxu0 0.0
    %1600 = vmatprep.subr.mxu0 0.0
    %1601 = vmatpush1.msra.mxu0 0.0
    %1602 = vmatprep.subr.mxu0 0.0
    %1603 = vmatpush1.msra.mxu0 0.0
    %1604 = vmatprep.subr.mxu0 0.0
    %1605 = vmatpush1.msra.mxu0 0.0
    %1606 = vmatprep.subr.mxu0 0.0
    %1607 = vmatpush1.msra.mxu0 0.0
    %1608 = vmatprep.subr.mxu0 0.0
    %1609 = vmatpush1.msra.mxu0 0.0
    %1610 = vmatprep.subr.mxu0 0.0
    %1611 = vmatpush1.msra.mxu0 0.0
    %1612 = vmatprep.subr.mxu0 0.0
    %1613 = vmatpush1.msra.mxu0 0.0
    %1614 = vmatprep.mubr.f32.mxu0 0.0
    %1615 = vmatmul.mubr.f32.gmra.mrb[0].mxu0 %v1548
    %v1616 = vpop.f32.mrb[0].mxu0
    %v1617 = vadd.f32 %v1544, %v1616
    %v1618 = vpop.f32.mrb[0].mxu0
    %1619 = vdwg.mxu0
    %v1620 = vtanh.pop %v1617
    %v1621 = vxor.u32 %v1617, 2147483648
    %v1622 = vmul.f32 %v1621, 1.442695
    %v1623 = vpow.pop %v1622
    %v1624 = vadd.f32 %v1623, 1.0
    %v1625 = vrcp.pop %v1624
    %v1626 = vmul.f32 1.0, %v1625
    %v1627 = vsel %vm64, %v1620, %v1626
    %v1628 = vmul.f32 %v1627, %v1535
    %1630 = vrot.lane.b32.xlu0 %v1627, 64
    %v1631 = vpop.permute.xlu0 %1630
    %v1633 = vmul.f32 %v1627, %v1631
    %1635 = vrot.lane.b32.xlu0 %v1633, 32
    %v1636 = vpop.permute.xlu0 %1635
    %v1638 = vadd.f32 %v1628, %v1636
    %v1639 = vtanh.pop %v1638
    %1641 = vrot.lane.b32.xlu0 %v1639, 64
    %v1642 = vpop.permute.xlu0 %1641
    %v1644 = vmul.f32 %v1627, %v1642
    %v1645 = vsel %vm56, %v1542, %v1543
    %1647 = vrot.lane.b32.xlu0 %v1644, 32
    %v1648 = vpop.permute.xlu0 %1647
    %v1649 = vsel %vm92, %v1648, 0
    %1651 = vmatprep.subr.mxu0 0.0
    %1652 = vmatpush1.msra.mxu0 %v1234
    %1653 = vmatprep.subr.mxu0 0.0
    %1654 = vmatpush1.msra.mxu0 %v1235
    %1655 = vmatprep.subr.mxu0 0.0
    %1656 = vmatpush1.msra.mxu0 %v1236
    %1657 = vmatprep.subr.mxu0 0.0
    %1658 = vmatpush1.msra.mxu0 %v1237
    %1659 = vmatprep.subr.mxu0 0.0
    %1660 = vmatpush1.msra.mxu0 0.0
    %1661 = vmatprep.subr.mxu0 0.0
    %1662 = vmatpush1.msra.mxu0 0.0
    %1663 = vmatprep.subr.mxu0 0.0
    %1664 = vmatpush1.msra.mxu0 0.0
    %1665 = vmatprep.subr.mxu0 0.0
    %1666 = vmatpush1.msra.mxu0 0.0
    %1667 = vmatprep.subr.mxu0 0.0
    %1668 = vmatpush1.msra.mxu0 0.0
    %1669 = vmatprep.subr.mxu0 0.0
    %1670 = vmatpush1.msra.mxu0 0.0
    %1671 = vmatprep.subr.mxu0 0.0
    %1672 = vmatpush1.msra.mxu0 0.0
    %1673 = vmatprep.subr.mxu0 0.0
    %1674 = vmatpush1.msra.mxu0 0.0
    %1675 = vmatprep.subr.mxu0 0.0
    %1676 = vmatpush1.msra.mxu0 0.0
    %1677 = vmatprep.subr.mxu0 0.0
    %1678 = vmatpush1.msra.mxu0 0.0
    %1679 = vmatprep.subr.mxu0 0.0
    %1680 = vmatpush1.msra.mxu0 0.0
    %1681 = vmatprep.subr.mxu0 0.0
    %1682 = vmatpush1.msra.mxu0 0.0
    %1683 = vmatprep.subr.mxu0 0.0
    %1684 = vmatpush1.msra.mxu0 0.0
    %1685 = vmatprep.subr.mxu0 0.0
    %1686 = vmatpush1.msra.mxu0 0.0
    %1687 = vmatprep.subr.mxu0 0.0
    %1688 = vmatpush1.msra.mxu0 0.0
    %1689 = vmatprep.subr.mxu0 0.0
    %1690 = vmatpush1.msra.mxu0 0.0
    %1691 = vmatprep.subr.mxu0 0.0
    %1692 = vmatpush1.msra.mxu0 0.0
    %1693 = vmatprep.subr.mxu0 0.0
    %1694 = vmatpush1.msra.mxu0 0.0
    %1695 = vmatprep.subr.mxu0 0.0
    %1696 = vmatpush1.msra.mxu0 0.0
    %1697 = vmatprep.subr.mxu0 0.0
    %1698 = vmatpush1.msra.mxu0 0.0
    %1699 = vmatprep.subr.mxu0 0.0
    %1700 = vmatpush1.msra.mxu0 0.0
    %1701 = vmatprep.subr.mxu0 0.0
    %1702 = vmatpush1.msra.mxu0 0.0
    %1703 = vmatprep.subr.mxu0 0.0
    %1704 = vmatpush1.msra.mxu0 0.0
    %1705 = vmatprep.subr.mxu0 0.0
    %1706 = vmatpush1.msra.mxu0 0.0
    %1707 = vmatprep.subr.mxu0 0.0
    %1708 = vmatpush1.msra.mxu0 0.0
    %1709 = vmatprep.subr.mxu0 0.0
    %1710 = vmatpush1.msra.mxu0 0.0
    %1711 = vmatprep.subr.mxu0 0.0
    %1712 = vmatpush1.msra.mxu0 0.0
    %1713 = vmatprep.subr.mxu0 0.0
    %1714 = vmatpush1.msra.mxu0 0.0
    %1715 = vmatprep.mubr.f32.mxu0 0.0
    %1716 = vmatmul.mubr.f32.gmra.mrb[0].mxu0 %v1649
    %v1717 = vpop.f32.mrb[0].mxu0
    %v1718 = vadd.f32 %v1645, %v1717
    %v1719 = vpop.f32.mrb[0].mxu0
    %1720 = vdwg.mxu0
    %v1721 = vtanh.pop %v1718
    %v1722 = vxor.u32 %v1718, 2147483648
    %v1723 = vmul.f32 %v1722, 1.442695
    %v1724 = vpow.pop %v1723
    %v1725 = vadd.f32 %v1724, 1.0
    %v1726 = vrcp.pop %v1725
    %v1727 = vmul.f32 1.0, %v1726
    %v1728 = vsel %vm64, %v1721, %v1727
    %v1729 = vmul.f32 %v1728, %v1638
    %1731 = vrot.lane.b32.xlu0 %v1728, 64
    %v1732 = vpop.permute.xlu0 %1731
    %v1734 = vmul.f32 %v1728, %v1732
    %1736 = vrot.lane.b32.xlu0 %v1734, 32
    %v1737 = vpop.permute.xlu0 %1736
    %v1739 = vadd.f32 %v1729, %v1737
    %v1740 = vtanh.pop %v1739
    %1742 = vrot.lane.b32.xlu0 %v1740, 64
    %v1743 = vpop.permute.xlu0 %1742
    %v1745 = vmul.f32 %v1728, %v1743
    %v1746 = vsel %vm56, %v1439, %v1440
    %1748 = vrot.lane.b32.xlu0 %v1745, 32
    %v1749 = vpop.permute.xlu0 %1748
    %v1750 = vsel %vm92, %v1749, 0
    %1752 = vmatprep.subr.mxu0 0.0
    %1753 = vmatpush1.msra.mxu0 %v1234
    %1754 = vmatprep.subr.mxu0 0.0
    %1755 = vmatpush1.msra.mxu0 %v1235
    %1756 = vmatprep.subr.mxu0 0.0
    %1757 = vmatpush1.msra.mxu0 %v1236
    %1758 = vmatprep.subr.mxu0 0.0
    %1759 = vmatpush1.msra.mxu0 %v1237
    %1760 = vmatprep.subr.mxu0 0.0
    %1761 = vmatpush1.msra.mxu0 0.0
    %1762 = vmatprep.subr.mxu0 0.0
    %1763 = vmatpush1.msra.mxu0 0.0
    %1764 = vmatprep.subr.mxu0 0.0
    %1765 = vmatpush1.msra.mxu0 0.0
    %1766 = vmatprep.subr.mxu0 0.0
    %1767 = vmatpush1.msra.mxu0 0.0
    %1768 = vmatprep.subr.mxu0 0.0
    %1769 = vmatpush1.msra.mxu0 0.0
    %1770 = vmatprep.subr.mxu0 0.0
    %1771 = vmatpush1.msra.mxu0 0.0
    %1772 = vmatprep.subr.mxu0 0.0
    %1773 = vmatpush1.msra.mxu0 0.0
    %1774 = vmatprep.subr.mxu0 0.0
    %1775 = vmatpush1.msra.mxu0 0.0
    %1776 = vmatprep.subr.mxu0 0.0
    %1777 = vmatpush1.msra.mxu0 0.0
    %1778 = vmatprep.subr.mxu0 0.0
    %1779 = vmatpush1.msra.mxu0 0.0
    %1780 = vmatprep.subr.mxu0 0.0
    %1781 = vmatpush1.msra.mxu0 0.0
    %1782 = vmatprep.subr.mxu0 0.0
    %1783 = vmatpush1.msra.mxu0 0.0
    %1784 = vmatprep.subr.mxu0 0.0
    %1785 = vmatpush1.msra.mxu0 0.0
    %1786 = vmatprep.subr.mxu0 0.0
    %1787 = vmatpush1.msra.mxu0 0.0
    %1788 = vmatprep.subr.mxu0 0.0
    %1789 = vmatpush1.msra.mxu0 0.0
    %1790 = vmatprep.subr.mxu0 0.0
    %1791 = vmatpush1.msra.mxu0 0.0
    %1792 = vmatprep.subr.mxu0 0.0
    %1793 = vmatpush1.msra.mxu0 0.0
    %1794 = vmatprep.subr.mxu0 0.0
    %1795 = vmatpush1.msra.mxu0 0.0
    %1796 = vmatprep.subr.mxu0 0.0
    %1797 = vmatpush1.msra.mxu0 0.0
    %1798 = vmatprep.subr.mxu0 0.0
    %1799 = vmatpush1.msra.mxu0 0.0
    %1800 = vmatprep.subr.mxu0 0.0
    %1801 = vmatpush1.msra.mxu0 0.0
    %1802 = vmatprep.subr.mxu0 0.0
    %1803 = vmatpush1.msra.mxu0 0.0
    %1804 = vmatprep.subr.mxu0 0.0
    %1805 = vmatpush1.msra.mxu0 0.0
    %1806 = vmatprep.subr.mxu0 0.0
    %1807 = vmatpush1.msra.mxu0 0.0
    %1808 = vmatprep.subr.mxu0 0.0
    %1809 = vmatpush1.msra.mxu0 0.0
    %1810 = vmatprep.subr.mxu0 0.0
    %1811 = vmatpush1.msra.mxu0 0.0
    %1812 = vmatprep.subr.mxu0 0.0
    %1813 = vmatpush1.msra.mxu0 0.0
    %1814 = vmatprep.subr.mxu0 0.0
    %1815 = vmatpush1.msra.mxu0 0.0
    %1816 = vmatprep.mubr.f32.mxu0 0.0
    %1817 = vmatmul.mubr.f32.gmra.mrb[0].mxu0 %v1750
    %v1818 = vpop.f32.mrb[0].mxu0
    %v1819 = vadd.f32 %v1746, %v1818
    %v1820 = vpop.f32.mrb[0].mxu0
    %1821 = vdwg.mxu0
    %v1822 = vtanh.pop %v1819
    %v1823 = vxor.u32 %v1819, 2147483648
    %v1824 = vmul.f32 %v1823, 1.442695
    %v1825 = vpow.pop %v1824
    %v1826 = vadd.f32 %v1825, 1.0
    %v1827 = vrcp.pop %v1826
    %v1828 = vmul.f32 1.0, %v1827
    %v1829 = vsel %vm64, %v1822, %v1828
    %v1830 = vmul.f32 %v1829, %v1739
    %1832 = vrot.lane.b32.xlu0 %v1829, 64
    %v1833 = vpop.permute.xlu0 %1832
    %v1835 = vmul.f32 %v1829, %v1833
    %1837 = vrot.lane.b32.xlu0 %v1835, 32
    %v1838 = vpop.permute.xlu0 %1837
    %v1840 = vadd.f32 %v1830, %v1838
    %v1841 = vtanh.pop %v1840
    %1843 = vrot.lane.b32.xlu0 %v1841, 64
    %v1844 = vpop.permute.xlu0 %1843
    %v1846 = vmul.f32 %v1829, %v1844
    %v1847 = vsel %vm56, %v1336, %v1337
    %1849 = vrot.lane.b32.xlu0 %v1846, 32
    %v1850 = vpop.permute.xlu0 %1849
    %v1851 = vsel %vm92, %v1850, 0
    %1853 = vmatprep.subr.mxu0 0.0
    %1854 = vmatpush1.msra.mxu0 %v1234
    %1855 = vmatprep.subr.mxu0 0.0
    %1856 = vmatpush1.msra.mxu0 %v1235
    %1857 = vmatprep.subr.mxu0 0.0
    %1858 = vmatpush1.msra.mxu0 %v1236
    %1859 = vmatprep.subr.mxu0 0.0
    %1860 = vmatpush1.msra.mxu0 %v1237
    %1861 = vmatprep.subr.mxu0 0.0
    %1862 = vmatpush1.msra.mxu0 0.0
    %1863 = vmatprep.subr.mxu0 0.0
    %1864 = vmatpush1.msra.mxu0 0.0
    %1865 = vmatprep.subr.mxu0 0.0
    %1866 = vmatpush1.msra.mxu0 0.0
    %1867 = vmatprep.subr.mxu0 0.0
    %1868 = vmatpush1.msra.mxu0 0.0
    %1869 = vmatprep.subr.mxu0 0.0
    %1870 = vmatpush1.msra.mxu0 0.0
    %1871 = vmatprep.subr.mxu0 0.0
    %1872 = vmatpush1.msra.mxu0 0.0
    %1873 = vmatprep.subr.mxu0 0.0
    %1874 = vmatpush1.msra.mxu0 0.0
    %1875 = vmatprep.subr.mxu0 0.0
    %1876 = vmatpush1.msra.mxu0 0.0
    %1877 = vmatprep.subr.mxu0 0.0
    %1878 = vmatpush1.msra.mxu0 0.0
    %1879 = vmatprep.subr.mxu0 0.0
    %1880 = vmatpush1.msra.mxu0 0.0
    %1881 = vmatprep.subr.mxu0 0.0
    %1882 = vmatpush1.msra.mxu0 0.0
    %1883 = vmatprep.subr.mxu0 0.0
    %1884 = vmatpush1.msra.mxu0 0.0
    %1885 = vmatprep.subr.mxu0 0.0
    %1886 = vmatpush1.msra.mxu0 0.0
    %1887 = vmatprep.subr.mxu0 0.0
    %1888 = vmatpush1.msra.mxu0 0.0
    %1889 = vmatprep.subr.mxu0 0.0
    %1890 = vmatpush1.msra.mxu0 0.0
    %1891 = vmatprep.subr.mxu0 0.0
    %1892 = vmatpush1.msra.mxu0 0.0
    %1893 = vmatprep.subr.mxu0 0.0
    %1894 = vmatpush1.msra.mxu0 0.0
    %1895 = vmatprep.subr.mxu0 0.0
    %1896 = vmatpush1.msra.mxu0 0.0
    %1897 = vmatprep.subr.mxu0 0.0
    %1898 = vmatpush1.msra.mxu0 0.0
    %1899 = vmatprep.subr.mxu0 0.0
    %1900 = vmatpush1.msra.mxu0 0.0
    %1901 = vmatprep.subr.mxu0 0.0
    %1902 = vmatpush1.msra.mxu0 0.0
    %1903 = vmatprep.subr.mxu0 0.0
    %1904 = vmatpush1.msra.mxu0 0.0
    %1905 = vmatprep.subr.mxu0 0.0
    %1906 = vmatpush1.msra.mxu0 0.0
    %1907 = vmatprep.subr.mxu0 0.0
    %1908 = vmatpush1.msra.mxu0 0.0
    %1909 = vmatprep.subr.mxu0 0.0
    %1910 = vmatpush1.msra.mxu0 0.0
    %1911 = vmatprep.subr.mxu0 0.0
    %1912 = vmatpush1.msra.mxu0 0.0
    %1913 = vmatprep.subr.mxu0 0.0
    %1914 = vmatpush1.msra.mxu0 0.0
    %1915 = vmatprep.subr.mxu0 0.0
    %1916 = vmatpush1.msra.mxu0 0.0
    %1917 = vmatprep.mubr.f32.mxu0 0.0
    %1918 = vmatmul.mubr.f32.gmra.mrb[0].mxu0 %v1851
    %v1919 = vpop.f32.mrb[0].mxu0
    %v1920 = vadd.f32 %v1847, %v1919
    %v1921 = vpop.f32.mrb[0].mxu0
    %1922 = vdwg.mxu0
    %v1923 = vtanh.pop %v1920
    %v1924 = vxor.u32 %v1920, 2147483648
    %v1925 = vmul.f32 %v1924, 1.442695
    %v1926 = vpow.pop %v1925
    %v1927 = vadd.f32 %v1926, 1.0
    %v1928 = vrcp.pop %v1927
    %v1929 = vmul.f32 1.0, %v1928
    %v1930 = vsel %vm64, %v1923, %v1929
    %v1931 = vmul.f32 %v1930, %v1840
    %1933 = vrot.lane.b32.xlu0 %v1930, 64
    %v1934 = vpop.permute.xlu0 %1933
    %v1936 = vmul.f32 %v1930, %v1934
    %1938 = vrot.lane.b32.xlu0 %v1936, 32
    %v1939 = vpop.permute.xlu0 %1938
    %v1941 = vadd.f32 %v1931, %v1939
    %v1942 = vtanh.pop %v1941
    %1944 = vrot.lane.b32.xlu0 %v1942, 64
    %v1945 = vpop.permute.xlu0 %1944
    %v1947 = vmul.f32 %v1930, %v1945
    %v1948 = vsel %vm56, %v1238, %v1239
    %1950 = vrot.lane.b32.xlu0 %v1947, 32
    %v1951 = vpop.permute.xlu0 %1950
    %v1952 = vsel %vm92, %v1951, 0
    %1954 = vmatprep.subr.mxu0 0.0
    %1955 = vmatpush1.msra.mxu0 %v1234
    %1956 = vmatprep.subr.mxu0 0.0
    %1957 = vmatpush1.msra.mxu0 %v1235
    %1958 = vmatprep.subr.mxu0 0.0
    %1959 = vmatpush1.msra.mxu0 %v1236
    %1960 = vmatprep.subr.mxu0 0.0
    %1961 = vmatpush1.msra.mxu0 %v1237
    %1962 = vmatprep.subr.mxu0 0.0
    %1963 = vmatpush1.msra.mxu0 0.0
    %1964 = vmatprep.subr.mxu0 0.0
    %1965 = vmatpush1.msra.mxu0 0.0
    %1966 = vmatprep.subr.mxu0 0.0
    %1967 = vmatpush1.msra.mxu0 0.0
    %1968 = vmatprep.subr.mxu0 0.0
    %1969 = vmatpush1.msra.mxu0 0.0
    %1970 = vmatprep.subr.mxu0 0.0
    %1971 = vmatpush1.msra.mxu0 0.0
    %1972 = vmatprep.subr.mxu0 0.0
    %1973 = vmatpush1.msra.mxu0 0.0
    %1974 = vmatprep.subr.mxu0 0.0
    %1975 = vmatpush1.msra.mxu0 0.0
    %1976 = vmatprep.subr.mxu0 0.0
    %1977 = vmatpush1.msra.mxu0 0.0
    %1978 = vmatprep.subr.mxu0 0.0
    %1979 = vmatpush1.msra.mxu0 0.0
    %1980 = vmatprep.subr.mxu0 0.0
    %1981 = vmatpush1.msra.mxu0 0.0
    %1982 = vmatprep.subr.mxu0 0.0
    %1983 = vmatpush1.msra.mxu0 0.0
    %1984 = vmatprep.subr.mxu0 0.0
    %1985 = vmatpush1.msra.mxu0 0.0
    %1986 = vmatprep.subr.mxu0 0.0
    %1987 = vmatpush1.msra.mxu0 0.0
    %1988 = vmatprep.subr.mxu0 0.0
    %1989 = vmatpush1.msra.mxu0 0.0
    %1990 = vmatprep.subr.mxu0 0.0
    %1991 = vmatpush1.msra.mxu0 0.0
    %1992 = vmatprep.subr.mxu0 0.0
    %1993 = vmatpush1.msra.mxu0 0.0
    %1994 = vmatprep.subr.mxu0 0.0
    %1995 = vmatpush1.msra.mxu0 0.0
    %1996 = vmatprep.subr.mxu0 0.0
    %1997 = vmatpush1.msra.mxu0 0.0
    %1998 = vmatprep.subr.mxu0 0.0
    %1999 = vmatpush1.msra.mxu0 0.0
    %2000 = vmatprep.subr.mxu0 0.0
    %2001 = vmatpush1.msra.mxu0 0.0
    %2002 = vmatprep.subr.mxu0 0.0
    %2003 = vmatpush1.msra.mxu0 0.0
    %2004 = vmatprep.subr.mxu0 0.0
    %2005 = vmatpush1.msra.mxu0 0.0
    %2006 = vmatprep.subr.mxu0 0.0
    %2007 = vmatpush1.msra.mxu0 0.0
    %2008 = vmatprep.subr.mxu0 0.0
    %2009 = vmatpush1.msra.mxu0 0.0
    %2010 = vmatprep.subr.mxu0 0.0
    %2011 = vmatpush1.msra.mxu0 0.0
    %2012 = vmatprep.subr.mxu0 0.0
    %2013 = vmatpush1.msra.mxu0 0.0
    %2014 = vmatprep.subr.mxu0 0.0
    %2015 = vmatpush1.msra.mxu0 0.0
    %2016 = vmatprep.subr.mxu0 0.0
    %2017 = vmatpush1.msra.mxu0 0.0
    %2018 = vmatprep.mubr.f32.mxu0 0.0
    %2019 = vmatmul.mubr.f32.gmra.mrb[0].mxu0 %v1952
    %v2020 = vpop.f32.mrb[0].mxu0
    %v2021 = vadd.f32 %v1948, %v2020
    %v2022 = vpop.f32.mrb[0].mxu0
    %2023 = vdwg.mxu0
    %v2024 = vtanh.pop %v2021
    %v2025 = vxor.u32 %v2021, 2147483648
    %v2026 = vmul.f32 %v2025, 1.442695
    %v2027 = vpow.pop %v2026
    %v2028 = vadd.f32 %v2027, 1.0
    %v2029 = vrcp.pop %v2028
    %v2030 = vmul.f32 1.0, %v2029
    %v2031 = vsel %vm64, %v2024, %v2030
    %v2032 = vmul.f32 %v2031, %v1941
    %2034 = vrot.lane.b32.xlu0 %v2031, 64
    %v2035 = vpop.permute.xlu0 %2034
    %v2037 = vmul.f32 %v2031, %v2035
    %2039 = vrot.lane.b32.xlu0 %v2037, 32
    %v2040 = vpop.permute.xlu0 %2039
    %v2042 = vadd.f32 %v2032, %v2040
    %v2043 = vtanh.pop %v2042
    %2045 = vrot.lane.b32.xlu0 %v2043, 64
    %v2046 = vpop.permute.xlu0 %2045
    %v2048 = vmul.f32 %v2031, %v2046
    %2050 = vrot.lane.b32.xlu0 %v2048, 32
    %v2051 = vpop.permute.xlu0 %2050
    %v2054 = vsel %vm72, %v2051, %v1341
    %v2057 = vsel %vm72, %v1951, %v1444
    %v2060 = vsel %vm72, %v1850, %v1547
    %v2063 = vsel %vm72, %v1749, %v1648
    %v2064 = vsel %vm72, %v1648, %v1749
    %v2065 = vsel %vm72, %v1547, %v1850
    %v2066 = vsel %vm72, %v1444, %v1951
    %v2067 = vsel %vm72, %v1341, %v2051
    %2068 = vst.msk [vmem:[#allocation3] sm:$0xff] %vm92, %v2054
    %2069 = vst.msk [vmem:[#allocation3 + $0x8] sm:$0xff] %vm92, %v2057
    %2070 = vst.msk [vmem:[#allocation3 + $0x10] sm:$0xff] %vm92, %v2060
    %2071 = vst.msk [vmem:[#allocation3 + $0x18] sm:$0xff] %vm92, %v2063
    %2072 = vst.msk [vmem:[#allocation3 + $0x20] sm:$0xff] %vm92, %v2064
    %2073 = vst.msk [vmem:[#allocation3 + $0x28] sm:$0xff] %vm92, %v2065
    %2074 = vst.msk [vmem:[#allocation3 + $0x30] sm:$0xff] %vm92, %v2066
    %2075 = vst.msk [vmem:[#allocation3 + $0x38] sm:$0xff] %vm92, %v2067
    %v2076 = vld [vmem:[#allocation3] sm:$0xff]
    %v2077 = vld [vmem:[#allocation3 + $0x8] sm:$0xff]
    %v2078 = vld [vmem:[#allocation3 + $0x10] sm:$0xff]
    %v2079 = vld [vmem:[#allocation3 + $0x18] sm:$0xff]
    %v2080 = vld [vmem:[#allocation3 + $0x20] sm:$0xff]
    %v2081 = vld [vmem:[#allocation3 + $0x28] sm:$0xff]
    %v2082 = vld [vmem:[#allocation3 + $0x30] sm:$0xff]
    %v2083 = vld [vmem:[#allocation3 + $0x38] sm:$0xff]
    %v2084 = vtanh.pop %v2076
    %v2085 = vtanh.pop %v2077
    %v2086 = vtanh.pop %v2078
    %v2087 = vtanh.pop %v2079
    %v2088 = vtanh.pop %v2080
    %v2089 = vtanh.pop %v2081
    %v2090 = vtanh.pop %v2082
    %v2091 = vtanh.pop %v2083
    %v2092 = vld [vmem:[%s7] sm:$0x1]
    %v2094 = vlaneseq
    %v2095 = vshrl.u32 %v2094, 7
    %v2096 = vsub.s32 0, %v2095
    %v2097 = vrot.slane %v2092, %v2096
    %v2099 = vmul.f32 %v2084, %v2097
    %v2100 = vmul.f32 %v2085, %v2097
    %v2101 = vmul.f32 %v2086, %v2097
    %v2102 = vmul.f32 %v2087, %v2097
    %v2103 = vmul.f32 %v2088, %v2097
    %v2104 = vmul.f32 %v2089, %v2097
    %v2105 = vmul.f32 %v2090, %v2097
    %v2106 = vmul.f32 %v2091, %v2097
    %v2107 = vsel %vm92, %v2099, 0.0
    %2108 = vadd.xlane.f32.xlu0 %v2107
    %v2109 = vpop.xlane.xlu0 %2108
    %v2110 = vsel %vm92, %v2100, 0.0
    %2111 = vadd.xlane.f32.xlu0 %v2110
    %v2112 = vpop.xlane.xlu0 %2111
    %v2113 = vsel %vm92, %v2101, 0.0
    %2114 = vadd.xlane.f32.xlu0 %v2113
    %v2115 = vpop.xlane.xlu0 %2114
    %v2116 = vsel %vm92, %v2102, 0.0
    %2117 = vadd.xlane.f32.xlu0 %v2116
    %v2118 = vpop.xlane.xlu0 %2117
    %v2119 = vsel %vm92, %v2103, 0.0
    %2120 = vadd.xlane.f32.xlu0 %v2119
    %v2121 = vpop.xlane.xlu0 %2120
    %v2122 = vsel %vm92, %v2104, 0.0
    %2123 = vadd.xlane.f32.xlu0 %v2122
    %v2124 = vpop.xlane.xlu0 %2123
    %v2125 = vsel %vm92, %v2105, 0.0
    %2126 = vadd.xlane.f32.xlu0 %v2125
    %v2127 = vpop.xlane.xlu0 %2126
    %v2128 = vsel %vm92, %v2106, 0.0
    %2129 = vadd.xlane.f32.xlu0 %v2128
    %v2130 = vpop.xlane.xlu0 %2129
    %v2131 = vld [vmem:[#allocation4] sm:$0x1]
    %v2133 = vlaneseq
    %v2134 = vshrl.u32 %v2133, 7
    %v2135 = vsub.s32 0, %v2134
    %v2136 = vrot.slane %v2131, %v2135
    %v2138 = vadd.f32 %v2109, %v2136
    %v2139 = vadd.f32 %v2112, %v2136
    %v2140 = vadd.f32 %v2115, %v2136
    %v2141 = vadd.f32 %v2118, %v2136
    %v2142 = vadd.f32 %v2121, %v2136
    %v2143 = vadd.f32 %v2124, %v2136
    %v2144 = vadd.f32 %v2127, %v2136
    %v2145 = vadd.f32 %v2130, %v2136
    %v2146 = vmax.f32 %v2138, %v2139
    %v2147 = vmax.f32 %v2146, %v2140
    %v2148 = vmax.f32 %v2147, %v2141
    %v2149 = vmax.f32 %v2148, %v2142
    %v2150 = vmax.f32 %v2149, %v2143
    %v2151 = vmax.f32 %v2150, %v2144
    %v2152 = vmax.f32 %v2151, %v2145
    %v2153 = vsub.f32 %v2138, %v2152
    %v2154 = vmul.f32 %v2153, 1.442695
    %v2155 = vpow.pop %v2154
    %v2156 = vsub.f32 %v2139, %v2152
    %v2157 = vmul.f32 %v2156, 1.442695
    %v2158 = vpow.pop %v2157
    %v2159 = vsub.f32 %v2140, %v2152
    %v2160 = vmul.f32 %v2159, 1.442695
    %v2161 = vpow.pop %v2160
    %v2162 = vsub.f32 %v2141, %v2152
    %v2163 = vmul.f32 %v2162, 1.442695
    %v2164 = vpow.pop %v2163
    %v2165 = vsub.f32 %v2142, %v2152
    %v2166 = vmul.f32 %v2165, 1.442695
    %v2167 = vpow.pop %v2166
    %v2168 = vsub.f32 %v2143, %v2152
    %v2169 = vmul.f32 %v2168, 1.442695
    %v2170 = vpow.pop %v2169
    %v2171 = vsub.f32 %v2144, %v2152
    %v2172 = vmul.f32 %v2171, 1.442695
    %v2173 = vpow.pop %v2172
    %v2174 = vsub.f32 %v2145, %v2152
    %v2175 = vmul.f32 %v2174, 1.442695
    %v2176 = vpow.pop %v2175
    %v2177 = vadd.f32 %v2155, %v2158
    %v2178 = vadd.f32 %v2177, %v2161
    %v2179 = vadd.f32 %v2178, %v2164
    %v2180 = vadd.f32 %v2179, %v2167
    %v2181 = vadd.f32 %v2180, %v2170
    %v2182 = vadd.f32 %v2181, %v2173
    %v2183 = vadd.f32 %v2182, %v2176
    %v2184 = vrcp.pop %v2183
    %v2185 = vmul.f32 %v2183, %v2184
    %v2186 = vsub.f32 2.0, %v2185
    %v2187 = vmul.f32 %v2184, %v2186
    %v2188 = vmul.f32 %v2155, %v2187
    %2190 = vset.pattern.permute.xlu0 0
    %2191 = vperm.xlu0 %2190, %v2188
    %v2192 = vpop.permute.xlu0 %2191
    %v2194 = vmul.f32 %v2192, %v2076
    %v2195 = vmul.f32 %v2158, %v2187
    %v2196 = vld [vmem:[#allocation3 + $0x8] sm:$0xff]
    %2198 = vset.pattern.permute.xlu0 0
    %2199 = vperm.xlu0 %2198, %v2195
    %v2200 = vpop.permute.xlu0 %2199
    %v2202 = vmul.f32 %v2200, %v2196
    %v2203 = vadd.f32 %v2194, %v2202
    %v2204 = vmul.f32 %v2161, %v2187
    %v2205 = vld [vmem:[#allocation3 + $0x10] sm:$0xff]
    %2207 = vset.pattern.permute.xlu0 0
    %2208 = vperm.xlu0 %2207, %v2204
    %v2209 = vpop.permute.xlu0 %2208
    %v2211 = vmul.f32 %v2209, %v2205
    %v2212 = vadd.f32 %v2203, %v2211
    %v2213 = vmul.f32 %v2164, %v2187
    %v2214 = vld [vmem:[#allocation3 + $0x18] sm:$0xff]
    %2216 = vset.pattern.permute.xlu0 0
    %2217 = vperm.xlu0 %2216, %v2213
    %v2218 = vpop.permute.xlu0 %2217
    %v2220 = vmul.f32 %v2218, %v2214
    %v2221 = vadd.f32 %v2212, %v2220
    %v2222 = vmul.f32 %v2167, %v2187
    %v2223 = vld [vmem:[#allocation3 + $0x20] sm:$0xff]
    %2225 = vset.pattern.permute.xlu0 0
    %2226 = vperm.xlu0 %2225, %v2222
    %v2227 = vpop.permute.xlu0 %2226
    %v2229 = vmul.f32 %v2227, %v2223
    %v2230 = vadd.f32 %v2221, %v2229
    %v2231 = vmul.f32 %v2170, %v2187
    %v2232 = vld [vmem:[#allocation3 + $0x28] sm:$0xff]
    %2234 = vset.pattern.permute.xlu0 0
    %2235 = vperm.xlu0 %2234, %v2231
    %v2236 = vpop.permute.xlu0 %2235
    %v2238 = vmul.f32 %v2236, %v2232
    %v2239 = vadd.f32 %v2230, %v2238
    %v2240 = vmul.f32 %v2173, %v2187
    %v2241 = vld [vmem:[#allocation3 + $0x30] sm:$0xff]
    %2243 = vset.pattern.permute.xlu0 0
    %2244 = vperm.xlu0 %2243, %v2240
    %v2245 = vpop.permute.xlu0 %2244
    %v2247 = vmul.f32 %v2245, %v2241
    %v2248 = vadd.f32 %v2239, %v2247
    %v2249 = vmul.f32 %v2176, %v2187
    %2251 = vset.pattern.permute.xlu0 0
    %2252 = vperm.xlu0 %2251, %v2249
    %v2253 = vpop.permute.xlu0 %2252
    %v2255 = vmul.f32 %v2253, %v2083
    %v2256 = vadd.f32 %v2248, %v2255
    %2257 = vst.msk [vmem:[#allocation8] sm:$0xff] %vm92, %v2256
    // Predicated region
    $region42: #{tpu_custom_call.1} parent=1 // pred_check
      _
    $region43: #{tpu_custom_call.1} parent=1 // pred_check_branch
      %2259 = sbr.rel (0) target = $region45
    $region44: #{tpu_custom_call.1} parent=1 // pred_region
      %s2261 = ssub.s32 128, 128
      %2262 = vsyncadd [#allocation7], %s2261
      %s2264 = sshll.u32 [#allocation8], 4
      %s2265 = int_to_ptr.vmem [resolvable:$true] %s2264
      %2267 = dma.vmem_to_hbm [thread:$0]  %s2265, 128, %s9, [#allocation7]
    $region45: #{tpu_custom_call.1} parent=1 // pred_fallthru
      _
    // Predicated region
    $region46: #{tpu_custom_call.1} parent=1 // pred_check
      _
    $region47: #{tpu_custom_call.1} parent=1 // pred_check_branch
      %2269 = sbr.rel (0) target = $region49
    $region48: #{tpu_custom_call.1} parent=1 // pred_region
      %2270 = dma.done [#allocation7], 128
    $region49: #{tpu_custom_call.1} parent=1 // pred_fallthru
      _
    %2271 = vsyncpa [#allocation6], 1
    %2272 = vsyncpa [#allocation7], 1

</llo_original>
